<compile_context>
chip_gen: v7x
topology: tpu7x:2x2x1
jax: 0.10.0
libtpu: 0.0.40
codegen_flags: <defaults>
</compile_context>

<pallas_src>
import jax
import jax.numpy as jnp
from jax.experimental import pallas as pl
from jax.experimental.pallas import tpu as pltpu

EPS = 0.0          # module default
LOGSPACE = False   # module default -> gamma = Identity, final clamp(min=eps)

# Kernel output row order (lane-dense (4, N) layout):
#   row 0: gamma, row 1: v, row 2: alpha, row 3: beta
# which corresponds to head-output columns [3, 0, 1, 2] of the PyTorch linear.
_HEAD_PERM = (3, 0, 1, 2)


def evidential_kernel(x_ref, w1_ref, b1_ref, w2_ref, b2_ref, wht_ref, bht_ref,
                      out_ref):
    """One tile_n-row tile: 2-layer ReLU MLP + evidential head, fully fused."""
    cd = w2_ref.dtype  # matmul compute dtype (bf16 default, f32 optional)

    # ---- MLP backbone: Linear -> ReLU -> Linear -> ReLU (f32 accumulation) ----
    h = jnp.dot(x_ref[...], w1_ref[...],
                preferred_element_type=jnp.float32) + b1_ref[...]
    h = jnp.maximum(h, 0.0)
    h = jnp.dot(h.astype(cd), w2_ref[...],
                preferred_element_type=jnp.float32) + b2_ref[...]
    h = jnp.maximum(h, 0.0)

    # ---- Evidential head, computed transposed: (4, tile_n) ----
    # wht_ref is the head weight pre-transposed and row-permuted on the host to
    # the output order [gamma, v, alpha, beta], so zt rows are already ordered.
    # Contraction (((1,), (1,)), ((), ())) == A @ B^T: the large activation
    # tile is consumed as-is and the result is lane-dense.
    zt = jax.lax.dot_general(
        wht_ref[...], h.astype(cd),
        dimension_numbers=(((1,), (1,)), ((), ())),
        preferred_element_type=jnp.float32) + bht_ref[...]

    # ---- epilogue: all f32, full-width vregs, single unmasked store ----
    sp = jax.nn.softplus(zt) + EPS                       # rows 1..3 used
    if LOGSPACE:
        gam = 2.0 * jax.nn.sigmoid(zt)                   # row 0 used
    else:
        gam = 2.0 * zt
    row = jax.lax.broadcasted_iota(jnp.int32, zt.shape, 0)
    out = jnp.where(row == 0, gam, sp)                   # [gamma, v, a_pre, beta]
    out = jnp.where(row == 2, jnp.maximum(out + 1.0, 1.0), out)   # alpha clamp
    if not LOGSPACE:
        out = jnp.maximum(out, EPS)                      # clamp(out, min=eps)
    out_ref[...] = out.astype(out_ref.dtype)


def evidential_forward(x, w1, b1, w2, b2, wh, bh, *, tile_n=1024,
                       compute_dtype=jnp.bfloat16):
    """Fused evidential forward.  Returns (N, 4) evidence like the PyTorch module."""
    N, C = x.shape
    H = w1.shape[1]
    tile_n = min(tile_n, N)
    assert N % tile_n == 0, "N must be a multiple of tile_n"

    cd = compute_dtype
    perm = jnp.asarray(_HEAD_PERM, dtype=jnp.int32)
    x_c = x.astype(cd)
    w1_c = w1.astype(cd)
    w2_c = w2.astype(cd)
    # Head weight pre-transposed + row-permuted to output order (host-side, tiny).
    wh_t = jnp.take(jnp.transpose(wh), perm, axis=0).astype(cd)          # (4, H)
    bh_t = jnp.take(jnp.reshape(bh, (-1,)), perm, axis=0)
    bh_t = bh_t.reshape(4, 1).astype(jnp.float32)                        # (4, 1)
    b1_r = jnp.reshape(b1, (1, H)).astype(jnp.float32)
    b2_r = jnp.reshape(b2, (1, H)).astype(jnp.float32)

    full = lambda i: (0, 0)   # weights/biases: grid-invariant blocks
    out_t = pl.pallas_call(
        evidential_kernel,
        out_shape=jax.ShapeDtypeStruct((4, N), jnp.float32),   # lane-dense output
        grid_spec=pltpu.PrefetchScalarGridSpec(
            num_scalar_prefetch=0,
            grid=(N // tile_n,),
            in_specs=[
                pl.BlockSpec((tile_n, C), lambda i: (i, 0)),   # x tile
                pl.BlockSpec((C, H), full),                    # W1
                pl.BlockSpec((1, H), full),                    # b1
                pl.BlockSpec((H, H), full),                    # W2
                pl.BlockSpec((1, H), full),                    # b2
                pl.BlockSpec((4, H), full),                    # W_head^T (permuted)
                pl.BlockSpec((4, 1), full),                    # b_head (permuted)
            ],
            out_specs=pl.BlockSpec((4, tile_n), lambda i: (0, i)),
        ),
        compiler_params=pltpu.CompilerParams(
            dimension_semantics=("parallel",)),
    )(x_c, w1_c, b1_r, w2_c, b2_r, wh_t, bh_t)

    # Cheap (4, N) -> (N, 4) transpose outside the kernel to match the module.
    return out_t.T


def evidential_ref(x, w1, b1, w2, b2, wh, bh, compute_dtype=jnp.float32):
    """Pure-JAX reference mirroring the PyTorch forward (and the matmul dtype)."""
    cd = compute_dtype
    h = jnp.maximum(jnp.dot(x.astype(cd), w1.astype(cd),
                            preferred_element_type=jnp.float32) + b1, 0.0)
    h = jnp.maximum(jnp.dot(h.astype(cd), w2.astype(cd),
                            preferred_element_type=jnp.float32) + b2, 0.0)
    z = jnp.dot(h.astype(cd), wh.astype(cd),
                preferred_element_type=jnp.float32) + bh
    vab = jax.nn.softplus(z[:, :3]) + EPS
    alpha = jnp.maximum(vab[:, 1] + 1.0, 1.0).reshape(-1, 1)
    g = jax.nn.sigmoid(z[:, 3]) if LOGSPACE else z[:, 3]
    gamma = 2.0 * g.reshape(-1, 1)
    out = jnp.concatenate([gamma, vab[:, 0:1], alpha, vab[:, 2:3]], axis=1)
    if not LOGSPACE:
        out = jnp.maximum(out, EPS)
    return out


if __name__ == "__main__":
    # Shapes implied by the module: (N, in_channels) features -> (N, 4) evidence.
    N = 4096           # number of points (4 grid steps of tile_n=1024)
    IN_CHANNELS = 32   # upstream feature size
    FEATURE_SIZE = 64  # mlp.feature_size

    key = jax.random.PRNGKey(0)
    kx, k1, k2, k3, k4, k5, k6 = jax.random.split(key, 7)

    x  = jax.random.normal(kx, (N, IN_CHANNELS), dtype=jnp.float32)
    w1 = jax.random.normal(k1, (IN_CHANNELS, FEATURE_SIZE), jnp.float32) / jnp.sqrt(IN_CHANNELS)
    b1 = jax.random.normal(k2, (1, FEATURE_SIZE), jnp.float32) * 0.01
    w2 = jax.random.normal(k3, (FEATURE_SIZE, FEATURE_SIZE), jnp.float32) / jnp.sqrt(FEATURE_SIZE)
    b2 = jax.random.normal(k4, (1, FEATURE_SIZE), jnp.float32) * 0.01
    wh = jax.random.normal(k5, (FEATURE_SIZE, 4), jnp.float32) / jnp.sqrt(FEATURE_SIZE)
    bh = jax.random.normal(k6, (1, 4), jnp.float32) * 0.01

    # Strict f32 correctness check.
    out32 = jax.block_until_ready(
        evidential_forward(x, w1, b1, w2, b2, wh, bh, compute_dtype=jnp.float32))
    ref32 = evidential_ref(x, w1, b1, w2, b2, wh, bh, compute_dtype=jnp.float32)
    assert out32.shape == (N, 4)
    err32 = jnp.max(jnp.abs(out32 - ref32))
    assert jnp.allclose(out32, ref32, atol=2e-4, rtol=2e-4), f"f32 max err {err32}"

    # Default bf16-matmul path (perf-preferred on v6e/v7x) vs bf16-mirrored ref.
    outbf = jax.block_until_ready(evidential_forward(x, w1, b1, w2, b2, wh, bh))
    refbf = evidential_ref(x, w1, b1, w2, b2, wh, bh, compute_dtype=jnp.bfloat16)
    assert outbf.shape == (N, 4)
    errbf = jnp.max(jnp.abs(outbf - refbf))
    assert jnp.allclose(outbf, refbf, atol=2e-2, rtol=2e-2), f"bf16 max err {errbf}"

    print("KERNEL_OK")
</pallas_src>

<mosaic_0001>
module attributes {stable_mosaic.version = 11 : i64} {
  func.func @evidential_kernel(%arg0: i32, %arg1: memref<1024x32xf32, #tpu.memory_space<vmem>>, %arg2: memref<32x64xf32, #tpu.memory_space<vmem>>, %arg3: memref<1x64xf32, #tpu.memory_space<vmem>>, %arg4: memref<64x64xf32, #tpu.memory_space<vmem>>, %arg5: memref<1x64xf32, #tpu.memory_space<vmem>>, %arg6: memref<4x64xf32, #tpu.memory_space<vmem>>, %arg7: memref<4x1xf32, #tpu.memory_space<vmem>>, %arg8: memref<4x1024xf32, #tpu.memory_space<vmem>>) attributes {dimension_semantics = [#tpu.dimension_semantics<parallel>], iteration_bounds = array<i64: 4>, scalar_prefetch = 0 : i64, scratch_operands = 0 : i64, tpu.core_type = #tpu.core_type<tc>, window_params = [{transform_indices = @transform_0, window_bounds = array<i64: 1024, 32>}, {pipeline_mode = #tpu.pipeline_mode<synchronous>, transform_indices = @transform_1, window_bounds = array<i64: 32, 64>}, {pipeline_mode = #tpu.pipeline_mode<synchronous>, transform_indices = @transform_2, window_bounds = array<i64: 1, 64>}, {pipeline_mode = #tpu.pipeline_mode<synchronous>, transform_indices = @transform_3, window_bounds = array<i64: 64, 64>}, {pipeline_mode = #tpu.pipeline_mode<synchronous>, transform_indices = @transform_4, window_bounds = array<i64: 1, 64>}, {pipeline_mode = #tpu.pipeline_mode<synchronous>, transform_indices = @transform_5, window_bounds = array<i64: 4, 64>}, {pipeline_mode = #tpu.pipeline_mode<synchronous>, transform_indices = @transform_6, window_bounds = array<i64: 4, 1>}, {transform_indices = @transform_7, window_bounds = array<i64: 4, 1024>}]} {
    %c0 = arith.constant 0 : index
    %c0_0 = arith.constant 0 : index
    %0 = vector.load %arg1[%c0, %c0_0] : memref<1024x32xf32, #tpu.memory_space<vmem>>, vector<1024x32xf32>
    %c0_1 = arith.constant 0 : index
    %c0_2 = arith.constant 0 : index
    %1 = vector.load %arg2[%c0_1, %c0_2] : memref<32x64xf32, #tpu.memory_space<vmem>>, vector<32x64xf32>
    %cst = arith.constant dense<0.000000e+00> : vector<1024x64xf32>
    %2 = tpu.matmul %0, %1, %cst {dimension_numbers = #tpu.dot_dimension_numbers<[1], [0], [0], [1], [0, 0, 1, 1], [], []>} : vector<1024x32xf32>, vector<32x64xf32>, vector<1024x64xf32> -> vector<1024x64xf32>
    %c0_3 = arith.constant 0 : index
    %c0_4 = arith.constant 0 : index
    %3 = vector.load %arg3[%c0_3, %c0_4] : memref<1x64xf32, #tpu.memory_space<vmem>>, vector<1x64xf32>
    %4 = vector.broadcast %3 : vector<1x64xf32> to vector<1024x64xf32>
    %5 = arith.addf %2, %4 : vector<1024x64xf32>
    %cst_5 = arith.constant 0.000000e+00 : f32
    %6 = vector.broadcast %cst_5 : f32 to vector<1024x64xf32>
    %7 = arith.maximumf %5, %6 : vector<1024x64xf32>
    %c0_6 = arith.constant 0 : index
    %c0_7 = arith.constant 0 : index
    %8 = vector.load %arg4[%c0_6, %c0_7] : memref<64x64xf32, #tpu.memory_space<vmem>>, vector<64x64xf32>
    %cst_8 = arith.constant dense<0.000000e+00> : vector<1024x64xf32>
    %9 = tpu.matmul %7, %8, %cst_8 {dimension_numbers = #tpu.dot_dimension_numbers<[1], [0], [0], [1], [0, 0, 1, 1], [], []>} : vector<1024x64xf32>, vector<64x64xf32>, vector<1024x64xf32> -> vector<1024x64xf32>
    %c0_9 = arith.constant 0 : index
    %c0_10 = arith.constant 0 : index
    %10 = vector.load %arg5[%c0_9, %c0_10] : memref<1x64xf32, #tpu.memory_space<vmem>>, vector<1x64xf32>
    %11 = vector.broadcast %10 : vector<1x64xf32> to vector<1024x64xf32>
    %12 = arith.addf %9, %11 : vector<1024x64xf32>
    %cst_11 = arith.constant 0.000000e+00 : f32
    %13 = vector.broadcast %cst_11 : f32 to vector<1024x64xf32>
    %14 = arith.maximumf %12, %13 : vector<1024x64xf32>
    %c0_12 = arith.constant 0 : index
    %c0_13 = arith.constant 0 : index
    %15 = vector.load %arg6[%c0_12, %c0_13] : memref<4x64xf32, #tpu.memory_space<vmem>>, vector<4x64xf32>
    %cst_14 = arith.constant dense<0.000000e+00> : vector<4x1024xf32>
    %16 = tpu.matmul %15, %14, %cst_14 {dimension_numbers = #tpu.dot_dimension_numbers<[1], [1], [0], [0], [0, 0, 1, 0], [], []>} : vector<4x64xf32>, vector<1024x64xf32>, vector<4x1024xf32> -> vector<4x1024xf32>
    %c0_15 = arith.constant 0 : index
    %c0_16 = arith.constant 0 : index
    %17 = vector.load %arg7[%c0_15, %c0_16] : memref<4x1xf32, #tpu.memory_space<vmem>>, vector<4x1xf32>
    %18 = vector.broadcast %17 : vector<4x1xf32> to vector<4x1024xf32>
    %19 = arith.addf %16, %18 : vector<4x1024xf32>
    %cst_17 = arith.constant 0.000000e+00 : f32
    %20 = vector.broadcast %cst_17 : f32 to vector<4x1024xf32>
    %21 = arith.maximumf %19, %20 : vector<4x1024xf32>
    %22 = vector.broadcast %cst_17 : f32 to vector<4x1024xf32>
    %23 = arith.subf %19, %22 : vector<4x1024xf32>
    %24 = arith.cmpf one, %23, %23 : vector<4x1024xf32>
    %25 = vector.broadcast %cst_17 : f32 to vector<4x1024xf32>
    %26 = arith.addf %19, %25 : vector<4x1024xf32>
    %27 = math.absf %23 : vector<4x1024xf32>
    %cst_18 = arith.constant 0.000000e+00 : f32
    %28 = vector.broadcast %cst_18 : f32 to vector<4x1024xf32>
    %29 = arith.subf %28, %27 : vector<4x1024xf32>
    %30 = math.exp %29 : vector<4x1024xf32>
    %31 = math.log1p %30 : vector<4x1024xf32>
    %32 = arith.addf %21, %31 : vector<4x1024xf32>
    %33 = arith.select %24, %26, %32 : vector<4x1024xi1>, vector<4x1024xf32>
    %cst_19 = arith.constant 0.000000e+00 : f32
    %34 = vector.broadcast %cst_19 : f32 to vector<4x1024xf32>
    %35 = arith.addf %33, %34 : vector<4x1024xf32>
    %cst_20 = arith.constant 2.000000e+00 : f32
    %36 = vector.broadcast %cst_20 : f32 to vector<4x1024xf32>
    %37 = arith.mulf %36, %19 : vector<4x1024xf32>
    %38 = tpu.iota {dimensions = array<i32: 0>} : vector<4x1024xi32>
    %c0_i32 = arith.constant 0 : i32
    %39 = vector.broadcast %c0_i32 : i32 to vector<4x1024xi32>
    %40 = arith.cmpi eq, %38, %39 : vector<4x1024xi32>
    %41 = arith.select %40, %37, %35 : vector<4x1024xi1>, vector<4x1024xf32>
    %c2_i32 = arith.constant 2 : i32
    %42 = vector.broadcast %c2_i32 : i32 to vector<4x1024xi32>
    %43 = arith.cmpi eq, %38, %42 : vector<4x1024xi32>
    %cst_21 = arith.constant 1.000000e+00 : f32
    %44 = vector.broadcast %cst_21 : f32 to vector<4x1024xf32>
    %45 = arith.addf %41, %44 : vector<4x1024xf32>
    %cst_22 = arith.constant 1.000000e+00 : f32
    %46 = vector.broadcast %cst_22 : f32 to vector<4x1024xf32>
    %47 = arith.maximumf %45, %46 : vector<4x1024xf32>
    %48 = arith.select %43, %47, %41 : vector<4x1024xi1>, vector<4x1024xf32>
    %cst_23 = arith.constant 0.000000e+00 : f32
    %49 = vector.broadcast %cst_23 : f32 to vector<4x1024xf32>
    %50 = arith.maximumf %48, %49 : vector<4x1024xf32>
    %c0_24 = arith.constant 0 : index
    %c0_25 = arith.constant 0 : index
    %51 = vector.load %arg8[%c0_24, %c0_25] : memref<4x1024xf32, #tpu.memory_space<vmem>>, vector<4x1024xf32>
    tpu.vector_store %arg8[%c0_24, %c0_25], %50 {strides = array<i32>} : memref<4x1024xf32, #tpu.memory_space<vmem>>, vector<4x1024xf32>,
    return
  }
  func.func @transform_0(%arg0: i32) -> (i32, i32) {
    %c0_i32 = arith.constant 0 : i32
    %c0_i32_0 = arith.constant 0 : i32
    return %arg0, %c0_i32 : i32, i32
  }
  func.func @transform_1(%arg0: i32) -> (i32, i32) {
    %c0_i32 = arith.constant 0 : i32
    %c0_i32_0 = arith.constant 0 : i32
    %c0_i32_1 = arith.constant 0 : i32
    return %c0_i32, %c0_i32_0 : i32, i32
  }
  func.func @transform_2(%arg0: i32) -> (i32, i32) {
    %c0_i32 = arith.constant 0 : i32
    %c0_i32_0 = arith.constant 0 : i32
    %c0_i32_1 = arith.constant 0 : i32
    return %c0_i32, %c0_i32_0 : i32, i32
  }
  func.func @transform_3(%arg0: i32) -> (i32, i32) {
    %c0_i32 = arith.constant 0 : i32
    %c0_i32_0 = arith.constant 0 : i32
    %c0_i32_1 = arith.constant 0 : i32
    return %c0_i32, %c0_i32_0 : i32, i32
  }
  func.func @transform_4(%arg0: i32) -> (i32, i32) {
    %c0_i32 = arith.constant 0 : i32
    %c0_i32_0 = arith.constant 0 : i32
    %c0_i32_1 = arith.constant 0 : i32
    return %c0_i32, %c0_i32_0 : i32, i32
  }
  func.func @transform_5(%arg0: i32) -> (i32, i32) {
    %c0_i32 = arith.constant 0 : i32
    %c0_i32_0 = arith.constant 0 : i32
    %c0_i32_1 = arith.constant 0 : i32
    return %c0_i32, %c0_i32_0 : i32, i32
  }
  func.func @transform_6(%arg0: i32) -> (i32, i32) {
    %c0_i32 = arith.constant 0 : i32
    %c0_i32_0 = arith.constant 0 : i32
    %c0_i32_1 = arith.constant 0 : i32
    return %c0_i32, %c0_i32_0 : i32, i32
  }
  func.func @transform_7(%arg0: i32) -> (i32, i32) {
    %c0_i32 = arith.constant 0 : i32
    %c0_i32_0 = arith.constant 0 : i32
    return %c0_i32, %arg0 : i32, i32
  }
}

</mosaic_0001>

<llo_original>
// kernel: tpu_custom_call.1
$region0: #{tpu_custom_call.1}
  #allocation0 [shape = 'u32[]', space=smem, size = 0x4, offset = 0x4, fixed_abs, tag = 'smem constant byte address 0x4 - core index']
  #allocation1 [shape = 'u32[144,128]{1,0:T(1,128)}', space=vmem, size = 0x12000, scoped, tag = 'internal scratch']
  %s0 = inlined_call_operand.vmem [shape: f32[4096,32], index: 0, kind: input, shape index: {}]
  %s1 = inlined_call_operand.vmem [shape: f32[32,64], index: 1, kind: input, shape index: {}]
  %s2 = inlined_call_operand.vmem [shape: f32[1,64], index: 2, kind: input, shape index: {}]
  %s3 = inlined_call_operand.vmem [shape: f32[64,64], index: 3, kind: input, shape index: {}]
  %s4 = inlined_call_operand.vmem [shape: f32[1,64], index: 4, kind: input, shape index: {}]
  %s5 = inlined_call_operand.vmem [shape: f32[4,64], index: 5, kind: input, shape index: {}]
  %s6 = inlined_call_operand.vmem [shape: f32[4,1], index: 6, kind: input, shape index: {}]
  %s7 = inlined_call_operand.hbm [shape: f32[4,4096], index: 7, kind: output, shape index: {}]
  %s8 = sld [smem:[#allocation0]]
  $region61: #{tpu_custom_call.1} parent=0
    _
  %s10 = ssub.s32 1, %s8
  %s11 = scalar_select 0, %s10, %s8
  $region1: #{tpu_custom_call.1} parent=0
    #allocation2 [shape = 'u8[32768]{0}', space=vmem, size = 0x8000, scoped, tag = 'output window, operand 0']
    #allocation3 [shape = 's32[2]{0}', space=sflag, size = 0x8, scoped, tag = 'scoped memory for tpu_custom_call.1']
    %12 = vsyncpa [#allocation3], 0
    %s13 = scalar_lea.sflag [#allocation3], 1
    %14 = vsyncpa %s13, 0
    loop: start=0, step=1, limit=6
    $region2: #{tpu_custom_call.1} parent=1 // loop_pre_header
      _
    $region3: #{tpu_custom_call.1} parent=1 // loop_header
      %s16 = sphi 0, %s20
      %p17 = scmp.ge.s32.totalorder %s16, 6
      %s26 = sphi 0, %s28
      %s29 = sphi 0, %s26
      %s30 = sphi 0, %s29
      %s46 = sphi 0, %s30
      %s50 = sphi 0, %s50
      %s52 = sphi 0, %s50
      %s53 = sphi 0, %s52
      %s67 = sphi 0, %s53
      %s71 = sphi 0, %s71
      %s73 = sphi 0, %s71
      %s74 = sphi 0, %s73
      %s88 = sphi 0, %s74
      %s92 = sphi 0, %s92
      %s94 = sphi 0, %s92
      %s95 = sphi 0, %s94
      %s109 = sphi 0, %s95
      %s113 = sphi 0, %s113
      %s115 = sphi 0, %s113
      %s116 = sphi 0, %s115
      %s130 = sphi 0, %s116
      %s134 = sphi 0, %s134
      %s136 = sphi 0, %s134
      %s137 = sphi 0, %s136
      %s151 = sphi 0, %s137
      %s155 = sphi 0, %s155
      %s157 = sphi 0, %s155
      %s158 = sphi 0, %s157
      %s172 = sphi 0, %s158
      %s178 = sphi 0, %s180
      %s181 = sphi 0, %s178
      %s182 = sphi 0, %s181
      %s198 = sphi 0, %s182
    $region4: #{tpu_custom_call.1} parent=1 // loop_header_branch
      %19 = sbr.rel (%p17) target = $region8
    $region5: #{tpu_custom_call.1} parent=1 // loop_body
      %s21 = ssub.s32 %s16, 1
      %s22 = ssub.s32 %s16, 2
      %s23 = sadd.s32 %s16, 1
      %s24 = ssub.s32 %s16, %s23
      %p25 = scmp.eq.s32.totalorder %s24, 0
      %s27 = sadd.s32 %s26, 1
      %s28 = scalar_select %p25, %s26, %s27
      %p31 = pneg %p25
      %p32 = scmp.eq.s32.totalorder %s16, 3
      %p33 = por %p31, %p32
      %p34 = scmp.ne.s32.totalorder %s26, %s29
      %p35 = scmp.eq.s32.totalorder %s16, 0
      %p36 = por %p34, %p35
      %p37 = scmp.ne.s32.totalorder %s26, %s29
      %p38 = scmp.eq.s32.totalorder %s21, 3
      %p39 = por %p37, %p38
      %p40 = scmp.ne.s32.totalorder %s29, %s30
      %p41 = scmp.eq.s32.totalorder %s21, 0
      %p42 = por %p40, %p41
      %p43 = scmp.ne.s32.totalorder %s29, %s30
      %p44 = scmp.eq.s32.totalorder %s22, 3
      %p45 = por %p43, %p44
      %p47 = scmp.ne.s32.totalorder %s30, %s46
      %p48 = scmp.eq.s32.totalorder %s22, 0
      %p49 = por %p47, %p48
      %s51 = sadd.s32 %s50, 1
      %p54 = scmp.eq.s32.totalorder %s16, 3
      %p55 = scmp.ne.s32.totalorder %s50, %s52
      %p56 = scmp.eq.s32.totalorder %s16, 0
      %p57 = por %p55, %p56
      %p58 = scmp.ne.s32.totalorder %s50, %s52
      %p59 = scmp.eq.s32.totalorder %s21, 3
      %p60 = por %p58, %p59
      %p61 = scmp.ne.s32.totalorder %s52, %s53
      %p62 = scmp.eq.s32.totalorder %s21, 0
      %p63 = por %p61, %p62
      %p64 = scmp.ne.s32.totalorder %s52, %s53
      %p65 = scmp.eq.s32.totalorder %s22, 3
      %p66 = por %p64, %p65
      %p68 = scmp.ne.s32.totalorder %s53, %s67
      %p69 = scmp.eq.s32.totalorder %s22, 0
      %p70 = por %p68, %p69
      %s72 = sadd.s32 %s71, 1
      %p75 = scmp.eq.s32.totalorder %s16, 3
      %p76 = scmp.ne.s32.totalorder %s71, %s73
      %p77 = scmp.eq.s32.totalorder %s16, 0
      %p78 = por %p76, %p77
      %p79 = scmp.ne.s32.totalorder %s71, %s73
      %p80 = scmp.eq.s32.totalorder %s21, 3
      %p81 = por %p79, %p80
      %p82 = scmp.ne.s32.totalorder %s73, %s74
      %p83 = scmp.eq.s32.totalorder %s21, 0
      %p84 = por %p82, %p83
      %p85 = scmp.ne.s32.totalorder %s73, %s74
      %p86 = scmp.eq.s32.totalorder %s22, 3
      %p87 = por %p85, %p86
      %p89 = scmp.ne.s32.totalorder %s74, %s88
      %p90 = scmp.eq.s32.totalorder %s22, 0
      %p91 = por %p89, %p90
      %s93 = sadd.s32 %s92, 1
      %p96 = scmp.eq.s32.totalorder %s16, 3
      %p97 = scmp.ne.s32.totalorder %s92, %s94
      %p98 = scmp.eq.s32.totalorder %s16, 0
      %p99 = por %p97, %p98
      %p100 = scmp.ne.s32.totalorder %s92, %s94
      %p101 = scmp.eq.s32.totalorder %s21, 3
      %p102 = por %p100, %p101
      %p103 = scmp.ne.s32.totalorder %s94, %s95
      %p104 = scmp.eq.s32.totalorder %s21, 0
      %p105 = por %p103, %p104
      %p106 = scmp.ne.s32.totalorder %s94, %s95
      %p107 = scmp.eq.s32.totalorder %s22, 3
      %p108 = por %p106, %p107
      %p110 = scmp.ne.s32.totalorder %s95, %s109
      %p111 = scmp.eq.s32.totalorder %s22, 0
      %p112 = por %p110, %p111
      %s114 = sadd.s32 %s113, 1
      %p117 = scmp.eq.s32.totalorder %s16, 3
      %p118 = scmp.ne.s32.totalorder %s113, %s115
      %p119 = scmp.eq.s32.totalorder %s16, 0
      %p120 = por %p118, %p119
      %p121 = scmp.ne.s32.totalorder %s113, %s115
      %p122 = scmp.eq.s32.totalorder %s21, 3
      %p123 = por %p121, %p122
      %p124 = scmp.ne.s32.totalorder %s115, %s116
      %p125 = scmp.eq.s32.totalorder %s21, 0
      %p126 = por %p124, %p125
      %p127 = scmp.ne.s32.totalorder %s115, %s116
      %p128 = scmp.eq.s32.totalorder %s22, 3
      %p129 = por %p127, %p128
      %p131 = scmp.ne.s32.totalorder %s116, %s130
      %p132 = scmp.eq.s32.totalorder %s22, 0
      %p133 = por %p131, %p132
      %s135 = sadd.s32 %s134, 1
      %p138 = scmp.eq.s32.totalorder %s16, 3
      %p139 = scmp.ne.s32.totalorder %s134, %s136
      %p140 = scmp.eq.s32.totalorder %s16, 0
      %p141 = por %p139, %p140
      %p142 = scmp.ne.s32.totalorder %s134, %s136
      %p143 = scmp.eq.s32.totalorder %s21, 3
      %p144 = por %p142, %p143
      %p145 = scmp.ne.s32.totalorder %s136, %s137
      %p146 = scmp.eq.s32.totalorder %s21, 0
      %p147 = por %p145, %p146
      %p148 = scmp.ne.s32.totalorder %s136, %s137
      %p149 = scmp.eq.s32.totalorder %s22, 3
      %p150 = por %p148, %p149
      %p152 = scmp.ne.s32.totalorder %s137, %s151
      %p153 = scmp.eq.s32.totalorder %s22, 0
      %p154 = por %p152, %p153
      %s156 = sadd.s32 %s155, 1
      %p159 = scmp.eq.s32.totalorder %s16, 3
      %p160 = scmp.ne.s32.totalorder %s155, %s157
      %p161 = scmp.eq.s32.totalorder %s16, 0
      %p162 = por %p160, %p161
      %p163 = scmp.ne.s32.totalorder %s155, %s157
      %p164 = scmp.eq.s32.totalorder %s21, 3
      %p165 = por %p163, %p164
      %p166 = scmp.ne.s32.totalorder %s157, %s158
      %p167 = scmp.eq.s32.totalorder %s21, 0
      %p168 = por %p166, %p167
      %p169 = scmp.ne.s32.totalorder %s157, %s158
      %p170 = scmp.eq.s32.totalorder %s22, 3
      %p171 = por %p169, %p170
      %p173 = scmp.ne.s32.totalorder %s158, %s172
      %p174 = scmp.eq.s32.totalorder %s22, 0
      %p175 = por %p173, %p174
      %s176 = ssub.s32 %s16, %s23
      %p177 = scmp.eq.s32.totalorder %s176, 0
      %s179 = sadd.s32 %s178, 1
      %s180 = scalar_select %p177, %s178, %s179
      %p183 = pneg %p177
      %p184 = scmp.eq.s32.totalorder %s16, 3
      %p185 = por %p183, %p184
      %p186 = scmp.ne.s32.totalorder %s178, %s181
      %p187 = scmp.eq.s32.totalorder %s16, 0
      %p188 = por %p186, %p187
      %p189 = scmp.ne.s32.totalorder %s178, %s181
      %p190 = scmp.eq.s32.totalorder %s21, 3
      %p191 = por %p189, %p190
      %p192 = scmp.ne.s32.totalorder %s181, %s182
      %p193 = scmp.eq.s32.totalorder %s21, 0
      %p194 = por %p192, %p193
      %p195 = scmp.ne.s32.totalorder %s181, %s182
      %p196 = scmp.eq.s32.totalorder %s22, 3
      %p197 = por %p195, %p196
      %p199 = scmp.ne.s32.totalorder %s182, %s198
      %p200 = scmp.eq.s32.totalorder %s22, 0
      %p201 = por %p199, %p200
      %p202 = scmp.le.s32.totalorder 1, %s16
      %p203 = scmp.lt.s32.totalorder %s16, 5
      %p204 = pnand %p202, %p203
      %p205 = pneg %p204
      // Predicated region
      $region9: #{tpu_custom_call.1} parent=5 // pred_check
        _
      $region10: #{tpu_custom_call.1} parent=5 // pred_check_branch
        %207 = sbr.rel (%p204) target = $region12
      $region11: #{tpu_custom_call.1} parent=5 // pred_region
        %s208 = ssub.s32 %s16, 1
        // Predicated region
        $region13: #{tpu_custom_call.1} parent=11 // pred_check
          %p209 = pneg %p63
        $region14: #{tpu_custom_call.1} parent=11 // pred_check_branch
          %211 = sbr.rel (%p209) target = $region16
        $region15: #{tpu_custom_call.1} parent=11 // pred_region
          _
        $region16: #{tpu_custom_call.1} parent=11 // pred_fallthru
          _
        // Predicated region
        $region17: #{tpu_custom_call.1} parent=11 // pred_check
          %p212 = pneg %p84
        $region18: #{tpu_custom_call.1} parent=11 // pred_check_branch
          %214 = sbr.rel (%p212) target = $region20
        $region19: #{tpu_custom_call.1} parent=11 // pred_region
          _
        $region20: #{tpu_custom_call.1} parent=11 // pred_fallthru
          _
        // Predicated region
        $region21: #{tpu_custom_call.1} parent=11 // pred_check
          %p215 = pneg %p105
        $region22: #{tpu_custom_call.1} parent=11 // pred_check_branch
          %217 = sbr.rel (%p215) target = $region24
        $region23: #{tpu_custom_call.1} parent=11 // pred_region
          _
        $region24: #{tpu_custom_call.1} parent=11 // pred_fallthru
          _
        // Predicated region
        $region25: #{tpu_custom_call.1} parent=11 // pred_check
          %p218 = pneg %p126
        $region26: #{tpu_custom_call.1} parent=11 // pred_check_branch
          %220 = sbr.rel (%p218) target = $region28
        $region27: #{tpu_custom_call.1} parent=11 // pred_region
          _
        $region28: #{tpu_custom_call.1} parent=11 // pred_fallthru
          _
        // Predicated region
        $region29: #{tpu_custom_call.1} parent=11 // pred_check
          %p221 = pneg %p147
        $region30: #{tpu_custom_call.1} parent=11 // pred_check_branch
          %223 = sbr.rel (%p221) target = $region32
        $region31: #{tpu_custom_call.1} parent=11 // pred_region
          _
        $region32: #{tpu_custom_call.1} parent=11 // pred_fallthru
          _
        // Predicated region
        $region33: #{tpu_custom_call.1} parent=11 // pred_check
          %p224 = pneg %p168
        $region34: #{tpu_custom_call.1} parent=11 // pred_check_branch
          %226 = sbr.rel (%p224) target = $region36
        $region35: #{tpu_custom_call.1} parent=11 // pred_region
          _
        $region36: #{tpu_custom_call.1} parent=11 // pred_fallthru
          _
      $region12: #{tpu_custom_call.1} parent=5 // pred_fallthru
        _
      %p227 = scmp.lt.s32.totalorder %s16, 4
      // Predicated region
      $region37: #{tpu_custom_call.1} parent=5 // pred_check
        %p228 = pneg %p227
      $region38: #{tpu_custom_call.1} parent=5 // pred_check_branch
        %230 = sbr.rel (%p228) target = $region40
      $region39: #{tpu_custom_call.1} parent=5 // pred_region
        // Predicated region
        $region41: #{tpu_custom_call.1} parent=39 // pred_check
          %p231 = pneg %p36
        $region42: #{tpu_custom_call.1} parent=39 // pred_check_branch
          %233 = sbr.rel (%p231) target = $region44
        $region43: #{tpu_custom_call.1} parent=39 // pred_region
          %s234 = smul.u32 128, %s16
          %p235 = scmp.lt.s32.totalorder %s234, 511
          %s236 = scalar_select %p235, %s234, 511
          %s237 = smul.addr %s236, 8
          %s238 = scalar_lea.vmem %s0, %s237
          %s239 = smul.u32 128, %s16
        $region44: #{tpu_custom_call.1} parent=39 // pred_fallthru
          _
      $region40: #{tpu_custom_call.1} parent=5 // pred_fallthru
        _
      %p240 = scmp.le.s32.totalorder 1, %s16
      %p241 = scmp.lt.s32.totalorder %s16, 5
      %p242 = pnand %p240, %p241
      %p243 = pneg %p242
      // Predicated region
      $region45: #{tpu_custom_call.1} parent=5 // pred_check
        _
      $region46: #{tpu_custom_call.1} parent=5 // pred_check_branch
        %245 = sbr.rel (%p242) target = $region48
      $region47: #{tpu_custom_call.1} parent=5 // pred_region
        %s246 = ssub.s32 %s16, 1
        %s247 = smul.u32 128, %s21
        %p248 = scmp.lt.s32.totalorder %s247, 511
        %s249 = scalar_select %p248, %s247, 511
        %s250 = smul.addr %s249, 8
        %s251 = scalar_lea.vmem %s0, %s250
        %p252 = pneg %p42
        %p253 = pneg %p39
        %p254 = pneg %p63
        %p255 = pneg %p60
        %p256 = pneg %p84
        %p257 = pneg %p81
        %p258 = pneg %p105
        %p259 = pneg %p102
        %p260 = pneg %p126
        %p261 = pneg %p123
        %p262 = pneg %p147
        %p263 = pneg %p144
        %p264 = pneg %p168
        %p265 = pneg %p165
        %p266 = pneg %p194
        %p267 = pneg %p191
        %s268 = sand.u32 %s181, 1
        %s269 = scalar_lea.sflag [#allocation3], %s268
        %s270 = sand.u32 %s181, 1
        %s271 = smul.addr %s270, 32
        %s272 = scalar_lea.vmem [#allocation2], %s271
        %s273 = smul.u32 128, %s21
        %p274 = scmp.lt.s32.totalorder %s273, 511
        %s275 = scalar_select %p274, %s273, 511
        %s276 = smul.addr %s275, 8
        %s277 = scalar_lea.vmem %s0, %s276
        %s278 = smul.u32 128, %s21
        %s279 = smul.u32 8, %s21
        %v280 = vld [vmem:[%s277] sm:$0xff]
        %v281 = vld [vmem:[%s277 + $0x8] sm:$0xff]
        %v282 = vld [vmem:[%s277 + $0x10] sm:$0xff]
        %v283 = vld [vmem:[%s277 + $0x18] sm:$0xff]
        %v284 = vld [vmem:[%s277 + $0x20] sm:$0xff]
        %v285 = vld [vmem:[%s277 + $0x28] sm:$0xff]
        %v286 = vld [vmem:[%s277 + $0x30] sm:$0xff]
        %v287 = vld [vmem:[%s277 + $0x38] sm:$0xff]
        %v288 = vld [vmem:[%s277 + $0x40] sm:$0xff]
        %v289 = vld [vmem:[%s277 + $0x48] sm:$0xff]
        %v290 = vld [vmem:[%s277 + $0x50] sm:$0xff]
        %v291 = vld [vmem:[%s277 + $0x58] sm:$0xff]
        %v292 = vld [vmem:[%s277 + $0x60] sm:$0xff]
        %v293 = vld [vmem:[%s277 + $0x68] sm:$0xff]
        %v294 = vld [vmem:[%s277 + $0x70] sm:$0xff]
        %v295 = vld [vmem:[%s277 + $0x78] sm:$0xff]
        %v296 = vld [vmem:[%s277 + $0x80] sm:$0xff]
        %v297 = vld [vmem:[%s277 + $0x88] sm:$0xff]
        %v298 = vld [vmem:[%s277 + $0x90] sm:$0xff]
        %v299 = vld [vmem:[%s277 + $0x98] sm:$0xff]
        %v300 = vld [vmem:[%s277 + $0xa0] sm:$0xff]
        %v301 = vld [vmem:[%s277 + $0xa8] sm:$0xff]
        %v302 = vld [vmem:[%s277 + $0xb0] sm:$0xff]
        %v303 = vld [vmem:[%s277 + $0xb8] sm:$0xff]
        %v304 = vld [vmem:[%s277 + $0xc0] sm:$0xff]
        %v305 = vld [vmem:[%s277 + $0xc8] sm:$0xff]
        %v306 = vld [vmem:[%s277 + $0xd0] sm:$0xff]
        %v307 = vld [vmem:[%s277 + $0xd8] sm:$0xff]
        %v308 = vld [vmem:[%s277 + $0xe0] sm:$0xff]
        %v309 = vld [vmem:[%s277 + $0xe8] sm:$0xff]
        %v310 = vld [vmem:[%s277 + $0xf0] sm:$0xff]
        %v311 = vld [vmem:[%s277 + $0xf8] sm:$0xff]
        %v312 = vld [vmem:[%s277 + $0x100] sm:$0xff]
        %v313 = vld [vmem:[%s277 + $0x108] sm:$0xff]
        %v314 = vld [vmem:[%s277 + $0x110] sm:$0xff]
        %v315 = vld [vmem:[%s277 + $0x118] sm:$0xff]
        %v316 = vld [vmem:[%s277 + $0x120] sm:$0xff]
        %v317 = vld [vmem:[%s277 + $0x128] sm:$0xff]
        %v318 = vld [vmem:[%s277 + $0x130] sm:$0xff]
        %v319 = vld [vmem:[%s277 + $0x138] sm:$0xff]
        %v320 = vld [vmem:[%s277 + $0x140] sm:$0xff]
        %v321 = vld [vmem:[%s277 + $0x148] sm:$0xff]
        %v322 = vld [vmem:[%s277 + $0x150] sm:$0xff]
        %v323 = vld [vmem:[%s277 + $0x158] sm:$0xff]
        %v324 = vld [vmem:[%s277 + $0x160] sm:$0xff]
        %v325 = vld [vmem:[%s277 + $0x168] sm:$0xff]
        %v326 = vld [vmem:[%s277 + $0x170] sm:$0xff]
        %v327 = vld [vmem:[%s277 + $0x178] sm:$0xff]
        %v328 = vld [vmem:[%s277 + $0x180] sm:$0xff]
        %v329 = vld [vmem:[%s277 + $0x188] sm:$0xff]
        %v330 = vld [vmem:[%s277 + $0x190] sm:$0xff]
        %v331 = vld [vmem:[%s277 + $0x198] sm:$0xff]
        %v332 = vld [vmem:[%s277 + $0x1a0] sm:$0xff]
        %v333 = vld [vmem:[%s277 + $0x1a8] sm:$0xff]
        %v334 = vld [vmem:[%s277 + $0x1b0] sm:$0xff]
        %v335 = vld [vmem:[%s277 + $0x1b8] sm:$0xff]
        %v336 = vld [vmem:[%s277 + $0x1c0] sm:$0xff]
        %v337 = vld [vmem:[%s277 + $0x1c8] sm:$0xff]
        %v338 = vld [vmem:[%s277 + $0x1d0] sm:$0xff]
        %v339 = vld [vmem:[%s277 + $0x1d8] sm:$0xff]
        %v340 = vld [vmem:[%s277 + $0x1e0] sm:$0xff]
        %v341 = vld [vmem:[%s277 + $0x1e8] sm:$0xff]
        %v342 = vld [vmem:[%s277 + $0x1f0] sm:$0xff]
        %v343 = vld [vmem:[%s277 + $0x1f8] sm:$0xff]
        %v344 = vld [vmem:[%s277 + $0x200] sm:$0xff]
        %v345 = vld [vmem:[%s277 + $0x208] sm:$0xff]
        %v346 = vld [vmem:[%s277 + $0x210] sm:$0xff]
        %v347 = vld [vmem:[%s277 + $0x218] sm:$0xff]
        %v348 = vld [vmem:[%s277 + $0x220] sm:$0xff]
        %v349 = vld [vmem:[%s277 + $0x228] sm:$0xff]
        %v350 = vld [vmem:[%s277 + $0x230] sm:$0xff]
        %v351 = vld [vmem:[%s277 + $0x238] sm:$0xff]
        %v352 = vld [vmem:[%s277 + $0x240] sm:$0xff]
        %v353 = vld [vmem:[%s277 + $0x248] sm:$0xff]
        %v354 = vld [vmem:[%s277 + $0x250] sm:$0xff]
        %v355 = vld [vmem:[%s277 + $0x258] sm:$0xff]
        %v356 = vld [vmem:[%s277 + $0x260] sm:$0xff]
        %v357 = vld [vmem:[%s277 + $0x268] sm:$0xff]
        %v358 = vld [vmem:[%s277 + $0x270] sm:$0xff]
        %v359 = vld [vmem:[%s277 + $0x278] sm:$0xff]
        %v360 = vld [vmem:[%s277 + $0x280] sm:$0xff]
        %v361 = vld [vmem:[%s277 + $0x288] sm:$0xff]
        %v362 = vld [vmem:[%s277 + $0x290] sm:$0xff]
        %v363 = vld [vmem:[%s277 + $0x298] sm:$0xff]
        %v364 = vld [vmem:[%s277 + $0x2a0] sm:$0xff]
        %v365 = vld [vmem:[%s277 + $0x2a8] sm:$0xff]
        %v366 = vld [vmem:[%s277 + $0x2b0] sm:$0xff]
        %v367 = vld [vmem:[%s277 + $0x2b8] sm:$0xff]
        %v368 = vld [vmem:[%s277 + $0x2c0] sm:$0xff]
        %v369 = vld [vmem:[%s277 + $0x2c8] sm:$0xff]
        %v370 = vld [vmem:[%s277 + $0x2d0] sm:$0xff]
        %v371 = vld [vmem:[%s277 + $0x2d8] sm:$0xff]
        %v372 = vld [vmem:[%s277 + $0x2e0] sm:$0xff]
        %v373 = vld [vmem:[%s277 + $0x2e8] sm:$0xff]
        %v374 = vld [vmem:[%s277 + $0x2f0] sm:$0xff]
        %v375 = vld [vmem:[%s277 + $0x2f8] sm:$0xff]
        %v376 = vld [vmem:[%s277 + $0x300] sm:$0xff]
        %v377 = vld [vmem:[%s277 + $0x308] sm:$0xff]
        %v378 = vld [vmem:[%s277 + $0x310] sm:$0xff]
        %v379 = vld [vmem:[%s277 + $0x318] sm:$0xff]
        %v380 = vld [vmem:[%s277 + $0x320] sm:$0xff]
        %v381 = vld [vmem:[%s277 + $0x328] sm:$0xff]
        %v382 = vld [vmem:[%s277 + $0x330] sm:$0xff]
        %v383 = vld [vmem:[%s277 + $0x338] sm:$0xff]
        %v384 = vld [vmem:[%s277 + $0x340] sm:$0xff]
        %v385 = vld [vmem:[%s277 + $0x348] sm:$0xff]
        %v386 = vld [vmem:[%s277 + $0x350] sm:$0xff]
        %v387 = vld [vmem:[%s277 + $0x358] sm:$0xff]
        %v388 = vld [vmem:[%s277 + $0x360] sm:$0xff]
        %v389 = vld [vmem:[%s277 + $0x368] sm:$0xff]
        %v390 = vld [vmem:[%s277 + $0x370] sm:$0xff]
        %v391 = vld [vmem:[%s277 + $0x378] sm:$0xff]
        %v392 = vld [vmem:[%s277 + $0x380] sm:$0xff]
        %v393 = vld [vmem:[%s277 + $0x388] sm:$0xff]
        %v394 = vld [vmem:[%s277 + $0x390] sm:$0xff]
        %v395 = vld [vmem:[%s277 + $0x398] sm:$0xff]
        %v396 = vld [vmem:[%s277 + $0x3a0] sm:$0xff]
        %v397 = vld [vmem:[%s277 + $0x3a8] sm:$0xff]
        %v398 = vld [vmem:[%s277 + $0x3b0] sm:$0xff]
        %v399 = vld [vmem:[%s277 + $0x3b8] sm:$0xff]
        %v400 = vld [vmem:[%s277 + $0x3c0] sm:$0xff]
        %v401 = vld [vmem:[%s277 + $0x3c8] sm:$0xff]
        %v402 = vld [vmem:[%s277 + $0x3d0] sm:$0xff]
        %v403 = vld [vmem:[%s277 + $0x3d8] sm:$0xff]
        %v404 = vld [vmem:[%s277 + $0x3e0] sm:$0xff]
        %v405 = vld [vmem:[%s277 + $0x3e8] sm:$0xff]
        %v406 = vld [vmem:[%s277 + $0x3f0] sm:$0xff]
        %v407 = vld [vmem:[%s277 + $0x3f8] sm:$0xff]
        %v408 = vld [vmem:[%s1] sm:$0xff]
        %v409 = vld [vmem:[%s1 + $0x8] sm:$0xff]
        %v410 = vld [vmem:[%s1 + $0x10] sm:$0xff]
        %v411 = vld [vmem:[%s1 + $0x18] sm:$0xff]
        %v412 = vld [vmem:[%s2] sm:$0x1]
        %v414 = vlaneseq
        %v415 = vshrl.u32 %v414, 7
        %v416 = vsub.s32 0, %v415
        %v417 = vrot.slane %v412, %v416
        %vm419 = vcmask 261120
        %v421 = vsel %vm419, %v280, 0
        %v424 = vsel %vm419, %v281, 0
        %v427 = vsel %vm419, %v282, 0
        %v430 = vsel %vm419, %v283, 0
        %v433 = vsel %vm419, %v284, 0
        %v436 = vsel %vm419, %v285, 0
        %v439 = vsel %vm419, %v286, 0
        %v442 = vsel %vm419, %v287, 0
        %v445 = vsel %vm419, %v288, 0
        %v448 = vsel %vm419, %v289, 0
        %v451 = vsel %vm419, %v290, 0
        %v454 = vsel %vm419, %v291, 0
        %v457 = vsel %vm419, %v292, 0
        %v460 = vsel %vm419, %v293, 0
        %v463 = vsel %vm419, %v294, 0
        %v466 = vsel %vm419, %v295, 0
        %v469 = vsel %vm419, %v296, 0
        %v472 = vsel %vm419, %v297, 0
        %v475 = vsel %vm419, %v298, 0
        %v478 = vsel %vm419, %v299, 0
        %v481 = vsel %vm419, %v300, 0
        %v484 = vsel %vm419, %v301, 0
        %v487 = vsel %vm419, %v302, 0
        %v490 = vsel %vm419, %v303, 0
        %v493 = vsel %vm419, %v304, 0
        %v496 = vsel %vm419, %v305, 0
        %v499 = vsel %vm419, %v306, 0
        %v502 = vsel %vm419, %v307, 0
        %v505 = vsel %vm419, %v308, 0
        %v508 = vsel %vm419, %v309, 0
        %v511 = vsel %vm419, %v310, 0
        %v514 = vsel %vm419, %v311, 0
        %v517 = vsel %vm419, %v312, 0
        %v520 = vsel %vm419, %v313, 0
        %v523 = vsel %vm419, %v314, 0
        %v526 = vsel %vm419, %v315, 0
        %v529 = vsel %vm419, %v316, 0
        %v532 = vsel %vm419, %v317, 0
        %v535 = vsel %vm419, %v318, 0
        %v538 = vsel %vm419, %v319, 0
        %v541 = vsel %vm419, %v320, 0
        %v544 = vsel %vm419, %v321, 0
        %v547 = vsel %vm419, %v322, 0
        %v550 = vsel %vm419, %v323, 0
        %v553 = vsel %vm419, %v324, 0
        %v556 = vsel %vm419, %v325, 0
        %v559 = vsel %vm419, %v326, 0
        %v562 = vsel %vm419, %v327, 0
        %v565 = vsel %vm419, %v328, 0
        %v568 = vsel %vm419, %v329, 0
        %v571 = vsel %vm419, %v330, 0
        %v574 = vsel %vm419, %v331, 0
        %v577 = vsel %vm419, %v332, 0
        %v580 = vsel %vm419, %v333, 0
        %v583 = vsel %vm419, %v334, 0
        %v586 = vsel %vm419, %v335, 0
        %v589 = vsel %vm419, %v336, 0
        %v592 = vsel %vm419, %v337, 0
        %v595 = vsel %vm419, %v338, 0
        %v598 = vsel %vm419, %v339, 0
        %v601 = vsel %vm419, %v340, 0
        %v604 = vsel %vm419, %v341, 0
        %v607 = vsel %vm419, %v342, 0
        %v610 = vsel %vm419, %v343, 0
        %v613 = vsel %vm419, %v344, 0
        %v616 = vsel %vm419, %v345, 0
        %v619 = vsel %vm419, %v346, 0
        %v622 = vsel %vm419, %v347, 0
        %v625 = vsel %vm419, %v348, 0
        %v628 = vsel %vm419, %v349, 0
        %v631 = vsel %vm419, %v350, 0
        %v634 = vsel %vm419, %v351, 0
        %v637 = vsel %vm419, %v352, 0
        %v640 = vsel %vm419, %v353, 0
        %v643 = vsel %vm419, %v354, 0
        %v646 = vsel %vm419, %v355, 0
        %v649 = vsel %vm419, %v356, 0
        %v652 = vsel %vm419, %v357, 0
        %v655 = vsel %vm419, %v358, 0
        %v658 = vsel %vm419, %v359, 0
        %v661 = vsel %vm419, %v360, 0
        %v664 = vsel %vm419, %v361, 0
        %v667 = vsel %vm419, %v362, 0
        %v670 = vsel %vm419, %v363, 0
        %v673 = vsel %vm419, %v364, 0
        %v676 = vsel %vm419, %v365, 0
        %v679 = vsel %vm419, %v366, 0
        %v682 = vsel %vm419, %v367, 0
        %v685 = vsel %vm419, %v368, 0
        %v688 = vsel %vm419, %v369, 0
        %v691 = vsel %vm419, %v370, 0
        %v694 = vsel %vm419, %v371, 0
        %v697 = vsel %vm419, %v372, 0
        %v700 = vsel %vm419, %v373, 0
        %v703 = vsel %vm419, %v374, 0
        %v706 = vsel %vm419, %v375, 0
        %v709 = vsel %vm419, %v376, 0
        %v712 = vsel %vm419, %v377, 0
        %v715 = vsel %vm419, %v378, 0
        %v718 = vsel %vm419, %v379, 0
        %v721 = vsel %vm419, %v380, 0
        %v724 = vsel %vm419, %v381, 0
        %v727 = vsel %vm419, %v382, 0
        %v730 = vsel %vm419, %v383, 0
        %v733 = vsel %vm419, %v384, 0
        %v736 = vsel %vm419, %v385, 0
        %v739 = vsel %vm419, %v386, 0
        %v742 = vsel %vm419, %v387, 0
        %v745 = vsel %vm419, %v388, 0
        %v748 = vsel %vm419, %v389, 0
        %v751 = vsel %vm419, %v390, 0
        %v754 = vsel %vm419, %v391, 0
        %v757 = vsel %vm419, %v392, 0
        %v760 = vsel %vm419, %v393, 0
        %v763 = vsel %vm419, %v394, 0
        %v766 = vsel %vm419, %v395, 0
        %v769 = vsel %vm419, %v396, 0
        %v772 = vsel %vm419, %v397, 0
        %v775 = vsel %vm419, %v398, 0
        %v778 = vsel %vm419, %v399, 0
        %v781 = vsel %vm419, %v400, 0
        %v784 = vsel %vm419, %v401, 0
        %v787 = vsel %vm419, %v402, 0
        %v790 = vsel %vm419, %v403, 0
        %v793 = vsel %vm419, %v404, 0
        %v796 = vsel %vm419, %v405, 0
        %v799 = vsel %vm419, %v406, 0
        %v802 = vsel %vm419, %v407, 0
        %804 = vmatprep.subr.mxu0 0.0
        %805 = vmatpush1.msra.mxu0 %v408
        %806 = vmatprep.subr.mxu0 0.0
        %807 = vmatpush1.msra.mxu0 %v409
        %808 = vmatprep.subr.mxu0 0.0
        %809 = vmatpush1.msra.mxu0 %v410
        %810 = vmatprep.subr.mxu0 0.0
        %811 = vmatpush1.msra.mxu0 %v411
        %812 = vmatprep.subr.mxu0 0.0
        %813 = vmatpush1.msra.mxu0 0.0
        %814 = vmatprep.subr.mxu0 0.0
        %815 = vmatpush1.msra.mxu0 0.0
        %816 = vmatprep.subr.mxu0 0.0
        %817 = vmatpush1.msra.mxu0 0.0
        %818 = vmatprep.subr.mxu0 0.0
        %819 = vmatpush1.msra.mxu0 0.0
        %820 = vmatprep.subr.mxu0 0.0
        %821 = vmatpush1.msra.mxu0 0.0
        %822 = vmatprep.subr.mxu0 0.0
        %823 = vmatpush1.msra.mxu0 0.0
        %824 = vmatprep.subr.mxu0 0.0
        %825 = vmatpush1.msra.mxu0 0.0
        %826 = vmatprep.subr.mxu0 0.0
        %827 = vmatpush1.msra.mxu0 0.0
        %828 = vmatprep.subr.mxu0 0.0
        %829 = vmatpush1.msra.mxu0 0.0
        %830 = vmatprep.subr.mxu0 0.0
        %831 = vmatpush1.msra.mxu0 0.0
        %832 = vmatprep.subr.mxu0 0.0
        %833 = vmatpush1.msra.mxu0 0.0
        %834 = vmatprep.subr.mxu0 0.0
        %835 = vmatpush1.msra.mxu0 0.0
        %836 = vmatprep.subr.mxu0 0.0
        %837 = vmatpush1.msra.mxu0 0.0
        %838 = vmatprep.subr.mxu0 0.0
        %839 = vmatpush1.msra.mxu0 0.0
        %840 = vmatprep.subr.mxu0 0.0
        %841 = vmatpush1.msra.mxu0 0.0
        %842 = vmatprep.subr.mxu0 0.0
        %843 = vmatpush1.msra.mxu0 0.0
        %844 = vmatprep.subr.mxu0 0.0
        %845 = vmatpush1.msra.mxu0 0.0
        %846 = vmatprep.subr.mxu0 0.0
        %847 = vmatpush1.msra.mxu0 0.0
        %848 = vmatprep.subr.mxu0 0.0
        %849 = vmatpush1.msra.mxu0 0.0
        %850 = vmatprep.subr.mxu0 0.0
        %851 = vmatpush1.msra.mxu0 0.0
        %852 = vmatprep.subr.mxu0 0.0
        %853 = vmatpush1.msra.mxu0 0.0
        %854 = vmatprep.subr.mxu0 0.0
        %855 = vmatpush1.msra.mxu0 0.0
        %856 = vmatprep.subr.mxu0 0.0
        %857 = vmatpush1.msra.mxu0 0.0
        %858 = vmatprep.subr.mxu0 0.0
        %859 = vmatpush1.msra.mxu0 0.0
        %860 = vmatprep.subr.mxu0 0.0
        %861 = vmatpush1.msra.mxu0 0.0
        %862 = vmatprep.subr.mxu0 0.0
        %863 = vmatpush1.msra.mxu0 0.0
        %864 = vmatprep.subr.mxu0 0.0
        %865 = vmatpush1.msra.mxu0 0.0
        %866 = vmatprep.subr.mxu0 0.0
        %867 = vmatpush1.msra.mxu0 0.0
        %868 = vmatprep.mubr.f32.mxu0 0.0
        %869 = vmatmul.mubr.f32.gmra.mrb[0].mxu0 %v421
        %v870 = vpop.f32.mrb[0].mxu0
        %v871 = vadd.f32 %v417, %v870
        %v872 = vpop.f32.mrb[0].mxu0
        %873 = vmatprep.mubr.f32.mxu0 0.0
        %874 = vmatmul.mubr.f32.gmra.mrb[0].mxu0 %v424
        %v875 = vpop.f32.mrb[0].mxu0
        %v876 = vadd.f32 %v417, %v875
        %v877 = vpop.f32.mrb[0].mxu0
        %878 = vmatprep.mubr.f32.mxu0 0.0
        %879 = vmatmul.mubr.f32.gmra.mrb[0].mxu0 %v427
        %v880 = vpop.f32.mrb[0].mxu0
        %v881 = vadd.f32 %v417, %v880
        %v882 = vpop.f32.mrb[0].mxu0
        %883 = vmatprep.mubr.f32.mxu0 0.0
        %884 = vmatmul.mubr.f32.gmra.mrb[0].mxu0 %v430
        %v885 = vpop.f32.mrb[0].mxu0
        %v886 = vadd.f32 %v417, %v885
        %v887 = vpop.f32.mrb[0].mxu0
        %888 = vmatprep.mubr.f32.mxu0 0.0
        %889 = vmatmul.mubr.f32.gmra.mrb[0].mxu0 %v433
        %v890 = vpop.f32.mrb[0].mxu0
        %v891 = vadd.f32 %v417, %v890
        %v892 = vpop.f32.mrb[0].mxu0
        %893 = vmatprep.mubr.f32.mxu0 0.0
        %894 = vmatmul.mubr.f32.gmra.mrb[0].mxu0 %v436
        %v895 = vpop.f32.mrb[0].mxu0
        %v896 = vadd.f32 %v417, %v895
        %v897 = vpop.f32.mrb[0].mxu0
        %898 = vmatprep.mubr.f32.mxu0 0.0
        %899 = vmatmul.mubr.f32.gmra.mrb[0].mxu0 %v439
        %v900 = vpop.f32.mrb[0].mxu0
        %v901 = vadd.f32 %v417, %v900
        %v902 = vpop.f32.mrb[0].mxu0
        %903 = vmatprep.mubr.f32.mxu0 0.0
        %904 = vmatmul.mubr.f32.gmra.mrb[0].mxu0 %v442
        %v905 = vpop.f32.mrb[0].mxu0
        %v906 = vadd.f32 %v417, %v905
        %v907 = vpop.f32.mrb[0].mxu0
        %908 = vmatprep.mubr.f32.mxu0 0.0
        %909 = vmatmul.mubr.f32.gmra.mrb[0].mxu0 %v445
        %v910 = vpop.f32.mrb[0].mxu0
        %v911 = vadd.f32 %v417, %v910
        %v912 = vpop.f32.mrb[0].mxu0
        %913 = vmatprep.mubr.f32.mxu0 0.0
        %914 = vmatmul.mubr.f32.gmra.mrb[0].mxu0 %v448
        %v915 = vpop.f32.mrb[0].mxu0
        %v916 = vadd.f32 %v417, %v915
        %v917 = vpop.f32.mrb[0].mxu0
        %918 = vmatprep.mubr.f32.mxu0 0.0
        %919 = vmatmul.mubr.f32.gmra.mrb[0].mxu0 %v451
        %v920 = vpop.f32.mrb[0].mxu0
        %v921 = vadd.f32 %v417, %v920
        %v922 = vpop.f32.mrb[0].mxu0
        %923 = vmatprep.mubr.f32.mxu0 0.0
        %924 = vmatmul.mubr.f32.gmra.mrb[0].mxu0 %v454
        %v925 = vpop.f32.mrb[0].mxu0
        %v926 = vadd.f32 %v417, %v925
        %v927 = vpop.f32.mrb[0].mxu0
        %928 = vmatprep.mubr.f32.mxu0 0.0
        %929 = vmatmul.mubr.f32.gmra.mrb[0].mxu0 %v457
        %v930 = vpop.f32.mrb[0].mxu0
        %v931 = vadd.f32 %v417, %v930
        %v932 = vpop.f32.mrb[0].mxu0
        %933 = vmatprep.mubr.f32.mxu0 0.0
        %934 = vmatmul.mubr.f32.gmra.mrb[0].mxu0 %v460
        %v935 = vpop.f32.mrb[0].mxu0
        %v936 = vadd.f32 %v417, %v935
        %v937 = vpop.f32.mrb[0].mxu0
        %938 = vmatprep.mubr.f32.mxu0 0.0
        %939 = vmatmul.mubr.f32.gmra.mrb[0].mxu0 %v463
        %v940 = vpop.f32.mrb[0].mxu0
        %v941 = vadd.f32 %v417, %v940
        %v942 = vpop.f32.mrb[0].mxu0
        %943 = vmatprep.mubr.f32.mxu0 0.0
        %944 = vmatmul.mubr.f32.gmra.mrb[0].mxu0 %v466
        %v945 = vpop.f32.mrb[0].mxu0
        %v946 = vadd.f32 %v417, %v945
        %v947 = vpop.f32.mrb[0].mxu0
        %948 = vmatprep.mubr.f32.mxu0 0.0
        %949 = vmatmul.mubr.f32.gmra.mrb[0].mxu0 %v469
        %v950 = vpop.f32.mrb[0].mxu0
        %v951 = vadd.f32 %v417, %v950
        %v952 = vpop.f32.mrb[0].mxu0
        %953 = vmatprep.mubr.f32.mxu0 0.0
        %954 = vmatmul.mubr.f32.gmra.mrb[0].mxu0 %v472
        %v955 = vpop.f32.mrb[0].mxu0
        %v956 = vadd.f32 %v417, %v955
        %v957 = vpop.f32.mrb[0].mxu0
        %958 = vmatprep.mubr.f32.mxu0 0.0
        %959 = vmatmul.mubr.f32.gmra.mrb[0].mxu0 %v475
        %v960 = vpop.f32.mrb[0].mxu0
        %v961 = vadd.f32 %v417, %v960
        %v962 = vpop.f32.mrb[0].mxu0
        %963 = vmatprep.mubr.f32.mxu0 0.0
        %964 = vmatmul.mubr.f32.gmra.mrb[0].mxu0 %v478
        %v965 = vpop.f32.mrb[0].mxu0
        %v966 = vadd.f32 %v417, %v965
        %v967 = vpop.f32.mrb[0].mxu0
        %968 = vmatprep.mubr.f32.mxu0 0.0
        %969 = vmatmul.mubr.f32.gmra.mrb[0].mxu0 %v481
        %v970 = vpop.f32.mrb[0].mxu0
        %v971 = vadd.f32 %v417, %v970
        %v972 = vpop.f32.mrb[0].mxu0
        %973 = vmatprep.mubr.f32.mxu0 0.0
        %974 = vmatmul.mubr.f32.gmra.mrb[0].mxu0 %v484
        %v975 = vpop.f32.mrb[0].mxu0
        %v976 = vadd.f32 %v417, %v975
        %v977 = vpop.f32.mrb[0].mxu0
        %978 = vmatprep.mubr.f32.mxu0 0.0
        %979 = vmatmul.mubr.f32.gmra.mrb[0].mxu0 %v487
        %v980 = vpop.f32.mrb[0].mxu0
        %v981 = vadd.f32 %v417, %v980
        %v982 = vpop.f32.mrb[0].mxu0
        %983 = vmatprep.mubr.f32.mxu0 0.0
        %984 = vmatmul.mubr.f32.gmra.mrb[0].mxu0 %v490
        %v985 = vpop.f32.mrb[0].mxu0
        %v986 = vadd.f32 %v417, %v985
        %v987 = vpop.f32.mrb[0].mxu0
        %988 = vmatprep.mubr.f32.mxu0 0.0
        %989 = vmatmul.mubr.f32.gmra.mrb[0].mxu0 %v493
        %v990 = vpop.f32.mrb[0].mxu0
        %v991 = vadd.f32 %v417, %v990
        %v992 = vpop.f32.mrb[0].mxu0
        %993 = vmatprep.mubr.f32.mxu0 0.0
        %994 = vmatmul.mubr.f32.gmra.mrb[0].mxu0 %v496
        %v995 = vpop.f32.mrb[0].mxu0
        %v996 = vadd.f32 %v417, %v995
        %v997 = vpop.f32.mrb[0].mxu0
        %998 = vmatprep.mubr.f32.mxu0 0.0
        %999 = vmatmul.mubr.f32.gmra.mrb[0].mxu0 %v499
        %v1000 = vpop.f32.mrb[0].mxu0
        %v1001 = vadd.f32 %v417, %v1000
        %v1002 = vpop.f32.mrb[0].mxu0
        %1003 = vmatprep.mubr.f32.mxu0 0.0
        %1004 = vmatmul.mubr.f32.gmra.mrb[0].mxu0 %v502
        %v1005 = vpop.f32.mrb[0].mxu0
        %v1006 = vadd.f32 %v417, %v1005
        %v1007 = vpop.f32.mrb[0].mxu0
        %1008 = vmatprep.mubr.f32.mxu0 0.0
        %1009 = vmatmul.mubr.f32.gmra.mrb[0].mxu0 %v505
        %v1010 = vpop.f32.mrb[0].mxu0
        %v1011 = vadd.f32 %v417, %v1010
        %v1012 = vpop.f32.mrb[0].mxu0
        %1013 = vmatprep.mubr.f32.mxu0 0.0
        %1014 = vmatmul.mubr.f32.gmra.mrb[0].mxu0 %v508
        %v1015 = vpop.f32.mrb[0].mxu0
        %v1016 = vadd.f32 %v417, %v1015
        %v1017 = vpop.f32.mrb[0].mxu0
        %1018 = vmatprep.mubr.f32.mxu0 0.0
        %1019 = vmatmul.mubr.f32.gmra.mrb[0].mxu0 %v511
        %v1020 = vpop.f32.mrb[0].mxu0
        %v1021 = vadd.f32 %v417, %v1020
        %v1022 = vpop.f32.mrb[0].mxu0
        %1023 = vmatprep.mubr.f32.mxu0 0.0
        %1024 = vmatmul.mubr.f32.gmra.mrb[0].mxu0 %v514
        %v1025 = vpop.f32.mrb[0].mxu0
        %v1026 = vadd.f32 %v417, %v1025
        %v1027 = vpop.f32.mrb[0].mxu0
        %1028 = vmatprep.mubr.f32.mxu0 0.0
        %1029 = vmatmul.mubr.f32.gmra.mrb[0].mxu0 %v517
        %v1030 = vpop.f32.mrb[0].mxu0
        %v1031 = vadd.f32 %v417, %v1030
        %v1032 = vpop.f32.mrb[0].mxu0
        %1033 = vmatprep.mubr.f32.mxu0 0.0
        %1034 = vmatmul.mubr.f32.gmra.mrb[0].mxu0 %v520
        %v1035 = vpop.f32.mrb[0].mxu0
        %v1036 = vadd.f32 %v417, %v1035
        %v1037 = vpop.f32.mrb[0].mxu0
        %1038 = vmatprep.mubr.f32.mxu0 0.0
        %1039 = vmatmul.mubr.f32.gmra.mrb[0].mxu0 %v523
        %v1040 = vpop.f32.mrb[0].mxu0
        %v1041 = vadd.f32 %v417, %v1040
        %v1042 = vpop.f32.mrb[0].mxu0
        %1043 = vmatprep.mubr.f32.mxu0 0.0
        %1044 = vmatmul.mubr.f32.gmra.mrb[0].mxu0 %v526
        %v1045 = vpop.f32.mrb[0].mxu0
        %v1046 = vadd.f32 %v417, %v1045
        %v1047 = vpop.f32.mrb[0].mxu0
        %1048 = vmatprep.mubr.f32.mxu0 0.0
        %1049 = vmatmul.mubr.f32.gmra.mrb[0].mxu0 %v529
        %v1050 = vpop.f32.mrb[0].mxu0
        %v1051 = vadd.f32 %v417, %v1050
        %v1052 = vpop.f32.mrb[0].mxu0
        %1053 = vmatprep.mubr.f32.mxu0 0.0
        %1054 = vmatmul.mubr.f32.gmra.mrb[0].mxu0 %v532
        %v1055 = vpop.f32.mrb[0].mxu0
        %v1056 = vadd.f32 %v417, %v1055
        %v1057 = vpop.f32.mrb[0].mxu0
        %1058 = vmatprep.mubr.f32.mxu0 0.0
        %1059 = vmatmul.mubr.f32.gmra.mrb[0].mxu0 %v535
        %v1060 = vpop.f32.mrb[0].mxu0
        %v1061 = vadd.f32 %v417, %v1060
        %v1062 = vpop.f32.mrb[0].mxu0
        %1063 = vmatprep.mubr.f32.mxu0 0.0
        %1064 = vmatmul.mubr.f32.gmra.mrb[0].mxu0 %v538
        %v1065 = vpop.f32.mrb[0].mxu0
        %v1066 = vadd.f32 %v417, %v1065
        %v1067 = vpop.f32.mrb[0].mxu0
        %1068 = vmatprep.mubr.f32.mxu0 0.0
        %1069 = vmatmul.mubr.f32.gmra.mrb[0].mxu0 %v541
        %v1070 = vpop.f32.mrb[0].mxu0
        %v1071 = vadd.f32 %v417, %v1070
        %v1072 = vpop.f32.mrb[0].mxu0
        %1073 = vmatprep.mubr.f32.mxu0 0.0
        %1074 = vmatmul.mubr.f32.gmra.mrb[0].mxu0 %v544
        %v1075 = vpop.f32.mrb[0].mxu0
        %v1076 = vadd.f32 %v417, %v1075
        %v1077 = vpop.f32.mrb[0].mxu0
        %1078 = vmatprep.mubr.f32.mxu0 0.0
        %1079 = vmatmul.mubr.f32.gmra.mrb[0].mxu0 %v547
        %v1080 = vpop.f32.mrb[0].mxu0
        %v1081 = vadd.f32 %v417, %v1080
        %v1082 = vpop.f32.mrb[0].mxu0
        %1083 = vmatprep.mubr.f32.mxu0 0.0
        %1084 = vmatmul.mubr.f32.gmra.mrb[0].mxu0 %v550
        %v1085 = vpop.f32.mrb[0].mxu0
        %v1086 = vadd.f32 %v417, %v1085
        %v1087 = vpop.f32.mrb[0].mxu0
        %1088 = vmatprep.mubr.f32.mxu0 0.0
        %1089 = vmatmul.mubr.f32.gmra.mrb[0].mxu0 %v553
        %v1090 = vpop.f32.mrb[0].mxu0
        %v1091 = vadd.f32 %v417, %v1090
        %v1092 = vpop.f32.mrb[0].mxu0
        %1093 = vmatprep.mubr.f32.mxu0 0.0
        %1094 = vmatmul.mubr.f32.gmra.mrb[0].mxu0 %v556
        %v1095 = vpop.f32.mrb[0].mxu0
        %v1096 = vadd.f32 %v417, %v1095
        %v1097 = vpop.f32.mrb[0].mxu0
        %1098 = vmatprep.mubr.f32.mxu0 0.0
        %1099 = vmatmul.mubr.f32.gmra.mrb[0].mxu0 %v559
        %v1100 = vpop.f32.mrb[0].mxu0
        %v1101 = vadd.f32 %v417, %v1100
        %v1102 = vpop.f32.mrb[0].mxu0
        %1103 = vmatprep.mubr.f32.mxu0 0.0
        %1104 = vmatmul.mubr.f32.gmra.mrb[0].mxu0 %v562
        %v1105 = vpop.f32.mrb[0].mxu0
        %v1106 = vadd.f32 %v417, %v1105
        %v1107 = vpop.f32.mrb[0].mxu0
        %1108 = vmatprep.mubr.f32.mxu0 0.0
        %1109 = vmatmul.mubr.f32.gmra.mrb[0].mxu0 %v565
        %v1110 = vpop.f32.mrb[0].mxu0
        %v1111 = vadd.f32 %v417, %v1110
        %v1112 = vpop.f32.mrb[0].mxu0
        %1113 = vmatprep.mubr.f32.mxu0 0.0
        %1114 = vmatmul.mubr.f32.gmra.mrb[0].mxu0 %v568
        %v1115 = vpop.f32.mrb[0].mxu0
        %v1116 = vadd.f32 %v417, %v1115
        %v1117 = vpop.f32.mrb[0].mxu0
        %1118 = vmatprep.mubr.f32.mxu0 0.0
        %1119 = vmatmul.mubr.f32.gmra.mrb[0].mxu0 %v571
        %v1120 = vpop.f32.mrb[0].mxu0
        %v1121 = vadd.f32 %v417, %v1120
        %v1122 = vpop.f32.mrb[0].mxu0
        %1123 = vmatprep.mubr.f32.mxu0 0.0
        %1124 = vmatmul.mubr.f32.gmra.mrb[0].mxu0 %v574
        %v1125 = vpop.f32.mrb[0].mxu0
        %v1126 = vadd.f32 %v417, %v1125
        %v1127 = vpop.f32.mrb[0].mxu0
        %1128 = vmatprep.mubr.f32.mxu0 0.0
        %1129 = vmatmul.mubr.f32.gmra.mrb[0].mxu0 %v577
        %v1130 = vpop.f32.mrb[0].mxu0
        %v1131 = vadd.f32 %v417, %v1130
        %v1132 = vpop.f32.mrb[0].mxu0
        %1133 = vmatprep.mubr.f32.mxu0 0.0
        %1134 = vmatmul.mubr.f32.gmra.mrb[0].mxu0 %v580
        %v1135 = vpop.f32.mrb[0].mxu0
        %v1136 = vadd.f32 %v417, %v1135
        %v1137 = vpop.f32.mrb[0].mxu0
        %1138 = vmatprep.mubr.f32.mxu0 0.0
        %1139 = vmatmul.mubr.f32.gmra.mrb[0].mxu0 %v583
        %v1140 = vpop.f32.mrb[0].mxu0
        %v1141 = vadd.f32 %v417, %v1140
        %v1142 = vpop.f32.mrb[0].mxu0
        %1143 = vmatprep.mubr.f32.mxu0 0.0
        %1144 = vmatmul.mubr.f32.gmra.mrb[0].mxu0 %v586
        %v1145 = vpop.f32.mrb[0].mxu0
        %v1146 = vadd.f32 %v417, %v1145
        %v1147 = vpop.f32.mrb[0].mxu0
        %1148 = vmatprep.mubr.f32.mxu0 0.0
        %1149 = vmatmul.mubr.f32.gmra.mrb[0].mxu0 %v589
        %v1150 = vpop.f32.mrb[0].mxu0
        %v1151 = vadd.f32 %v417, %v1150
        %v1152 = vpop.f32.mrb[0].mxu0
        %1153 = vmatprep.mubr.f32.mxu0 0.0
        %1154 = vmatmul.mubr.f32.gmra.mrb[0].mxu0 %v592
        %v1155 = vpop.f32.mrb[0].mxu0
        %v1156 = vadd.f32 %v417, %v1155
        %v1157 = vpop.f32.mrb[0].mxu0
        %1158 = vmatprep.mubr.f32.mxu0 0.0
        %1159 = vmatmul.mubr.f32.gmra.mrb[0].mxu0 %v595
        %v1160 = vpop.f32.mrb[0].mxu0
        %v1161 = vadd.f32 %v417, %v1160
        %v1162 = vpop.f32.mrb[0].mxu0
        %1163 = vmatprep.mubr.f32.mxu0 0.0
        %1164 = vmatmul.mubr.f32.gmra.mrb[0].mxu0 %v598
        %v1165 = vpop.f32.mrb[0].mxu0
        %v1166 = vadd.f32 %v417, %v1165
        %v1167 = vpop.f32.mrb[0].mxu0
        %1168 = vmatprep.mubr.f32.mxu0 0.0
        %1169 = vmatmul.mubr.f32.gmra.mrb[0].mxu0 %v601
        %v1170 = vpop.f32.mrb[0].mxu0
        %v1171 = vadd.f32 %v417, %v1170
        %v1172 = vpop.f32.mrb[0].mxu0
        %1173 = vmatprep.mubr.f32.mxu0 0.0
        %1174 = vmatmul.mubr.f32.gmra.mrb[0].mxu0 %v604
        %v1175 = vpop.f32.mrb[0].mxu0
        %v1176 = vadd.f32 %v417, %v1175
        %v1177 = vpop.f32.mrb[0].mxu0
        %1178 = vmatprep.mubr.f32.mxu0 0.0
        %1179 = vmatmul.mubr.f32.gmra.mrb[0].mxu0 %v607
        %v1180 = vpop.f32.mrb[0].mxu0
        %v1181 = vadd.f32 %v417, %v1180
        %v1182 = vpop.f32.mrb[0].mxu0
        %1183 = vmatprep.mubr.f32.mxu0 0.0
        %1184 = vmatmul.mubr.f32.gmra.mrb[0].mxu0 %v610
        %v1185 = vpop.f32.mrb[0].mxu0
        %v1186 = vadd.f32 %v417, %v1185
        %v1187 = vpop.f32.mrb[0].mxu0
        %1188 = vmatprep.mubr.f32.mxu0 0.0
        %1189 = vmatmul.mubr.f32.gmra.mrb[0].mxu0 %v613
        %v1190 = vpop.f32.mrb[0].mxu0
        %v1191 = vadd.f32 %v417, %v1190
        %v1192 = vpop.f32.mrb[0].mxu0
        %1193 = vmatprep.mubr.f32.mxu0 0.0
        %1194 = vmatmul.mubr.f32.gmra.mrb[0].mxu0 %v616
        %v1195 = vpop.f32.mrb[0].mxu0
        %v1196 = vadd.f32 %v417, %v1195
        %v1197 = vpop.f32.mrb[0].mxu0
        %1198 = vmatprep.mubr.f32.mxu0 0.0
        %1199 = vmatmul.mubr.f32.gmra.mrb[0].mxu0 %v619
        %v1200 = vpop.f32.mrb[0].mxu0
        %v1201 = vadd.f32 %v417, %v1200
        %v1202 = vpop.f32.mrb[0].mxu0
        %1203 = vmatprep.mubr.f32.mxu0 0.0
        %1204 = vmatmul.mubr.f32.gmra.mrb[0].mxu0 %v622
        %v1205 = vpop.f32.mrb[0].mxu0
        %v1206 = vadd.f32 %v417, %v1205
        %v1207 = vpop.f32.mrb[0].mxu0
        %1208 = vmatprep.mubr.f32.mxu0 0.0
        %1209 = vmatmul.mubr.f32.gmra.mrb[0].mxu0 %v625
        %v1210 = vpop.f32.mrb[0].mxu0
        %v1211 = vadd.f32 %v417, %v1210
        %v1212 = vpop.f32.mrb[0].mxu0
        %1213 = vmatprep.mubr.f32.mxu0 0.0
        %1214 = vmatmul.mubr.f32.gmra.mrb[0].mxu0 %v628
        %v1215 = vpop.f32.mrb[0].mxu0
        %v1216 = vadd.f32 %v417, %v1215
        %v1217 = vpop.f32.mrb[0].mxu0
        %1218 = vmatprep.mubr.f32.mxu0 0.0
        %1219 = vmatmul.mubr.f32.gmra.mrb[0].mxu0 %v631
        %v1220 = vpop.f32.mrb[0].mxu0
        %v1221 = vadd.f32 %v417, %v1220
        %v1222 = vpop.f32.mrb[0].mxu0
        %1223 = vmatprep.mubr.f32.mxu0 0.0
        %1224 = vmatmul.mubr.f32.gmra.mrb[0].mxu0 %v634
        %v1225 = vpop.f32.mrb[0].mxu0
        %v1226 = vadd.f32 %v417, %v1225
        %v1227 = vpop.f32.mrb[0].mxu0
        %1228 = vmatprep.mubr.f32.mxu0 0.0
        %1229 = vmatmul.mubr.f32.gmra.mrb[0].mxu0 %v637
        %v1230 = vpop.f32.mrb[0].mxu0
        %v1231 = vadd.f32 %v417, %v1230
        %v1232 = vpop.f32.mrb[0].mxu0
        %1233 = vmatprep.mubr.f32.mxu0 0.0
        %1234 = vmatmul.mubr.f32.gmra.mrb[0].mxu0 %v640
        %v1235 = vpop.f32.mrb[0].mxu0
        %v1236 = vadd.f32 %v417, %v1235
        %v1237 = vpop.f32.mrb[0].mxu0
        %1238 = vmatprep.mubr.f32.mxu0 0.0
        %1239 = vmatmul.mubr.f32.gmra.mrb[0].mxu0 %v643
        %v1240 = vpop.f32.mrb[0].mxu0
        %v1241 = vadd.f32 %v417, %v1240
        %v1242 = vpop.f32.mrb[0].mxu0
        %1243 = vmatprep.mubr.f32.mxu0 0.0
        %1244 = vmatmul.mubr.f32.gmra.mrb[0].mxu0 %v646
        %v1245 = vpop.f32.mrb[0].mxu0
        %v1246 = vadd.f32 %v417, %v1245
        %v1247 = vpop.f32.mrb[0].mxu0
        %1248 = vmatprep.mubr.f32.mxu0 0.0
        %1249 = vmatmul.mubr.f32.gmra.mrb[0].mxu0 %v649
        %v1250 = vpop.f32.mrb[0].mxu0
        %v1251 = vadd.f32 %v417, %v1250
        %v1252 = vpop.f32.mrb[0].mxu0
        %1253 = vmatprep.mubr.f32.mxu0 0.0
        %1254 = vmatmul.mubr.f32.gmra.mrb[0].mxu0 %v652
        %v1255 = vpop.f32.mrb[0].mxu0
        %v1256 = vadd.f32 %v417, %v1255
        %v1257 = vpop.f32.mrb[0].mxu0
        %1258 = vmatprep.mubr.f32.mxu0 0.0
        %1259 = vmatmul.mubr.f32.gmra.mrb[0].mxu0 %v655
        %v1260 = vpop.f32.mrb[0].mxu0
        %v1261 = vadd.f32 %v417, %v1260
        %v1262 = vpop.f32.mrb[0].mxu0
        %1263 = vmatprep.mubr.f32.mxu0 0.0
        %1264 = vmatmul.mubr.f32.gmra.mrb[0].mxu0 %v658
        %v1265 = vpop.f32.mrb[0].mxu0
        %v1266 = vadd.f32 %v417, %v1265
        %v1267 = vpop.f32.mrb[0].mxu0
        %1268 = vmatprep.mubr.f32.mxu0 0.0
        %1269 = vmatmul.mubr.f32.gmra.mrb[0].mxu0 %v661
        %v1270 = vpop.f32.mrb[0].mxu0
        %v1271 = vadd.f32 %v417, %v1270
        %v1272 = vpop.f32.mrb[0].mxu0
        %1273 = vmatprep.mubr.f32.mxu0 0.0
        %1274 = vmatmul.mubr.f32.gmra.mrb[0].mxu0 %v664
        %v1275 = vpop.f32.mrb[0].mxu0
        %v1276 = vadd.f32 %v417, %v1275
        %v1277 = vpop.f32.mrb[0].mxu0
        %1278 = vmatprep.mubr.f32.mxu0 0.0
        %1279 = vmatmul.mubr.f32.gmra.mrb[0].mxu0 %v667
        %v1280 = vpop.f32.mrb[0].mxu0
        %v1281 = vadd.f32 %v417, %v1280
        %v1282 = vpop.f32.mrb[0].mxu0
        %1283 = vmatprep.mubr.f32.mxu0 0.0
        %1284 = vmatmul.mubr.f32.gmra.mrb[0].mxu0 %v670
        %v1285 = vpop.f32.mrb[0].mxu0
        %v1286 = vadd.f32 %v417, %v1285
        %v1287 = vpop.f32.mrb[0].mxu0
        %1288 = vmatprep.mubr.f32.mxu0 0.0
        %1289 = vmatmul.mubr.f32.gmra.mrb[0].mxu0 %v673
        %v1290 = vpop.f32.mrb[0].mxu0
        %v1291 = vadd.f32 %v417, %v1290
        %v1292 = vpop.f32.mrb[0].mxu0
        %1293 = vmatprep.mubr.f32.mxu0 0.0
        %1294 = vmatmul.mubr.f32.gmra.mrb[0].mxu0 %v676
        %v1295 = vpop.f32.mrb[0].mxu0
        %v1296 = vadd.f32 %v417, %v1295
        %v1297 = vpop.f32.mrb[0].mxu0
        %1298 = vmatprep.mubr.f32.mxu0 0.0
        %1299 = vmatmul.mubr.f32.gmra.mrb[0].mxu0 %v679
        %v1300 = vpop.f32.mrb[0].mxu0
        %v1301 = vadd.f32 %v417, %v1300
        %v1302 = vpop.f32.mrb[0].mxu0
        %1303 = vmatprep.mubr.f32.mxu0 0.0
        %1304 = vmatmul.mubr.f32.gmra.mrb[0].mxu0 %v682
        %v1305 = vpop.f32.mrb[0].mxu0
        %v1306 = vadd.f32 %v417, %v1305
        %v1307 = vpop.f32.mrb[0].mxu0
        %1308 = vmatprep.mubr.f32.mxu0 0.0
        %1309 = vmatmul.mubr.f32.gmra.mrb[0].mxu0 %v685
        %v1310 = vpop.f32.mrb[0].mxu0
        %v1311 = vadd.f32 %v417, %v1310
        %v1312 = vpop.f32.mrb[0].mxu0
        %1313 = vmatprep.mubr.f32.mxu0 0.0
        %1314 = vmatmul.mubr.f32.gmra.mrb[0].mxu0 %v688
        %v1315 = vpop.f32.mrb[0].mxu0
        %v1316 = vadd.f32 %v417, %v1315
        %v1317 = vpop.f32.mrb[0].mxu0
        %1318 = vmatprep.mubr.f32.mxu0 0.0
        %1319 = vmatmul.mubr.f32.gmra.mrb[0].mxu0 %v691
        %v1320 = vpop.f32.mrb[0].mxu0
        %v1321 = vadd.f32 %v417, %v1320
        %v1322 = vpop.f32.mrb[0].mxu0
        %1323 = vmatprep.mubr.f32.mxu0 0.0
        %1324 = vmatmul.mubr.f32.gmra.mrb[0].mxu0 %v694
        %v1325 = vpop.f32.mrb[0].mxu0
        %v1326 = vadd.f32 %v417, %v1325
        %v1327 = vpop.f32.mrb[0].mxu0
        %1328 = vmatprep.mubr.f32.mxu0 0.0
        %1329 = vmatmul.mubr.f32.gmra.mrb[0].mxu0 %v697
        %v1330 = vpop.f32.mrb[0].mxu0
        %v1331 = vadd.f32 %v417, %v1330
        %v1332 = vpop.f32.mrb[0].mxu0
        %1333 = vmatprep.mubr.f32.mxu0 0.0
        %1334 = vmatmul.mubr.f32.gmra.mrb[0].mxu0 %v700
        %v1335 = vpop.f32.mrb[0].mxu0
        %v1336 = vadd.f32 %v417, %v1335
        %v1337 = vpop.f32.mrb[0].mxu0
        %1338 = vmatprep.mubr.f32.mxu0 0.0
        %1339 = vmatmul.mubr.f32.gmra.mrb[0].mxu0 %v703
        %v1340 = vpop.f32.mrb[0].mxu0
        %v1341 = vadd.f32 %v417, %v1340
        %v1342 = vpop.f32.mrb[0].mxu0
        %1343 = vmatprep.mubr.f32.mxu0 0.0
        %1344 = vmatmul.mubr.f32.gmra.mrb[0].mxu0 %v706
        %v1345 = vpop.f32.mrb[0].mxu0
        %v1346 = vadd.f32 %v417, %v1345
        %v1347 = vpop.f32.mrb[0].mxu0
        %1348 = vmatprep.mubr.f32.mxu0 0.0
        %1349 = vmatmul.mubr.f32.gmra.mrb[0].mxu0 %v709
        %v1350 = vpop.f32.mrb[0].mxu0
        %v1351 = vadd.f32 %v417, %v1350
        %v1352 = vpop.f32.mrb[0].mxu0
        %1353 = vmatprep.mubr.f32.mxu0 0.0
        %1354 = vmatmul.mubr.f32.gmra.mrb[0].mxu0 %v712
        %v1355 = vpop.f32.mrb[0].mxu0
        %v1356 = vadd.f32 %v417, %v1355
        %v1357 = vpop.f32.mrb[0].mxu0
        %1358 = vmatprep.mubr.f32.mxu0 0.0
        %1359 = vmatmul.mubr.f32.gmra.mrb[0].mxu0 %v715
        %v1360 = vpop.f32.mrb[0].mxu0
        %v1361 = vadd.f32 %v417, %v1360
        %v1362 = vpop.f32.mrb[0].mxu0
        %1363 = vmatprep.mubr.f32.mxu0 0.0
        %1364 = vmatmul.mubr.f32.gmra.mrb[0].mxu0 %v718
        %v1365 = vpop.f32.mrb[0].mxu0
        %v1366 = vadd.f32 %v417, %v1365
        %v1367 = vpop.f32.mrb[0].mxu0
        %1368 = vmatprep.mubr.f32.mxu0 0.0
        %1369 = vmatmul.mubr.f32.gmra.mrb[0].mxu0 %v721
        %v1370 = vpop.f32.mrb[0].mxu0
        %v1371 = vadd.f32 %v417, %v1370
        %v1372 = vpop.f32.mrb[0].mxu0
        %1373 = vmatprep.mubr.f32.mxu0 0.0
        %1374 = vmatmul.mubr.f32.gmra.mrb[0].mxu0 %v724
        %v1375 = vpop.f32.mrb[0].mxu0
        %v1376 = vadd.f32 %v417, %v1375
        %v1377 = vpop.f32.mrb[0].mxu0
        %1378 = vmatprep.mubr.f32.mxu0 0.0
        %1379 = vmatmul.mubr.f32.gmra.mrb[0].mxu0 %v727
        %v1380 = vpop.f32.mrb[0].mxu0
        %v1381 = vadd.f32 %v417, %v1380
        %v1382 = vpop.f32.mrb[0].mxu0
        %1383 = vmatprep.mubr.f32.mxu0 0.0
        %1384 = vmatmul.mubr.f32.gmra.mrb[0].mxu0 %v730
        %v1385 = vpop.f32.mrb[0].mxu0
        %v1386 = vadd.f32 %v417, %v1385
        %v1387 = vpop.f32.mrb[0].mxu0
        %1388 = vmatprep.mubr.f32.mxu0 0.0
        %1389 = vmatmul.mubr.f32.gmra.mrb[0].mxu0 %v733
        %v1390 = vpop.f32.mrb[0].mxu0
        %v1391 = vadd.f32 %v417, %v1390
        %v1392 = vpop.f32.mrb[0].mxu0
        %1393 = vmatprep.mubr.f32.mxu0 0.0
        %1394 = vmatmul.mubr.f32.gmra.mrb[0].mxu0 %v736
        %v1395 = vpop.f32.mrb[0].mxu0
        %v1396 = vadd.f32 %v417, %v1395
        %v1397 = vpop.f32.mrb[0].mxu0
        %1398 = vmatprep.mubr.f32.mxu0 0.0
        %1399 = vmatmul.mubr.f32.gmra.mrb[0].mxu0 %v739
        %v1400 = vpop.f32.mrb[0].mxu0
        %v1401 = vadd.f32 %v417, %v1400
        %v1402 = vpop.f32.mrb[0].mxu0
        %1403 = vmatprep.mubr.f32.mxu0 0.0
        %1404 = vmatmul.mubr.f32.gmra.mrb[0].mxu0 %v742
        %v1405 = vpop.f32.mrb[0].mxu0
        %v1406 = vadd.f32 %v417, %v1405
        %v1407 = vpop.f32.mrb[0].mxu0
        %1408 = vmatprep.mubr.f32.mxu0 0.0
        %1409 = vmatmul.mubr.f32.gmra.mrb[0].mxu0 %v745
        %v1410 = vpop.f32.mrb[0].mxu0
        %v1411 = vadd.f32 %v417, %v1410
        %v1412 = vpop.f32.mrb[0].mxu0
        %1413 = vmatprep.mubr.f32.mxu0 0.0
        %1414 = vmatmul.mubr.f32.gmra.mrb[0].mxu0 %v748
        %v1415 = vpop.f32.mrb[0].mxu0
        %v1416 = vadd.f32 %v417, %v1415
        %v1417 = vpop.f32.mrb[0].mxu0
        %1418 = vmatprep.mubr.f32.mxu0 0.0
        %1419 = vmatmul.mubr.f32.gmra.mrb[0].mxu0 %v751
        %v1420 = vpop.f32.mrb[0].mxu0
        %v1421 = vadd.f32 %v417, %v1420
        %v1422 = vpop.f32.mrb[0].mxu0
        %1423 = vmatprep.mubr.f32.mxu0 0.0
        %1424 = vmatmul.mubr.f32.gmra.mrb[0].mxu0 %v754
        %v1425 = vpop.f32.mrb[0].mxu0
        %v1426 = vadd.f32 %v417, %v1425
        %v1427 = vpop.f32.mrb[0].mxu0
        %1428 = vmatprep.mubr.f32.mxu0 0.0
        %1429 = vmatmul.mubr.f32.gmra.mrb[0].mxu0 %v757
        %v1430 = vpop.f32.mrb[0].mxu0
        %v1431 = vadd.f32 %v417, %v1430
        %v1432 = vpop.f32.mrb[0].mxu0
        %1433 = vmatprep.mubr.f32.mxu0 0.0
        %1434 = vmatmul.mubr.f32.gmra.mrb[0].mxu0 %v760
        %v1435 = vpop.f32.mrb[0].mxu0
        %v1436 = vadd.f32 %v417, %v1435
        %v1437 = vpop.f32.mrb[0].mxu0
        %1438 = vmatprep.mubr.f32.mxu0 0.0
        %1439 = vmatmul.mubr.f32.gmra.mrb[0].mxu0 %v763
        %v1440 = vpop.f32.mrb[0].mxu0
        %v1441 = vadd.f32 %v417, %v1440
        %v1442 = vpop.f32.mrb[0].mxu0
        %1443 = vmatprep.mubr.f32.mxu0 0.0
        %1444 = vmatmul.mubr.f32.gmra.mrb[0].mxu0 %v766
        %v1445 = vpop.f32.mrb[0].mxu0
        %v1446 = vadd.f32 %v417, %v1445
        %v1447 = vpop.f32.mrb[0].mxu0
        %1448 = vmatprep.mubr.f32.mxu0 0.0
        %1449 = vmatmul.mubr.f32.gmra.mrb[0].mxu0 %v769
        %v1450 = vpop.f32.mrb[0].mxu0
        %v1451 = vadd.f32 %v417, %v1450
        %v1452 = vpop.f32.mrb[0].mxu0
        %1453 = vmatprep.mubr.f32.mxu0 0.0
        %1454 = vmatmul.mubr.f32.gmra.mrb[0].mxu0 %v772
        %v1455 = vpop.f32.mrb[0].mxu0
        %v1456 = vadd.f32 %v417, %v1455
        %v1457 = vpop.f32.mrb[0].mxu0
        %1458 = vmatprep.mubr.f32.mxu0 0.0
        %1459 = vmatmul.mubr.f32.gmra.mrb[0].mxu0 %v775
        %v1460 = vpop.f32.mrb[0].mxu0
        %v1461 = vadd.f32 %v417, %v1460
        %v1462 = vpop.f32.mrb[0].mxu0
        %1463 = vmatprep.mubr.f32.mxu0 0.0
        %1464 = vmatmul.mubr.f32.gmra.mrb[0].mxu0 %v778
        %v1465 = vpop.f32.mrb[0].mxu0
        %v1466 = vadd.f32 %v417, %v1465
        %v1467 = vpop.f32.mrb[0].mxu0
        %1468 = vmatprep.mubr.f32.mxu0 0.0
        %1469 = vmatmul.mubr.f32.gmra.mrb[0].mxu0 %v781
        %v1470 = vpop.f32.mrb[0].mxu0
        %v1471 = vadd.f32 %v417, %v1470
        %v1472 = vpop.f32.mrb[0].mxu0
        %1473 = vmatprep.mubr.f32.mxu0 0.0
        %1474 = vmatmul.mubr.f32.gmra.mrb[0].mxu0 %v784
        %v1475 = vpop.f32.mrb[0].mxu0
        %v1476 = vadd.f32 %v417, %v1475
        %v1477 = vpop.f32.mrb[0].mxu0
        %1478 = vmatprep.mubr.f32.mxu0 0.0
        %1479 = vmatmul.mubr.f32.gmra.mrb[0].mxu0 %v787
        %v1480 = vpop.f32.mrb[0].mxu0
        %v1481 = vadd.f32 %v417, %v1480
        %v1482 = vpop.f32.mrb[0].mxu0
        %1483 = vmatprep.mubr.f32.mxu0 0.0
        %1484 = vmatmul.mubr.f32.gmra.mrb[0].mxu0 %v790
        %v1485 = vpop.f32.mrb[0].mxu0
        %v1486 = vadd.f32 %v417, %v1485
        %v1487 = vpop.f32.mrb[0].mxu0
        %1488 = vmatprep.mubr.f32.mxu0 0.0
        %1489 = vmatmul.mubr.f32.gmra.mrb[0].mxu0 %v793
        %v1490 = vpop.f32.mrb[0].mxu0
        %v1491 = vadd.f32 %v417, %v1490
        %v1492 = vpop.f32.mrb[0].mxu0
        %1493 = vmatprep.mubr.f32.mxu0 0.0
        %1494 = vmatmul.mubr.f32.gmra.mrb[0].mxu0 %v796
        %v1495 = vpop.f32.mrb[0].mxu0
        %v1496 = vadd.f32 %v417, %v1495
        %v1497 = vpop.f32.mrb[0].mxu0
        %1498 = vmatprep.mubr.f32.mxu0 0.0
        %1499 = vmatmul.mubr.f32.gmra.mrb[0].mxu0 %v799
        %v1500 = vpop.f32.mrb[0].mxu0
        %v1501 = vadd.f32 %v417, %v1500
        %v1502 = vpop.f32.mrb[0].mxu0
        %1503 = vmatprep.mubr.f32.mxu0 0.0
        %1504 = vmatmul.mubr.f32.gmra.mrb[0].mxu0 %v802
        %v1505 = vpop.f32.mrb[0].mxu0
        %v1506 = vadd.f32 %v417, %v1505
        %v1507 = vpop.f32.mrb[0].mxu0
        %1508 = vdwg.mxu0
        %v1509 = vmax.f32 %v871, 0.0
        %v1510 = vmax.f32 %v876, 0.0
        %v1511 = vmax.f32 %v881, 0.0
        %v1512 = vmax.f32 %v886, 0.0
        %v1513 = vmax.f32 %v891, 0.0
        %v1514 = vmax.f32 %v896, 0.0
        %v1515 = vmax.f32 %v901, 0.0
        %v1516 = vmax.f32 %v906, 0.0
        %v1517 = vmax.f32 %v911, 0.0
        %v1518 = vmax.f32 %v916, 0.0
        %v1519 = vmax.f32 %v921, 0.0
        %v1520 = vmax.f32 %v926, 0.0
        %v1521 = vmax.f32 %v931, 0.0
        %v1522 = vmax.f32 %v936, 0.0
        %v1523 = vmax.f32 %v941, 0.0
        %v1524 = vmax.f32 %v946, 0.0
        %v1525 = vmax.f32 %v951, 0.0
        %v1526 = vmax.f32 %v956, 0.0
        %v1527 = vmax.f32 %v961, 0.0
        %v1528 = vmax.f32 %v966, 0.0
        %v1529 = vmax.f32 %v971, 0.0
        %v1530 = vmax.f32 %v976, 0.0
        %v1531 = vmax.f32 %v981, 0.0
        %v1532 = vmax.f32 %v986, 0.0
        %v1533 = vmax.f32 %v991, 0.0
        %v1534 = vmax.f32 %v996, 0.0
        %v1535 = vmax.f32 %v1001, 0.0
        %v1536 = vmax.f32 %v1006, 0.0
        %v1537 = vmax.f32 %v1011, 0.0
        %v1538 = vmax.f32 %v1016, 0.0
        %v1539 = vmax.f32 %v1021, 0.0
        %v1540 = vmax.f32 %v1026, 0.0
        %v1541 = vmax.f32 %v1031, 0.0
        %v1542 = vmax.f32 %v1036, 0.0
        %v1543 = vmax.f32 %v1041, 0.0
        %v1544 = vmax.f32 %v1046, 0.0
        %v1545 = vmax.f32 %v1051, 0.0
        %v1546 = vmax.f32 %v1056, 0.0
        %v1547 = vmax.f32 %v1061, 0.0
        %v1548 = vmax.f32 %v1066, 0.0
        %v1549 = vmax.f32 %v1071, 0.0
        %v1550 = vmax.f32 %v1076, 0.0
        %v1551 = vmax.f32 %v1081, 0.0
        %v1552 = vmax.f32 %v1086, 0.0
        %v1553 = vmax.f32 %v1091, 0.0
        %v1554 = vmax.f32 %v1096, 0.0
        %v1555 = vmax.f32 %v1101, 0.0
        %v1556 = vmax.f32 %v1106, 0.0
        %v1557 = vmax.f32 %v1111, 0.0
        %v1558 = vmax.f32 %v1116, 0.0
        %v1559 = vmax.f32 %v1121, 0.0
        %v1560 = vmax.f32 %v1126, 0.0
        %v1561 = vmax.f32 %v1131, 0.0
        %v1562 = vmax.f32 %v1136, 0.0
        %v1563 = vmax.f32 %v1141, 0.0
        %v1564 = vmax.f32 %v1146, 0.0
        %v1565 = vmax.f32 %v1151, 0.0
        %v1566 = vmax.f32 %v1156, 0.0
        %v1567 = vmax.f32 %v1161, 0.0
        %v1568 = vmax.f32 %v1166, 0.0
        %v1569 = vmax.f32 %v1171, 0.0
        %v1570 = vmax.f32 %v1176, 0.0
        %v1571 = vmax.f32 %v1181, 0.0
        %v1572 = vmax.f32 %v1186, 0.0
        %v1573 = vmax.f32 %v1191, 0.0
        %v1574 = vmax.f32 %v1196, 0.0
        %v1575 = vmax.f32 %v1201, 0.0
        %v1576 = vmax.f32 %v1206, 0.0
        %v1577 = vmax.f32 %v1211, 0.0
        %v1578 = vmax.f32 %v1216, 0.0
        %v1579 = vmax.f32 %v1221, 0.0
        %v1580 = vmax.f32 %v1226, 0.0
        %v1581 = vmax.f32 %v1231, 0.0
        %v1582 = vmax.f32 %v1236, 0.0
        %v1583 = vmax.f32 %v1241, 0.0
        %v1584 = vmax.f32 %v1246, 0.0
        %v1585 = vmax.f32 %v1251, 0.0
        %v1586 = vmax.f32 %v1256, 0.0
        %v1587 = vmax.f32 %v1261, 0.0
        %v1588 = vmax.f32 %v1266, 0.0
        %v1589 = vmax.f32 %v1271, 0.0
        %v1590 = vmax.f32 %v1276, 0.0
        %v1591 = vmax.f32 %v1281, 0.0
        %v1592 = vmax.f32 %v1286, 0.0
        %v1593 = vmax.f32 %v1291, 0.0
        %v1594 = vmax.f32 %v1296, 0.0
        %v1595 = vmax.f32 %v1301, 0.0
        %v1596 = vmax.f32 %v1306, 0.0
        %v1597 = vmax.f32 %v1311, 0.0
        %v1598 = vmax.f32 %v1316, 0.0
        %v1599 = vmax.f32 %v1321, 0.0
        %v1600 = vmax.f32 %v1326, 0.0
        %v1601 = vmax.f32 %v1331, 0.0
        %v1602 = vmax.f32 %v1336, 0.0
        %v1603 = vmax.f32 %v1341, 0.0
        %v1604 = vmax.f32 %v1346, 0.0
        %v1605 = vmax.f32 %v1351, 0.0
        %v1606 = vmax.f32 %v1356, 0.0
        %v1607 = vmax.f32 %v1361, 0.0
        %v1608 = vmax.f32 %v1366, 0.0
        %v1609 = vmax.f32 %v1371, 0.0
        %v1610 = vmax.f32 %v1376, 0.0
        %v1611 = vmax.f32 %v1381, 0.0
        %v1612 = vmax.f32 %v1386, 0.0
        %v1613 = vmax.f32 %v1391, 0.0
        %v1614 = vmax.f32 %v1396, 0.0
        %v1615 = vmax.f32 %v1401, 0.0
        %v1616 = vmax.f32 %v1406, 0.0
        %v1617 = vmax.f32 %v1411, 0.0
        %v1618 = vmax.f32 %v1416, 0.0
        %v1619 = vmax.f32 %v1421, 0.0
        %v1620 = vmax.f32 %v1426, 0.0
        %v1621 = vmax.f32 %v1431, 0.0
        %v1622 = vmax.f32 %v1436, 0.0
        %v1623 = vmax.f32 %v1441, 0.0
        %v1624 = vmax.f32 %v1446, 0.0
        %v1625 = vmax.f32 %v1451, 0.0
        %v1626 = vmax.f32 %v1456, 0.0
        %v1627 = vmax.f32 %v1461, 0.0
        %v1628 = vmax.f32 %v1466, 0.0
        %v1629 = vmax.f32 %v1471, 0.0
        %v1630 = vmax.f32 %v1476, 0.0
        %v1631 = vmax.f32 %v1481, 0.0
        %v1632 = vmax.f32 %v1486, 0.0
        %v1633 = vmax.f32 %v1491, 0.0
        %v1634 = vmax.f32 %v1496, 0.0
        %v1635 = vmax.f32 %v1501, 0.0
        %v1636 = vmax.f32 %v1506, 0.0
        %v1637 = vld [vmem:[%s3] sm:$0xff]
        %v1638 = vld [vmem:[%s3 + $0x8] sm:$0xff]
        %v1639 = vld [vmem:[%s3 + $0x10] sm:$0xff]
        %v1640 = vld [vmem:[%s3 + $0x18] sm:$0xff]
        %v1641 = vld [vmem:[%s3 + $0x20] sm:$0xff]
        %v1642 = vld [vmem:[%s3 + $0x28] sm:$0xff]
        %v1643 = vld [vmem:[%s3 + $0x30] sm:$0xff]
        %v1644 = vld [vmem:[%s3 + $0x38] sm:$0xff]
        %v1645 = vld [vmem:[%s4] sm:$0x1]
        %v1647 = vlaneseq
        %v1648 = vshrl.u32 %v1647, 7
        %v1649 = vsub.s32 0, %v1648
        %v1650 = vrot.slane %v1645, %v1649
        %vm1652 = vcmask 523264
        %v1654 = vsel %vm1652, %v1509, 0
        %v1657 = vsel %vm1652, %v1510, 0
        %v1660 = vsel %vm1652, %v1511, 0
        %v1663 = vsel %vm1652, %v1512, 0
        %v1666 = vsel %vm1652, %v1513, 0
        %v1669 = vsel %vm1652, %v1514, 0
        %v1672 = vsel %vm1652, %v1515, 0
        %v1675 = vsel %vm1652, %v1516, 0
        %v1678 = vsel %vm1652, %v1517, 0
        %v1681 = vsel %vm1652, %v1518, 0
        %v1684 = vsel %vm1652, %v1519, 0
        %v1687 = vsel %vm1652, %v1520, 0
        %v1690 = vsel %vm1652, %v1521, 0
        %v1693 = vsel %vm1652, %v1522, 0
        %v1696 = vsel %vm1652, %v1523, 0
        %v1699 = vsel %vm1652, %v1524, 0
        %v1702 = vsel %vm1652, %v1525, 0
        %v1705 = vsel %vm1652, %v1526, 0
        %v1708 = vsel %vm1652, %v1527, 0
        %v1711 = vsel %vm1652, %v1528, 0
        %v1714 = vsel %vm1652, %v1529, 0
        %v1717 = vsel %vm1652, %v1530, 0
        %v1720 = vsel %vm1652, %v1531, 0
        %v1723 = vsel %vm1652, %v1532, 0
        %v1726 = vsel %vm1652, %v1533, 0
        %v1729 = vsel %vm1652, %v1534, 0
        %v1732 = vsel %vm1652, %v1535, 0
        %v1735 = vsel %vm1652, %v1536, 0
        %v1738 = vsel %vm1652, %v1537, 0
        %v1741 = vsel %vm1652, %v1538, 0
        %v1744 = vsel %vm1652, %v1539, 0
        %v1747 = vsel %vm1652, %v1540, 0
        %v1750 = vsel %vm1652, %v1541, 0
        %v1753 = vsel %vm1652, %v1542, 0
        %v1756 = vsel %vm1652, %v1543, 0
        %v1759 = vsel %vm1652, %v1544, 0
        %v1762 = vsel %vm1652, %v1545, 0
        %v1765 = vsel %vm1652, %v1546, 0
        %v1768 = vsel %vm1652, %v1547, 0
        %v1771 = vsel %vm1652, %v1548, 0
        %v1774 = vsel %vm1652, %v1549, 0
        %v1777 = vsel %vm1652, %v1550, 0
        %v1780 = vsel %vm1652, %v1551, 0
        %v1783 = vsel %vm1652, %v1552, 0
        %v1786 = vsel %vm1652, %v1553, 0
        %v1789 = vsel %vm1652, %v1554, 0
        %v1792 = vsel %vm1652, %v1555, 0
        %v1795 = vsel %vm1652, %v1556, 0
        %v1798 = vsel %vm1652, %v1557, 0
        %v1801 = vsel %vm1652, %v1558, 0
        %v1804 = vsel %vm1652, %v1559, 0
        %v1807 = vsel %vm1652, %v1560, 0
        %v1810 = vsel %vm1652, %v1561, 0
        %v1813 = vsel %vm1652, %v1562, 0
        %v1816 = vsel %vm1652, %v1563, 0
        %v1819 = vsel %vm1652, %v1564, 0
        %v1822 = vsel %vm1652, %v1565, 0
        %v1825 = vsel %vm1652, %v1566, 0
        %v1828 = vsel %vm1652, %v1567, 0
        %v1831 = vsel %vm1652, %v1568, 0
        %v1834 = vsel %vm1652, %v1569, 0
        %v1837 = vsel %vm1652, %v1570, 0
        %v1840 = vsel %vm1652, %v1571, 0
        %v1843 = vsel %vm1652, %v1572, 0
        %v1846 = vsel %vm1652, %v1573, 0
        %v1849 = vsel %vm1652, %v1574, 0
        %v1852 = vsel %vm1652, %v1575, 0
        %v1855 = vsel %vm1652, %v1576, 0
        %v1858 = vsel %vm1652, %v1577, 0
        %v1861 = vsel %vm1652, %v1578, 0
        %v1864 = vsel %vm1652, %v1579, 0
        %v1867 = vsel %vm1652, %v1580, 0
        %v1870 = vsel %vm1652, %v1581, 0
        %v1873 = vsel %vm1652, %v1582, 0
        %v1876 = vsel %vm1652, %v1583, 0
        %v1879 = vsel %vm1652, %v1584, 0
        %v1882 = vsel %vm1652, %v1585, 0
        %v1885 = vsel %vm1652, %v1586, 0
        %v1888 = vsel %vm1652, %v1587, 0
        %v1891 = vsel %vm1652, %v1588, 0
        %v1894 = vsel %vm1652, %v1589, 0
        %v1897 = vsel %vm1652, %v1590, 0
        %v1900 = vsel %vm1652, %v1591, 0
        %v1903 = vsel %vm1652, %v1592, 0
        %v1906 = vsel %vm1652, %v1593, 0
        %v1909 = vsel %vm1652, %v1594, 0
        %v1912 = vsel %vm1652, %v1595, 0
        %v1915 = vsel %vm1652, %v1596, 0
        %v1918 = vsel %vm1652, %v1597, 0
        %v1921 = vsel %vm1652, %v1598, 0
        %v1924 = vsel %vm1652, %v1599, 0
        %v1927 = vsel %vm1652, %v1600, 0
        %v1930 = vsel %vm1652, %v1601, 0
        %v1933 = vsel %vm1652, %v1602, 0
        %v1936 = vsel %vm1652, %v1603, 0
        %v1939 = vsel %vm1652, %v1604, 0
        %v1942 = vsel %vm1652, %v1605, 0
        %v1945 = vsel %vm1652, %v1606, 0
        %v1948 = vsel %vm1652, %v1607, 0
        %v1951 = vsel %vm1652, %v1608, 0
        %v1954 = vsel %vm1652, %v1609, 0
        %v1957 = vsel %vm1652, %v1610, 0
        %v1960 = vsel %vm1652, %v1611, 0
        %v1963 = vsel %vm1652, %v1612, 0
        %v1966 = vsel %vm1652, %v1613, 0
        %v1969 = vsel %vm1652, %v1614, 0
        %v1972 = vsel %vm1652, %v1615, 0
        %v1975 = vsel %vm1652, %v1616, 0
        %v1978 = vsel %vm1652, %v1617, 0
        %v1981 = vsel %vm1652, %v1618, 0
        %v1984 = vsel %vm1652, %v1619, 0
        %v1987 = vsel %vm1652, %v1620, 0
        %v1990 = vsel %vm1652, %v1621, 0
        %v1993 = vsel %vm1652, %v1622, 0
        %v1996 = vsel %vm1652, %v1623, 0
        %v1999 = vsel %vm1652, %v1624, 0
        %v2002 = vsel %vm1652, %v1625, 0
        %v2005 = vsel %vm1652, %v1626, 0
        %v2008 = vsel %vm1652, %v1627, 0
        %v2011 = vsel %vm1652, %v1628, 0
        %v2014 = vsel %vm1652, %v1629, 0
        %v2017 = vsel %vm1652, %v1630, 0
        %v2020 = vsel %vm1652, %v1631, 0
        %v2023 = vsel %vm1652, %v1632, 0
        %v2026 = vsel %vm1652, %v1633, 0
        %v2029 = vsel %vm1652, %v1634, 0
        %v2032 = vsel %vm1652, %v1635, 0
        %v2035 = vsel %vm1652, %v1636, 0
        %2037 = vmatprep.subr.mxu0 0.0
        %2038 = vmatpush1.msra.mxu0 %v1637
        %2039 = vmatprep.subr.mxu0 0.0
        %2040 = vmatpush1.msra.mxu0 %v1638
        %2041 = vmatprep.subr.mxu0 0.0
        %2042 = vmatpush1.msra.mxu0 %v1639
        %2043 = vmatprep.subr.mxu0 0.0
        %2044 = vmatpush1.msra.mxu0 %v1640
        %2045 = vmatprep.subr.mxu0 0.0
        %2046 = vmatpush1.msra.mxu0 %v1641
        %2047 = vmatprep.subr.mxu0 0.0
        %2048 = vmatpush1.msra.mxu0 %v1642
        %2049 = vmatprep.subr.mxu0 0.0
        %2050 = vmatpush1.msra.mxu0 %v1643
        %2051 = vmatprep.subr.mxu0 0.0
        %2052 = vmatpush1.msra.mxu0 %v1644
        %2053 = vmatprep.subr.mxu0 0.0
        %2054 = vmatpush1.msra.mxu0 0.0
        %2055 = vmatprep.subr.mxu0 0.0
        %2056 = vmatpush1.msra.mxu0 0.0
        %2057 = vmatprep.subr.mxu0 0.0
        %2058 = vmatpush1.msra.mxu0 0.0
        %2059 = vmatprep.subr.mxu0 0.0
        %2060 = vmatpush1.msra.mxu0 0.0
        %2061 = vmatprep.subr.mxu0 0.0
        %2062 = vmatpush1.msra.mxu0 0.0
        %2063 = vmatprep.subr.mxu0 0.0
        %2064 = vmatpush1.msra.mxu0 0.0
        %2065 = vmatprep.subr.mxu0 0.0
        %2066 = vmatpush1.msra.mxu0 0.0
        %2067 = vmatprep.subr.mxu0 0.0
        %2068 = vmatpush1.msra.mxu0 0.0
        %2069 = vmatprep.subr.mxu0 0.0
        %2070 = vmatpush1.msra.mxu0 0.0
        %2071 = vmatprep.subr.mxu0 0.0
        %2072 = vmatpush1.msra.mxu0 0.0
        %2073 = vmatprep.subr.mxu0 0.0
        %2074 = vmatpush1.msra.mxu0 0.0
        %2075 = vmatprep.subr.mxu0 0.0
        %2076 = vmatpush1.msra.mxu0 0.0
        %2077 = vmatprep.subr.mxu0 0.0
        %2078 = vmatpush1.msra.mxu0 0.0
        %2079 = vmatprep.subr.mxu0 0.0
        %2080 = vmatpush1.msra.mxu0 0.0
        %2081 = vmatprep.subr.mxu0 0.0
        %2082 = vmatpush1.msra.mxu0 0.0
        %2083 = vmatprep.subr.mxu0 0.0
        %2084 = vmatpush1.msra.mxu0 0.0
        %2085 = vmatprep.subr.mxu0 0.0
        %2086 = vmatpush1.msra.mxu0 0.0
        %2087 = vmatprep.subr.mxu0 0.0
        %2088 = vmatpush1.msra.mxu0 0.0
        %2089 = vmatprep.subr.mxu0 0.0
        %2090 = vmatpush1.msra.mxu0 0.0
        %2091 = vmatprep.subr.mxu0 0.0
        %2092 = vmatpush1.msra.mxu0 0.0
        %2093 = vmatprep.subr.mxu0 0.0
        %2094 = vmatpush1.msra.mxu0 0.0
        %2095 = vmatprep.subr.mxu0 0.0
        %2096 = vmatpush1.msra.mxu0 0.0
        %2097 = vmatprep.subr.mxu0 0.0
        %2098 = vmatpush1.msra.mxu0 0.0
        %2099 = vmatprep.subr.mxu0 0.0
        %2100 = vmatpush1.msra.mxu0 0.0
        %2101 = vmatprep.mubr.f32.mxu0 0.0
        %2102 = vmatmul.mubr.f32.gmra.mrb[0].mxu0 %v1654
        %v2103 = vpop.f32.mrb[0].mxu0
        %v2104 = vadd.f32 %v1650, %v2103
        %v2105 = vpop.f32.mrb[0].mxu0
        %2106 = vmatprep.mubr.f32.mxu0 0.0
        %2107 = vmatmul.mubr.f32.gmra.mrb[0].mxu0 %v1657
        %v2108 = vpop.f32.mrb[0].mxu0
        %v2109 = vadd.f32 %v1650, %v2108
        %v2110 = vpop.f32.mrb[0].mxu0
        %2111 = vmatprep.mubr.f32.mxu0 0.0
        %2112 = vmatmul.mubr.f32.gmra.mrb[0].mxu0 %v1660
        %v2113 = vpop.f32.mrb[0].mxu0
        %v2114 = vadd.f32 %v1650, %v2113
        %v2115 = vpop.f32.mrb[0].mxu0
        %2116 = vmatprep.mubr.f32.mxu0 0.0
        %2117 = vmatmul.mubr.f32.gmra.mrb[0].mxu0 %v1663
        %v2118 = vpop.f32.mrb[0].mxu0
        %v2119 = vadd.f32 %v1650, %v2118
        %v2120 = vpop.f32.mrb[0].mxu0
        %2121 = vmatprep.mubr.f32.mxu0 0.0
        %2122 = vmatmul.mubr.f32.gmra.mrb[0].mxu0 %v1666
        %v2123 = vpop.f32.mrb[0].mxu0
        %v2124 = vadd.f32 %v1650, %v2123
        %v2125 = vpop.f32.mrb[0].mxu0
        %2126 = vmatprep.mubr.f32.mxu0 0.0
        %2127 = vmatmul.mubr.f32.gmra.mrb[0].mxu0 %v1669
        %v2128 = vpop.f32.mrb[0].mxu0
        %v2129 = vadd.f32 %v1650, %v2128
        %v2130 = vpop.f32.mrb[0].mxu0
        %2131 = vmatprep.mubr.f32.mxu0 0.0
        %2132 = vmatmul.mubr.f32.gmra.mrb[0].mxu0 %v1672
        %v2133 = vpop.f32.mrb[0].mxu0
        %v2134 = vadd.f32 %v1650, %v2133
        %v2135 = vpop.f32.mrb[0].mxu0
        %2136 = vmatprep.mubr.f32.mxu0 0.0
        %2137 = vmatmul.mubr.f32.gmra.mrb[0].mxu0 %v1675
        %v2138 = vpop.f32.mrb[0].mxu0
        %v2139 = vadd.f32 %v1650, %v2138
        %v2140 = vpop.f32.mrb[0].mxu0
        %2141 = vmatprep.mubr.f32.mxu0 0.0
        %2142 = vmatmul.mubr.f32.gmra.mrb[0].mxu0 %v1678
        %v2143 = vpop.f32.mrb[0].mxu0
        %v2144 = vadd.f32 %v1650, %v2143
        %v2145 = vpop.f32.mrb[0].mxu0
        %2146 = vmatprep.mubr.f32.mxu0 0.0
        %2147 = vmatmul.mubr.f32.gmra.mrb[0].mxu0 %v1681
        %v2148 = vpop.f32.mrb[0].mxu0
        %v2149 = vadd.f32 %v1650, %v2148
        %v2150 = vpop.f32.mrb[0].mxu0
        %2151 = vmatprep.mubr.f32.mxu0 0.0
        %2152 = vmatmul.mubr.f32.gmra.mrb[0].mxu0 %v1684
        %v2153 = vpop.f32.mrb[0].mxu0
        %v2154 = vadd.f32 %v1650, %v2153
        %v2155 = vpop.f32.mrb[0].mxu0
        %2156 = vmatprep.mubr.f32.mxu0 0.0
        %2157 = vmatmul.mubr.f32.gmra.mrb[0].mxu0 %v1687
        %v2158 = vpop.f32.mrb[0].mxu0
        %v2159 = vadd.f32 %v1650, %v2158
        %v2160 = vpop.f32.mrb[0].mxu0
        %2161 = vmatprep.mubr.f32.mxu0 0.0
        %2162 = vmatmul.mubr.f32.gmra.mrb[0].mxu0 %v1690
        %v2163 = vpop.f32.mrb[0].mxu0
        %v2164 = vadd.f32 %v1650, %v2163
        %v2165 = vpop.f32.mrb[0].mxu0
        %2166 = vmatprep.mubr.f32.mxu0 0.0
        %2167 = vmatmul.mubr.f32.gmra.mrb[0].mxu0 %v1693
        %v2168 = vpop.f32.mrb[0].mxu0
        %v2169 = vadd.f32 %v1650, %v2168
        %v2170 = vpop.f32.mrb[0].mxu0
        %2171 = vmatprep.mubr.f32.mxu0 0.0
        %2172 = vmatmul.mubr.f32.gmra.mrb[0].mxu0 %v1696
        %v2173 = vpop.f32.mrb[0].mxu0
        %v2174 = vadd.f32 %v1650, %v2173
        %v2175 = vpop.f32.mrb[0].mxu0
        %2176 = vmatprep.mubr.f32.mxu0 0.0
        %2177 = vmatmul.mubr.f32.gmra.mrb[0].mxu0 %v1699
        %v2178 = vpop.f32.mrb[0].mxu0
        %v2179 = vadd.f32 %v1650, %v2178
        %v2180 = vpop.f32.mrb[0].mxu0
        %2181 = vmatprep.mubr.f32.mxu0 0.0
        %2182 = vmatmul.mubr.f32.gmra.mrb[0].mxu0 %v1702
        %v2183 = vpop.f32.mrb[0].mxu0
        %v2184 = vadd.f32 %v1650, %v2183
        %v2185 = vpop.f32.mrb[0].mxu0
        %2186 = vmatprep.mubr.f32.mxu0 0.0
        %2187 = vmatmul.mubr.f32.gmra.mrb[0].mxu0 %v1705
        %v2188 = vpop.f32.mrb[0].mxu0
        %v2189 = vadd.f32 %v1650, %v2188
        %v2190 = vpop.f32.mrb[0].mxu0
        %2191 = vmatprep.mubr.f32.mxu0 0.0
        %2192 = vmatmul.mubr.f32.gmra.mrb[0].mxu0 %v1708
        %v2193 = vpop.f32.mrb[0].mxu0
        %v2194 = vadd.f32 %v1650, %v2193
        %v2195 = vpop.f32.mrb[0].mxu0
        %2196 = vmatprep.mubr.f32.mxu0 0.0
        %2197 = vmatmul.mubr.f32.gmra.mrb[0].mxu0 %v1711
        %v2198 = vpop.f32.mrb[0].mxu0
        %v2199 = vadd.f32 %v1650, %v2198
        %v2200 = vpop.f32.mrb[0].mxu0
        %2201 = vmatprep.mubr.f32.mxu0 0.0
        %2202 = vmatmul.mubr.f32.gmra.mrb[0].mxu0 %v1714
        %v2203 = vpop.f32.mrb[0].mxu0
        %v2204 = vadd.f32 %v1650, %v2203
        %v2205 = vpop.f32.mrb[0].mxu0
        %2206 = vmatprep.mubr.f32.mxu0 0.0
        %2207 = vmatmul.mubr.f32.gmra.mrb[0].mxu0 %v1717
        %v2208 = vpop.f32.mrb[0].mxu0
        %v2209 = vadd.f32 %v1650, %v2208
        %v2210 = vpop.f32.mrb[0].mxu0
        %2211 = vmatprep.mubr.f32.mxu0 0.0
        %2212 = vmatmul.mubr.f32.gmra.mrb[0].mxu0 %v1720
        %v2213 = vpop.f32.mrb[0].mxu0
        %v2214 = vadd.f32 %v1650, %v2213
        %v2215 = vpop.f32.mrb[0].mxu0
        %2216 = vmatprep.mubr.f32.mxu0 0.0
        %2217 = vmatmul.mubr.f32.gmra.mrb[0].mxu0 %v1723
        %v2218 = vpop.f32.mrb[0].mxu0
        %v2219 = vadd.f32 %v1650, %v2218
        %v2220 = vpop.f32.mrb[0].mxu0
        %2221 = vmatprep.mubr.f32.mxu0 0.0
        %2222 = vmatmul.mubr.f32.gmra.mrb[0].mxu0 %v1726
        %v2223 = vpop.f32.mrb[0].mxu0
        %v2224 = vadd.f32 %v1650, %v2223
        %v2225 = vpop.f32.mrb[0].mxu0
        %2226 = vmatprep.mubr.f32.mxu0 0.0
        %2227 = vmatmul.mubr.f32.gmra.mrb[0].mxu0 %v1729
        %v2228 = vpop.f32.mrb[0].mxu0
        %v2229 = vadd.f32 %v1650, %v2228
        %v2230 = vpop.f32.mrb[0].mxu0
        %2231 = vmatprep.mubr.f32.mxu0 0.0
        %2232 = vmatmul.mubr.f32.gmra.mrb[0].mxu0 %v1732
        %v2233 = vpop.f32.mrb[0].mxu0
        %v2234 = vadd.f32 %v1650, %v2233
        %v2235 = vpop.f32.mrb[0].mxu0
        %2236 = vmatprep.mubr.f32.mxu0 0.0
        %2237 = vmatmul.mubr.f32.gmra.mrb[0].mxu0 %v1735
        %v2238 = vpop.f32.mrb[0].mxu0
        %v2239 = vadd.f32 %v1650, %v2238
        %v2240 = vpop.f32.mrb[0].mxu0
        %2241 = vmatprep.mubr.f32.mxu0 0.0
        %2242 = vmatmul.mubr.f32.gmra.mrb[0].mxu0 %v1738
        %v2243 = vpop.f32.mrb[0].mxu0
        %v2244 = vadd.f32 %v1650, %v2243
        %v2245 = vpop.f32.mrb[0].mxu0
        %2246 = vmatprep.mubr.f32.mxu0 0.0
        %2247 = vmatmul.mubr.f32.gmra.mrb[0].mxu0 %v1741
        %v2248 = vpop.f32.mrb[0].mxu0
        %v2249 = vadd.f32 %v1650, %v2248
        %v2250 = vpop.f32.mrb[0].mxu0
        %2251 = vmatprep.mubr.f32.mxu0 0.0
        %2252 = vmatmul.mubr.f32.gmra.mrb[0].mxu0 %v1744
        %v2253 = vpop.f32.mrb[0].mxu0
        %v2254 = vadd.f32 %v1650, %v2253
        %v2255 = vpop.f32.mrb[0].mxu0
        %2256 = vmatprep.mubr.f32.mxu0 0.0
        %2257 = vmatmul.mubr.f32.gmra.mrb[0].mxu0 %v1747
        %v2258 = vpop.f32.mrb[0].mxu0
        %v2259 = vadd.f32 %v1650, %v2258
        %v2260 = vpop.f32.mrb[0].mxu0
        %2261 = vmatprep.mubr.f32.mxu0 0.0
        %2262 = vmatmul.mubr.f32.gmra.mrb[0].mxu0 %v1750
        %v2263 = vpop.f32.mrb[0].mxu0
        %v2264 = vadd.f32 %v1650, %v2263
        %v2265 = vpop.f32.mrb[0].mxu0
        %2266 = vmatprep.mubr.f32.mxu0 0.0
        %2267 = vmatmul.mubr.f32.gmra.mrb[0].mxu0 %v1753
        %v2268 = vpop.f32.mrb[0].mxu0
        %v2269 = vadd.f32 %v1650, %v2268
        %v2270 = vpop.f32.mrb[0].mxu0
        %2271 = vmatprep.mubr.f32.mxu0 0.0
        %2272 = vmatmul.mubr.f32.gmra.mrb[0].mxu0 %v1756
        %v2273 = vpop.f32.mrb[0].mxu0
        %v2274 = vadd.f32 %v1650, %v2273
        %v2275 = vpop.f32.mrb[0].mxu0
        %2276 = vmatprep.mubr.f32.mxu0 0.0
        %2277 = vmatmul.mubr.f32.gmra.mrb[0].mxu0 %v1759
        %v2278 = vpop.f32.mrb[0].mxu0
        %v2279 = vadd.f32 %v1650, %v2278
        %v2280 = vpop.f32.mrb[0].mxu0
        %2281 = vmatprep.mubr.f32.mxu0 0.0
        %2282 = vmatmul.mubr.f32.gmra.mrb[0].mxu0 %v1762
        %v2283 = vpop.f32.mrb[0].mxu0
        %v2284 = vadd.f32 %v1650, %v2283
        %v2285 = vpop.f32.mrb[0].mxu0
        %2286 = vmatprep.mubr.f32.mxu0 0.0
        %2287 = vmatmul.mubr.f32.gmra.mrb[0].mxu0 %v1765
        %v2288 = vpop.f32.mrb[0].mxu0
        %v2289 = vadd.f32 %v1650, %v2288
        %v2290 = vpop.f32.mrb[0].mxu0
        %2291 = vmatprep.mubr.f32.mxu0 0.0
        %2292 = vmatmul.mubr.f32.gmra.mrb[0].mxu0 %v1768
        %v2293 = vpop.f32.mrb[0].mxu0
        %v2294 = vadd.f32 %v1650, %v2293
        %v2295 = vpop.f32.mrb[0].mxu0
        %2296 = vmatprep.mubr.f32.mxu0 0.0
        %2297 = vmatmul.mubr.f32.gmra.mrb[0].mxu0 %v1771
        %v2298 = vpop.f32.mrb[0].mxu0
        %v2299 = vadd.f32 %v1650, %v2298
        %v2300 = vpop.f32.mrb[0].mxu0
        %2301 = vmatprep.mubr.f32.mxu0 0.0
        %2302 = vmatmul.mubr.f32.gmra.mrb[0].mxu0 %v1774
        %v2303 = vpop.f32.mrb[0].mxu0
        %v2304 = vadd.f32 %v1650, %v2303
        %v2305 = vpop.f32.mrb[0].mxu0
        %2306 = vmatprep.mubr.f32.mxu0 0.0
        %2307 = vmatmul.mubr.f32.gmra.mrb[0].mxu0 %v1777
        %v2308 = vpop.f32.mrb[0].mxu0
        %v2309 = vadd.f32 %v1650, %v2308
        %v2310 = vpop.f32.mrb[0].mxu0
        %2311 = vmatprep.mubr.f32.mxu0 0.0
        %2312 = vmatmul.mubr.f32.gmra.mrb[0].mxu0 %v1780
        %v2313 = vpop.f32.mrb[0].mxu0
        %v2314 = vadd.f32 %v1650, %v2313
        %v2315 = vpop.f32.mrb[0].mxu0
        %2316 = vmatprep.mubr.f32.mxu0 0.0
        %2317 = vmatmul.mubr.f32.gmra.mrb[0].mxu0 %v1783
        %v2318 = vpop.f32.mrb[0].mxu0
        %v2319 = vadd.f32 %v1650, %v2318
        %v2320 = vpop.f32.mrb[0].mxu0
        %2321 = vmatprep.mubr.f32.mxu0 0.0
        %2322 = vmatmul.mubr.f32.gmra.mrb[0].mxu0 %v1786
        %v2323 = vpop.f32.mrb[0].mxu0
        %v2324 = vadd.f32 %v1650, %v2323
        %v2325 = vpop.f32.mrb[0].mxu0
        %2326 = vmatprep.mubr.f32.mxu0 0.0
        %2327 = vmatmul.mubr.f32.gmra.mrb[0].mxu0 %v1789
        %v2328 = vpop.f32.mrb[0].mxu0
        %v2329 = vadd.f32 %v1650, %v2328
        %v2330 = vpop.f32.mrb[0].mxu0
        %2331 = vmatprep.mubr.f32.mxu0 0.0
        %2332 = vmatmul.mubr.f32.gmra.mrb[0].mxu0 %v1792
        %v2333 = vpop.f32.mrb[0].mxu0
        %v2334 = vadd.f32 %v1650, %v2333
        %v2335 = vpop.f32.mrb[0].mxu0
        %2336 = vmatprep.mubr.f32.mxu0 0.0
        %2337 = vmatmul.mubr.f32.gmra.mrb[0].mxu0 %v1795
        %v2338 = vpop.f32.mrb[0].mxu0
        %v2339 = vadd.f32 %v1650, %v2338
        %v2340 = vpop.f32.mrb[0].mxu0
        %2341 = vmatprep.mubr.f32.mxu0 0.0
        %2342 = vmatmul.mubr.f32.gmra.mrb[0].mxu0 %v1798
        %v2343 = vpop.f32.mrb[0].mxu0
        %v2344 = vadd.f32 %v1650, %v2343
        %v2345 = vpop.f32.mrb[0].mxu0
        %2346 = vmatprep.mubr.f32.mxu0 0.0
        %2347 = vmatmul.mubr.f32.gmra.mrb[0].mxu0 %v1801
        %v2348 = vpop.f32.mrb[0].mxu0
        %v2349 = vadd.f32 %v1650, %v2348
        %v2350 = vpop.f32.mrb[0].mxu0
        %2351 = vmatprep.mubr.f32.mxu0 0.0
        %2352 = vmatmul.mubr.f32.gmra.mrb[0].mxu0 %v1804
        %v2353 = vpop.f32.mrb[0].mxu0
        %v2354 = vadd.f32 %v1650, %v2353
        %v2355 = vpop.f32.mrb[0].mxu0
        %2356 = vmatprep.mubr.f32.mxu0 0.0
        %2357 = vmatmul.mubr.f32.gmra.mrb[0].mxu0 %v1807
        %v2358 = vpop.f32.mrb[0].mxu0
        %v2359 = vadd.f32 %v1650, %v2358
        %v2360 = vpop.f32.mrb[0].mxu0
        %2361 = vmatprep.mubr.f32.mxu0 0.0
        %2362 = vmatmul.mubr.f32.gmra.mrb[0].mxu0 %v1810
        %v2363 = vpop.f32.mrb[0].mxu0
        %v2364 = vadd.f32 %v1650, %v2363
        %v2365 = vpop.f32.mrb[0].mxu0
        %2366 = vmatprep.mubr.f32.mxu0 0.0
        %2367 = vmatmul.mubr.f32.gmra.mrb[0].mxu0 %v1813
        %v2368 = vpop.f32.mrb[0].mxu0
        %v2369 = vadd.f32 %v1650, %v2368
        %v2370 = vpop.f32.mrb[0].mxu0
        %2371 = vmatprep.mubr.f32.mxu0 0.0
        %2372 = vmatmul.mubr.f32.gmra.mrb[0].mxu0 %v1816
        %v2373 = vpop.f32.mrb[0].mxu0
        %v2374 = vadd.f32 %v1650, %v2373
        %v2375 = vpop.f32.mrb[0].mxu0
        %2376 = vmatprep.mubr.f32.mxu0 0.0
        %2377 = vmatmul.mubr.f32.gmra.mrb[0].mxu0 %v1819
        %v2378 = vpop.f32.mrb[0].mxu0
        %v2379 = vadd.f32 %v1650, %v2378
        %v2380 = vpop.f32.mrb[0].mxu0
        %2381 = vmatprep.mubr.f32.mxu0 0.0
        %2382 = vmatmul.mubr.f32.gmra.mrb[0].mxu0 %v1822
        %v2383 = vpop.f32.mrb[0].mxu0
        %v2384 = vadd.f32 %v1650, %v2383
        %v2385 = vpop.f32.mrb[0].mxu0
        %2386 = vmatprep.mubr.f32.mxu0 0.0
        %2387 = vmatmul.mubr.f32.gmra.mrb[0].mxu0 %v1825
        %v2388 = vpop.f32.mrb[0].mxu0
        %v2389 = vadd.f32 %v1650, %v2388
        %v2390 = vpop.f32.mrb[0].mxu0
        %2391 = vmatprep.mubr.f32.mxu0 0.0
        %2392 = vmatmul.mubr.f32.gmra.mrb[0].mxu0 %v1828
        %v2393 = vpop.f32.mrb[0].mxu0
        %v2394 = vadd.f32 %v1650, %v2393
        %v2395 = vpop.f32.mrb[0].mxu0
        %2396 = vmatprep.mubr.f32.mxu0 0.0
        %2397 = vmatmul.mubr.f32.gmra.mrb[0].mxu0 %v1831
        %v2398 = vpop.f32.mrb[0].mxu0
        %v2399 = vadd.f32 %v1650, %v2398
        %v2400 = vpop.f32.mrb[0].mxu0
        %2401 = vmatprep.mubr.f32.mxu0 0.0
        %2402 = vmatmul.mubr.f32.gmra.mrb[0].mxu0 %v1834
        %v2403 = vpop.f32.mrb[0].mxu0
        %v2404 = vadd.f32 %v1650, %v2403
        %v2405 = vpop.f32.mrb[0].mxu0
        %2406 = vmatprep.mubr.f32.mxu0 0.0
        %2407 = vmatmul.mubr.f32.gmra.mrb[0].mxu0 %v1837
        %v2408 = vpop.f32.mrb[0].mxu0
        %v2409 = vadd.f32 %v1650, %v2408
        %v2410 = vpop.f32.mrb[0].mxu0
        %2411 = vmatprep.mubr.f32.mxu0 0.0
        %2412 = vmatmul.mubr.f32.gmra.mrb[0].mxu0 %v1840
        %v2413 = vpop.f32.mrb[0].mxu0
        %v2414 = vadd.f32 %v1650, %v2413
        %v2415 = vpop.f32.mrb[0].mxu0
        %2416 = vmatprep.mubr.f32.mxu0 0.0
        %2417 = vmatmul.mubr.f32.gmra.mrb[0].mxu0 %v1843
        %v2418 = vpop.f32.mrb[0].mxu0
        %v2419 = vadd.f32 %v1650, %v2418
        %v2420 = vpop.f32.mrb[0].mxu0
        %2421 = vmatprep.mubr.f32.mxu0 0.0
        %2422 = vmatmul.mubr.f32.gmra.mrb[0].mxu0 %v1846
        %v2423 = vpop.f32.mrb[0].mxu0
        %v2424 = vadd.f32 %v1650, %v2423
        %v2425 = vpop.f32.mrb[0].mxu0
        %2426 = vmatprep.mubr.f32.mxu0 0.0
        %2427 = vmatmul.mubr.f32.gmra.mrb[0].mxu0 %v1849
        %v2428 = vpop.f32.mrb[0].mxu0
        %v2429 = vadd.f32 %v1650, %v2428
        %v2430 = vpop.f32.mrb[0].mxu0
        %2431 = vmatprep.mubr.f32.mxu0 0.0
        %2432 = vmatmul.mubr.f32.gmra.mrb[0].mxu0 %v1852
        %v2433 = vpop.f32.mrb[0].mxu0
        %v2434 = vadd.f32 %v1650, %v2433
        %v2435 = vpop.f32.mrb[0].mxu0
        %2436 = vmatprep.mubr.f32.mxu0 0.0
        %2437 = vmatmul.mubr.f32.gmra.mrb[0].mxu0 %v1855
        %v2438 = vpop.f32.mrb[0].mxu0
        %v2439 = vadd.f32 %v1650, %v2438
        %v2440 = vpop.f32.mrb[0].mxu0
        %2441 = vmatprep.mubr.f32.mxu0 0.0
        %2442 = vmatmul.mubr.f32.gmra.mrb[0].mxu0 %v1858
        %v2443 = vpop.f32.mrb[0].mxu0
        %v2444 = vadd.f32 %v1650, %v2443
        %v2445 = vpop.f32.mrb[0].mxu0
        %2446 = vmatprep.mubr.f32.mxu0 0.0
        %2447 = vmatmul.mubr.f32.gmra.mrb[0].mxu0 %v1861
        %v2448 = vpop.f32.mrb[0].mxu0
        %v2449 = vadd.f32 %v1650, %v2448
        %v2450 = vpop.f32.mrb[0].mxu0
        %2451 = vmatprep.mubr.f32.mxu0 0.0
        %2452 = vmatmul.mubr.f32.gmra.mrb[0].mxu0 %v1864
        %v2453 = vpop.f32.mrb[0].mxu0
        %v2454 = vadd.f32 %v1650, %v2453
        %v2455 = vpop.f32.mrb[0].mxu0
        %2456 = vmatprep.mubr.f32.mxu0 0.0
        %2457 = vmatmul.mubr.f32.gmra.mrb[0].mxu0 %v1867
        %v2458 = vpop.f32.mrb[0].mxu0
        %v2459 = vadd.f32 %v1650, %v2458
        %v2460 = vpop.f32.mrb[0].mxu0
        %2461 = vmatprep.mubr.f32.mxu0 0.0
        %2462 = vmatmul.mubr.f32.gmra.mrb[0].mxu0 %v1870
        %v2463 = vpop.f32.mrb[0].mxu0
        %v2464 = vadd.f32 %v1650, %v2463
        %v2465 = vpop.f32.mrb[0].mxu0
        %2466 = vmatprep.mubr.f32.mxu0 0.0
        %2467 = vmatmul.mubr.f32.gmra.mrb[0].mxu0 %v1873
        %v2468 = vpop.f32.mrb[0].mxu0
        %v2469 = vadd.f32 %v1650, %v2468
        %v2470 = vpop.f32.mrb[0].mxu0
        %2471 = vmatprep.mubr.f32.mxu0 0.0
        %2472 = vmatmul.mubr.f32.gmra.mrb[0].mxu0 %v1876
        %v2473 = vpop.f32.mrb[0].mxu0
        %v2474 = vadd.f32 %v1650, %v2473
        %v2475 = vpop.f32.mrb[0].mxu0
        %2476 = vmatprep.mubr.f32.mxu0 0.0
        %2477 = vmatmul.mubr.f32.gmra.mrb[0].mxu0 %v1879
        %v2478 = vpop.f32.mrb[0].mxu0
        %v2479 = vadd.f32 %v1650, %v2478
        %v2480 = vpop.f32.mrb[0].mxu0
        %2481 = vmatprep.mubr.f32.mxu0 0.0
        %2482 = vmatmul.mubr.f32.gmra.mrb[0].mxu0 %v1882
        %v2483 = vpop.f32.mrb[0].mxu0
        %v2484 = vadd.f32 %v1650, %v2483
        %v2485 = vpop.f32.mrb[0].mxu0
        %2486 = vmatprep.mubr.f32.mxu0 0.0
        %2487 = vmatmul.mubr.f32.gmra.mrb[0].mxu0 %v1885
        %v2488 = vpop.f32.mrb[0].mxu0
        %v2489 = vadd.f32 %v1650, %v2488
        %v2490 = vpop.f32.mrb[0].mxu0
        %2491 = vmatprep.mubr.f32.mxu0 0.0
        %2492 = vmatmul.mubr.f32.gmra.mrb[0].mxu0 %v1888
        %v2493 = vpop.f32.mrb[0].mxu0
        %v2494 = vadd.f32 %v1650, %v2493
        %v2495 = vpop.f32.mrb[0].mxu0
        %2496 = vmatprep.mubr.f32.mxu0 0.0
        %2497 = vmatmul.mubr.f32.gmra.mrb[0].mxu0 %v1891
        %v2498 = vpop.f32.mrb[0].mxu0
        %v2499 = vadd.f32 %v1650, %v2498
        %v2500 = vpop.f32.mrb[0].mxu0
        %2501 = vmatprep.mubr.f32.mxu0 0.0
        %2502 = vmatmul.mubr.f32.gmra.mrb[0].mxu0 %v1894
        %v2503 = vpop.f32.mrb[0].mxu0
        %v2504 = vadd.f32 %v1650, %v2503
        %v2505 = vpop.f32.mrb[0].mxu0
        %2506 = vmatprep.mubr.f32.mxu0 0.0
        %2507 = vmatmul.mubr.f32.gmra.mrb[0].mxu0 %v1897
        %v2508 = vpop.f32.mrb[0].mxu0
        %v2509 = vadd.f32 %v1650, %v2508
        %v2510 = vpop.f32.mrb[0].mxu0
        %2511 = vmatprep.mubr.f32.mxu0 0.0
        %2512 = vmatmul.mubr.f32.gmra.mrb[0].mxu0 %v1900
        %v2513 = vpop.f32.mrb[0].mxu0
        %v2514 = vadd.f32 %v1650, %v2513
        %v2515 = vpop.f32.mrb[0].mxu0
        %2516 = vmatprep.mubr.f32.mxu0 0.0
        %2517 = vmatmul.mubr.f32.gmra.mrb[0].mxu0 %v1903
        %v2518 = vpop.f32.mrb[0].mxu0
        %v2519 = vadd.f32 %v1650, %v2518
        %v2520 = vpop.f32.mrb[0].mxu0
        %2521 = vmatprep.mubr.f32.mxu0 0.0
        %2522 = vmatmul.mubr.f32.gmra.mrb[0].mxu0 %v1906
        %v2523 = vpop.f32.mrb[0].mxu0
        %v2524 = vadd.f32 %v1650, %v2523
        %v2525 = vpop.f32.mrb[0].mxu0
        %2526 = vmatprep.mubr.f32.mxu0 0.0
        %2527 = vmatmul.mubr.f32.gmra.mrb[0].mxu0 %v1909
        %v2528 = vpop.f32.mrb[0].mxu0
        %v2529 = vadd.f32 %v1650, %v2528
        %v2530 = vpop.f32.mrb[0].mxu0
        %2531 = vmatprep.mubr.f32.mxu0 0.0
        %2532 = vmatmul.mubr.f32.gmra.mrb[0].mxu0 %v1912
        %v2533 = vpop.f32.mrb[0].mxu0
        %v2534 = vadd.f32 %v1650, %v2533
        %v2535 = vpop.f32.mrb[0].mxu0
        %2536 = vmatprep.mubr.f32.mxu0 0.0
        %2537 = vmatmul.mubr.f32.gmra.mrb[0].mxu0 %v1915
        %v2538 = vpop.f32.mrb[0].mxu0
        %v2539 = vadd.f32 %v1650, %v2538
        %v2540 = vpop.f32.mrb[0].mxu0
        %2541 = vmatprep.mubr.f32.mxu0 0.0
        %2542 = vmatmul.mubr.f32.gmra.mrb[0].mxu0 %v1918
        %v2543 = vpop.f32.mrb[0].mxu0
        %v2544 = vadd.f32 %v1650, %v2543
        %v2545 = vpop.f32.mrb[0].mxu0
        %2546 = vmatprep.mubr.f32.mxu0 0.0
        %2547 = vmatmul.mubr.f32.gmra.mrb[0].mxu0 %v1921
        %v2548 = vpop.f32.mrb[0].mxu0
        %v2549 = vadd.f32 %v1650, %v2548
        %v2550 = vpop.f32.mrb[0].mxu0
        %2551 = vmatprep.mubr.f32.mxu0 0.0
        %2552 = vmatmul.mubr.f32.gmra.mrb[0].mxu0 %v1924
        %v2553 = vpop.f32.mrb[0].mxu0
        %v2554 = vadd.f32 %v1650, %v2553
        %v2555 = vpop.f32.mrb[0].mxu0
        %2556 = vmatprep.mubr.f32.mxu0 0.0
        %2557 = vmatmul.mubr.f32.gmra.mrb[0].mxu0 %v1927
        %v2558 = vpop.f32.mrb[0].mxu0
        %v2559 = vadd.f32 %v1650, %v2558
        %v2560 = vpop.f32.mrb[0].mxu0
        %2561 = vmatprep.mubr.f32.mxu0 0.0
        %2562 = vmatmul.mubr.f32.gmra.mrb[0].mxu0 %v1930
        %v2563 = vpop.f32.mrb[0].mxu0
        %v2564 = vadd.f32 %v1650, %v2563
        %v2565 = vpop.f32.mrb[0].mxu0
        %2566 = vmatprep.mubr.f32.mxu0 0.0
        %2567 = vmatmul.mubr.f32.gmra.mrb[0].mxu0 %v1933
        %v2568 = vpop.f32.mrb[0].mxu0
        %v2569 = vadd.f32 %v1650, %v2568
        %v2570 = vpop.f32.mrb[0].mxu0
        %2571 = vmatprep.mubr.f32.mxu0 0.0
        %2572 = vmatmul.mubr.f32.gmra.mrb[0].mxu0 %v1936
        %v2573 = vpop.f32.mrb[0].mxu0
        %v2574 = vadd.f32 %v1650, %v2573
        %v2575 = vpop.f32.mrb[0].mxu0
        %2576 = vmatprep.mubr.f32.mxu0 0.0
        %2577 = vmatmul.mubr.f32.gmra.mrb[0].mxu0 %v1939
        %v2578 = vpop.f32.mrb[0].mxu0
        %v2579 = vadd.f32 %v1650, %v2578
        %v2580 = vpop.f32.mrb[0].mxu0
        %2581 = vmatprep.mubr.f32.mxu0 0.0
        %2582 = vmatmul.mubr.f32.gmra.mrb[0].mxu0 %v1942
        %v2583 = vpop.f32.mrb[0].mxu0
        %v2584 = vadd.f32 %v1650, %v2583
        %v2585 = vpop.f32.mrb[0].mxu0
        %2586 = vmatprep.mubr.f32.mxu0 0.0
        %2587 = vmatmul.mubr.f32.gmra.mrb[0].mxu0 %v1945
        %v2588 = vpop.f32.mrb[0].mxu0
        %v2589 = vadd.f32 %v1650, %v2588
        %v2590 = vpop.f32.mrb[0].mxu0
        %2591 = vmatprep.mubr.f32.mxu0 0.0
        %2592 = vmatmul.mubr.f32.gmra.mrb[0].mxu0 %v1948
        %v2593 = vpop.f32.mrb[0].mxu0
        %v2594 = vadd.f32 %v1650, %v2593
        %v2595 = vpop.f32.mrb[0].mxu0
        %2596 = vmatprep.mubr.f32.mxu0 0.0
        %2597 = vmatmul.mubr.f32.gmra.mrb[0].mxu0 %v1951
        %v2598 = vpop.f32.mrb[0].mxu0
        %v2599 = vadd.f32 %v1650, %v2598
        %v2600 = vpop.f32.mrb[0].mxu0
        %2601 = vmatprep.mubr.f32.mxu0 0.0
        %2602 = vmatmul.mubr.f32.gmra.mrb[0].mxu0 %v1954
        %v2603 = vpop.f32.mrb[0].mxu0
        %v2604 = vadd.f32 %v1650, %v2603
        %v2605 = vpop.f32.mrb[0].mxu0
        %2606 = vmatprep.mubr.f32.mxu0 0.0
        %2607 = vmatmul.mubr.f32.gmra.mrb[0].mxu0 %v1957
        %v2608 = vpop.f32.mrb[0].mxu0
        %v2609 = vadd.f32 %v1650, %v2608
        %v2610 = vpop.f32.mrb[0].mxu0
        %2611 = vmatprep.mubr.f32.mxu0 0.0
        %2612 = vmatmul.mubr.f32.gmra.mrb[0].mxu0 %v1960
        %v2613 = vpop.f32.mrb[0].mxu0
        %v2614 = vadd.f32 %v1650, %v2613
        %v2615 = vpop.f32.mrb[0].mxu0
        %2616 = vmatprep.mubr.f32.mxu0 0.0
        %2617 = vmatmul.mubr.f32.gmra.mrb[0].mxu0 %v1963
        %v2618 = vpop.f32.mrb[0].mxu0
        %v2619 = vadd.f32 %v1650, %v2618
        %v2620 = vpop.f32.mrb[0].mxu0
        %2621 = vmatprep.mubr.f32.mxu0 0.0
        %2622 = vmatmul.mubr.f32.gmra.mrb[0].mxu0 %v1966
        %v2623 = vpop.f32.mrb[0].mxu0
        %v2624 = vadd.f32 %v1650, %v2623
        %v2625 = vpop.f32.mrb[0].mxu0
        %2626 = vmatprep.mubr.f32.mxu0 0.0
        %2627 = vmatmul.mubr.f32.gmra.mrb[0].mxu0 %v1969
        %v2628 = vpop.f32.mrb[0].mxu0
        %v2629 = vadd.f32 %v1650, %v2628
        %v2630 = vpop.f32.mrb[0].mxu0
        %2631 = vmatprep.mubr.f32.mxu0 0.0
        %2632 = vmatmul.mubr.f32.gmra.mrb[0].mxu0 %v1972
        %v2633 = vpop.f32.mrb[0].mxu0
        %v2634 = vadd.f32 %v1650, %v2633
        %v2635 = vpop.f32.mrb[0].mxu0
        %2636 = vmatprep.mubr.f32.mxu0 0.0
        %2637 = vmatmul.mubr.f32.gmra.mrb[0].mxu0 %v1975
        %v2638 = vpop.f32.mrb[0].mxu0
        %v2639 = vadd.f32 %v1650, %v2638
        %v2640 = vpop.f32.mrb[0].mxu0
        %2641 = vmatprep.mubr.f32.mxu0 0.0
        %2642 = vmatmul.mubr.f32.gmra.mrb[0].mxu0 %v1978
        %v2643 = vpop.f32.mrb[0].mxu0
        %v2644 = vadd.f32 %v1650, %v2643
        %v2645 = vpop.f32.mrb[0].mxu0
        %2646 = vmatprep.mubr.f32.mxu0 0.0
        %2647 = vmatmul.mubr.f32.gmra.mrb[0].mxu0 %v1981
        %v2648 = vpop.f32.mrb[0].mxu0
        %v2649 = vadd.f32 %v1650, %v2648
        %v2650 = vpop.f32.mrb[0].mxu0
        %2651 = vmatprep.mubr.f32.mxu0 0.0
        %2652 = vmatmul.mubr.f32.gmra.mrb[0].mxu0 %v1984
        %v2653 = vpop.f32.mrb[0].mxu0
        %v2654 = vadd.f32 %v1650, %v2653
        %v2655 = vpop.f32.mrb[0].mxu0
        %2656 = vmatprep.mubr.f32.mxu0 0.0
        %2657 = vmatmul.mubr.f32.gmra.mrb[0].mxu0 %v1987
        %v2658 = vpop.f32.mrb[0].mxu0
        %v2659 = vadd.f32 %v1650, %v2658
        %v2660 = vpop.f32.mrb[0].mxu0
        %2661 = vmatprep.mubr.f32.mxu0 0.0
        %2662 = vmatmul.mubr.f32.gmra.mrb[0].mxu0 %v1990
        %v2663 = vpop.f32.mrb[0].mxu0
        %v2664 = vadd.f32 %v1650, %v2663
        %v2665 = vpop.f32.mrb[0].mxu0
        %2666 = vmatprep.mubr.f32.mxu0 0.0
        %2667 = vmatmul.mubr.f32.gmra.mrb[0].mxu0 %v1993
        %v2668 = vpop.f32.mrb[0].mxu0
        %v2669 = vadd.f32 %v1650, %v2668
        %v2670 = vpop.f32.mrb[0].mxu0
        %2671 = vmatprep.mubr.f32.mxu0 0.0
        %2672 = vmatmul.mubr.f32.gmra.mrb[0].mxu0 %v1996
        %v2673 = vpop.f32.mrb[0].mxu0
        %v2674 = vadd.f32 %v1650, %v2673
        %v2675 = vpop.f32.mrb[0].mxu0
        %2676 = vmatprep.mubr.f32.mxu0 0.0
        %2677 = vmatmul.mubr.f32.gmra.mrb[0].mxu0 %v1999
        %v2678 = vpop.f32.mrb[0].mxu0
        %v2679 = vadd.f32 %v1650, %v2678
        %v2680 = vpop.f32.mrb[0].mxu0
        %2681 = vmatprep.mubr.f32.mxu0 0.0
        %2682 = vmatmul.mubr.f32.gmra.mrb[0].mxu0 %v2002
        %v2683 = vpop.f32.mrb[0].mxu0
        %v2684 = vadd.f32 %v1650, %v2683
        %v2685 = vpop.f32.mrb[0].mxu0
        %2686 = vmatprep.mubr.f32.mxu0 0.0
        %2687 = vmatmul.mubr.f32.gmra.mrb[0].mxu0 %v2005
        %v2688 = vpop.f32.mrb[0].mxu0
        %v2689 = vadd.f32 %v1650, %v2688
        %v2690 = vpop.f32.mrb[0].mxu0
        %2691 = vmatprep.mubr.f32.mxu0 0.0
        %2692 = vmatmul.mubr.f32.gmra.mrb[0].mxu0 %v2008
        %v2693 = vpop.f32.mrb[0].mxu0
        %v2694 = vadd.f32 %v1650, %v2693
        %v2695 = vpop.f32.mrb[0].mxu0
        %2696 = vmatprep.mubr.f32.mxu0 0.0
        %2697 = vmatmul.mubr.f32.gmra.mrb[0].mxu0 %v2011
        %v2698 = vpop.f32.mrb[0].mxu0
        %v2699 = vadd.f32 %v1650, %v2698
        %v2700 = vpop.f32.mrb[0].mxu0
        %2701 = vmatprep.mubr.f32.mxu0 0.0
        %2702 = vmatmul.mubr.f32.gmra.mrb[0].mxu0 %v2014
        %v2703 = vpop.f32.mrb[0].mxu0
        %v2704 = vadd.f32 %v1650, %v2703
        %v2705 = vpop.f32.mrb[0].mxu0
        %2706 = vmatprep.mubr.f32.mxu0 0.0
        %2707 = vmatmul.mubr.f32.gmra.mrb[0].mxu0 %v2017
        %v2708 = vpop.f32.mrb[0].mxu0
        %v2709 = vadd.f32 %v1650, %v2708
        %v2710 = vpop.f32.mrb[0].mxu0
        %2711 = vmatprep.mubr.f32.mxu0 0.0
        %2712 = vmatmul.mubr.f32.gmra.mrb[0].mxu0 %v2020
        %v2713 = vpop.f32.mrb[0].mxu0
        %v2714 = vadd.f32 %v1650, %v2713
        %v2715 = vpop.f32.mrb[0].mxu0
        %2716 = vmatprep.mubr.f32.mxu0 0.0
        %2717 = vmatmul.mubr.f32.gmra.mrb[0].mxu0 %v2023
        %v2718 = vpop.f32.mrb[0].mxu0
        %v2719 = vadd.f32 %v1650, %v2718
        %v2720 = vpop.f32.mrb[0].mxu0
        %2721 = vmatprep.mubr.f32.mxu0 0.0
        %2722 = vmatmul.mubr.f32.gmra.mrb[0].mxu0 %v2026
        %v2723 = vpop.f32.mrb[0].mxu0
        %v2724 = vadd.f32 %v1650, %v2723
        %v2725 = vpop.f32.mrb[0].mxu0
        %2726 = vmatprep.mubr.f32.mxu0 0.0
        %2727 = vmatmul.mubr.f32.gmra.mrb[0].mxu0 %v2029
        %v2728 = vpop.f32.mrb[0].mxu0
        %v2729 = vadd.f32 %v1650, %v2728
        %v2730 = vpop.f32.mrb[0].mxu0
        %2731 = vmatprep.mubr.f32.mxu0 0.0
        %2732 = vmatmul.mubr.f32.gmra.mrb[0].mxu0 %v2032
        %v2733 = vpop.f32.mrb[0].mxu0
        %v2734 = vadd.f32 %v1650, %v2733
        %v2735 = vpop.f32.mrb[0].mxu0
        %2736 = vmatprep.mubr.f32.mxu0 0.0
        %2737 = vmatmul.mubr.f32.gmra.mrb[0].mxu0 %v2035
        %v2738 = vpop.f32.mrb[0].mxu0
        %v2739 = vadd.f32 %v1650, %v2738
        %v2740 = vpop.f32.mrb[0].mxu0
        %2741 = vdwg.mxu0
        %v2742 = vmax.f32 %v2104, 0.0
        %v2743 = vmax.f32 %v2109, 0.0
        %v2744 = vmax.f32 %v2114, 0.0
        %v2745 = vmax.f32 %v2119, 0.0
        %v2746 = vmax.f32 %v2124, 0.0
        %v2747 = vmax.f32 %v2129, 0.0
        %v2748 = vmax.f32 %v2134, 0.0
        %v2749 = vmax.f32 %v2139, 0.0
        %v2750 = vmax.f32 %v2144, 0.0
        %v2751 = vmax.f32 %v2149, 0.0
        %v2752 = vmax.f32 %v2154, 0.0
        %v2753 = vmax.f32 %v2159, 0.0
        %v2754 = vmax.f32 %v2164, 0.0
        %v2755 = vmax.f32 %v2169, 0.0
        %v2756 = vmax.f32 %v2174, 0.0
        %v2757 = vmax.f32 %v2179, 0.0
        %v2758 = vmax.f32 %v2184, 0.0
        %v2759 = vmax.f32 %v2189, 0.0
        %v2760 = vmax.f32 %v2194, 0.0
        %v2761 = vmax.f32 %v2199, 0.0
        %v2762 = vmax.f32 %v2204, 0.0
        %v2763 = vmax.f32 %v2209, 0.0
        %v2764 = vmax.f32 %v2214, 0.0
        %v2765 = vmax.f32 %v2219, 0.0
        %v2766 = vmax.f32 %v2224, 0.0
        %v2767 = vmax.f32 %v2229, 0.0
        %v2768 = vmax.f32 %v2234, 0.0
        %v2769 = vmax.f32 %v2239, 0.0
        %v2770 = vmax.f32 %v2244, 0.0
        %v2771 = vmax.f32 %v2249, 0.0
        %v2772 = vmax.f32 %v2254, 0.0
        %v2773 = vmax.f32 %v2259, 0.0
        %v2774 = vmax.f32 %v2264, 0.0
        %v2775 = vmax.f32 %v2269, 0.0
        %v2776 = vmax.f32 %v2274, 0.0
        %v2777 = vmax.f32 %v2279, 0.0
        %v2778 = vmax.f32 %v2284, 0.0
        %v2779 = vmax.f32 %v2289, 0.0
        %v2780 = vmax.f32 %v2294, 0.0
        %v2781 = vmax.f32 %v2299, 0.0
        %v2782 = vmax.f32 %v2304, 0.0
        %v2783 = vmax.f32 %v2309, 0.0
        %v2784 = vmax.f32 %v2314, 0.0
        %v2785 = vmax.f32 %v2319, 0.0
        %v2786 = vmax.f32 %v2324, 0.0
        %v2787 = vmax.f32 %v2329, 0.0
        %v2788 = vmax.f32 %v2334, 0.0
        %v2789 = vmax.f32 %v2339, 0.0
        %v2790 = vmax.f32 %v2344, 0.0
        %v2791 = vmax.f32 %v2349, 0.0
        %v2792 = vmax.f32 %v2354, 0.0
        %v2793 = vmax.f32 %v2359, 0.0
        %v2794 = vmax.f32 %v2364, 0.0
        %v2795 = vmax.f32 %v2369, 0.0
        %v2796 = vmax.f32 %v2374, 0.0
        %v2797 = vmax.f32 %v2379, 0.0
        %v2798 = vmax.f32 %v2384, 0.0
        %v2799 = vmax.f32 %v2389, 0.0
        %v2800 = vmax.f32 %v2394, 0.0
        %v2801 = vmax.f32 %v2399, 0.0
        %v2802 = vmax.f32 %v2404, 0.0
        %v2803 = vmax.f32 %v2409, 0.0
        %v2804 = vmax.f32 %v2414, 0.0
        %v2805 = vmax.f32 %v2419, 0.0
        %v2806 = vmax.f32 %v2424, 0.0
        %v2807 = vmax.f32 %v2429, 0.0
        %v2808 = vmax.f32 %v2434, 0.0
        %v2809 = vmax.f32 %v2439, 0.0
        %v2810 = vmax.f32 %v2444, 0.0
        %v2811 = vmax.f32 %v2449, 0.0
        %v2812 = vmax.f32 %v2454, 0.0
        %v2813 = vmax.f32 %v2459, 0.0
        %v2814 = vmax.f32 %v2464, 0.0
        %v2815 = vmax.f32 %v2469, 0.0
        %v2816 = vmax.f32 %v2474, 0.0
        %v2817 = vmax.f32 %v2479, 0.0
        %v2818 = vmax.f32 %v2484, 0.0
        %v2819 = vmax.f32 %v2489, 0.0
        %v2820 = vmax.f32 %v2494, 0.0
        %v2821 = vmax.f32 %v2499, 0.0
        %v2822 = vmax.f32 %v2504, 0.0
        %v2823 = vmax.f32 %v2509, 0.0
        %v2824 = vmax.f32 %v2514, 0.0
        %v2825 = vmax.f32 %v2519, 0.0
        %v2826 = vmax.f32 %v2524, 0.0
        %v2827 = vmax.f32 %v2529, 0.0
        %v2828 = vmax.f32 %v2534, 0.0
        %v2829 = vmax.f32 %v2539, 0.0
        %v2830 = vmax.f32 %v2544, 0.0
        %v2831 = vmax.f32 %v2549, 0.0
        %v2832 = vmax.f32 %v2554, 0.0
        %v2833 = vmax.f32 %v2559, 0.0
        %v2834 = vmax.f32 %v2564, 0.0
        %v2835 = vmax.f32 %v2569, 0.0
        %v2836 = vmax.f32 %v2574, 0.0
        %v2837 = vmax.f32 %v2579, 0.0
        %v2838 = vmax.f32 %v2584, 0.0
        %v2839 = vmax.f32 %v2589, 0.0
        %v2840 = vmax.f32 %v2594, 0.0
        %v2841 = vmax.f32 %v2599, 0.0
        %v2842 = vmax.f32 %v2604, 0.0
        %v2843 = vmax.f32 %v2609, 0.0
        %v2844 = vmax.f32 %v2614, 0.0
        %v2845 = vmax.f32 %v2619, 0.0
        %v2846 = vmax.f32 %v2624, 0.0
        %v2847 = vmax.f32 %v2629, 0.0
        %v2848 = vmax.f32 %v2634, 0.0
        %v2849 = vmax.f32 %v2639, 0.0
        %v2850 = vmax.f32 %v2644, 0.0
        %v2851 = vmax.f32 %v2649, 0.0
        %v2852 = vmax.f32 %v2654, 0.0
        %v2853 = vmax.f32 %v2659, 0.0
        %v2854 = vmax.f32 %v2664, 0.0
        %v2855 = vmax.f32 %v2669, 0.0
        %v2856 = vmax.f32 %v2674, 0.0
        %v2857 = vmax.f32 %v2679, 0.0
        %v2858 = vmax.f32 %v2684, 0.0
        %v2859 = vmax.f32 %v2689, 0.0
        %v2860 = vmax.f32 %v2694, 0.0
        %v2861 = vmax.f32 %v2699, 0.0
        %v2862 = vmax.f32 %v2704, 0.0
        %v2863 = vmax.f32 %v2709, 0.0
        %v2864 = vmax.f32 %v2714, 0.0
        %v2865 = vmax.f32 %v2719, 0.0
        %v2866 = vmax.f32 %v2724, 0.0
        %v2867 = vmax.f32 %v2729, 0.0
        %v2868 = vmax.f32 %v2734, 0.0
        %v2869 = vmax.f32 %v2739, 0.0
        %v2870 = vld [vmem:[%s5] sm:$0xf]
        %v2871 = vld [vmem:[%s6] sm:$0xf]
        %2873 = vset.pattern.permute.xlu0 0
        %2874 = vperm.xlu0 %2873, %v2871
        %v2875 = vpop.permute.xlu0 %2874
        %v2878 = vsel %vm1652, %v2870, 0
        %v2881 = vsel %vm1652, %v2742, 0
        %v2884 = vsel %vm1652, %v2743, 0
        %v2887 = vsel %vm1652, %v2744, 0
        %v2890 = vsel %vm1652, %v2745, 0
        %v2893 = vsel %vm1652, %v2746, 0
        %v2896 = vsel %vm1652, %v2747, 0
        %v2899 = vsel %vm1652, %v2748, 0
        %v2902 = vsel %vm1652, %v2749, 0
        %v2905 = vsel %vm1652, %v2750, 0
        %v2908 = vsel %vm1652, %v2751, 0
        %v2911 = vsel %vm1652, %v2752, 0
        %v2914 = vsel %vm1652, %v2753, 0
        %v2917 = vsel %vm1652, %v2754, 0
        %v2920 = vsel %vm1652, %v2755, 0
        %v2923 = vsel %vm1652, %v2756, 0
        %v2926 = vsel %vm1652, %v2757, 0
        %v2929 = vsel %vm1652, %v2758, 0
        %v2932 = vsel %vm1652, %v2759, 0
        %v2935 = vsel %vm1652, %v2760, 0
        %v2938 = vsel %vm1652, %v2761, 0
        %v2941 = vsel %vm1652, %v2762, 0
        %v2944 = vsel %vm1652, %v2763, 0
        %v2947 = vsel %vm1652, %v2764, 0
        %v2950 = vsel %vm1652, %v2765, 0
        %v2953 = vsel %vm1652, %v2766, 0
        %v2956 = vsel %vm1652, %v2767, 0
        %v2959 = vsel %vm1652, %v2768, 0
        %v2962 = vsel %vm1652, %v2769, 0
        %v2965 = vsel %vm1652, %v2770, 0
        %v2968 = vsel %vm1652, %v2771, 0
        %v2971 = vsel %vm1652, %v2772, 0
        %v2974 = vsel %vm1652, %v2773, 0
        %v2977 = vsel %vm1652, %v2774, 0
        %v2980 = vsel %vm1652, %v2775, 0
        %v2983 = vsel %vm1652, %v2776, 0
        %v2986 = vsel %vm1652, %v2777, 0
        %v2989 = vsel %vm1652, %v2778, 0
        %v2992 = vsel %vm1652, %v2779, 0
        %v2995 = vsel %vm1652, %v2780, 0
        %v2998 = vsel %vm1652, %v2781, 0
        %v3001 = vsel %vm1652, %v2782, 0
        %v3004 = vsel %vm1652, %v2783, 0
        %v3007 = vsel %vm1652, %v2784, 0
        %v3010 = vsel %vm1652, %v2785, 0
        %v3013 = vsel %vm1652, %v2786, 0
        %v3016 = vsel %vm1652, %v2787, 0
        %v3019 = vsel %vm1652, %v2788, 0
        %v3022 = vsel %vm1652, %v2789, 0
        %v3025 = vsel %vm1652, %v2790, 0
        %v3028 = vsel %vm1652, %v2791, 0
        %v3031 = vsel %vm1652, %v2792, 0
        %v3034 = vsel %vm1652, %v2793, 0
        %v3037 = vsel %vm1652, %v2794, 0
        %v3040 = vsel %vm1652, %v2795, 0
        %v3043 = vsel %vm1652, %v2796, 0
        %v3046 = vsel %vm1652, %v2797, 0
        %v3049 = vsel %vm1652, %v2798, 0
        %v3052 = vsel %vm1652, %v2799, 0
        %v3055 = vsel %vm1652, %v2800, 0
        %v3058 = vsel %vm1652, %v2801, 0
        %v3061 = vsel %vm1652, %v2802, 0
        %v3064 = vsel %vm1652, %v2803, 0
        %v3067 = vsel %vm1652, %v2804, 0
        %v3070 = vsel %vm1652, %v2805, 0
        %v3073 = vsel %vm1652, %v2806, 0
        %v3076 = vsel %vm1652, %v2807, 0
        %v3079 = vsel %vm1652, %v2808, 0
        %v3082 = vsel %vm1652, %v2809, 0
        %v3085 = vsel %vm1652, %v2810, 0
        %v3088 = vsel %vm1652, %v2811, 0
        %v3091 = vsel %vm1652, %v2812, 0
        %v3094 = vsel %vm1652, %v2813, 0
        %v3097 = vsel %vm1652, %v2814, 0
        %v3100 = vsel %vm1652, %v2815, 0
        %v3103 = vsel %vm1652, %v2816, 0
        %v3106 = vsel %vm1652, %v2817, 0
        %v3109 = vsel %vm1652, %v2818, 0
        %v3112 = vsel %vm1652, %v2819, 0
        %v3115 = vsel %vm1652, %v2820, 0
        %v3118 = vsel %vm1652, %v2821, 0
        %v3121 = vsel %vm1652, %v2822, 0
        %v3124 = vsel %vm1652, %v2823, 0
        %v3127 = vsel %vm1652, %v2824, 0
        %v3130 = vsel %vm1652, %v2825, 0
        %v3133 = vsel %vm1652, %v2826, 0
        %v3136 = vsel %vm1652, %v2827, 0
        %v3139 = vsel %vm1652, %v2828, 0
        %v3142 = vsel %vm1652, %v2829, 0
        %v3145 = vsel %vm1652, %v2830, 0
        %v3148 = vsel %vm1652, %v2831, 0
        %v3151 = vsel %vm1652, %v2832, 0
        %v3154 = vsel %vm1652, %v2833, 0
        %v3157 = vsel %vm1652, %v2834, 0
        %v3160 = vsel %vm1652, %v2835, 0
        %v3163 = vsel %vm1652, %v2836, 0
        %v3166 = vsel %vm1652, %v2837, 0
        %v3169 = vsel %vm1652, %v2838, 0
        %v3172 = vsel %vm1652, %v2839, 0
        %v3175 = vsel %vm1652, %v2840, 0
        %v3178 = vsel %vm1652, %v2841, 0
        %v3181 = vsel %vm1652, %v2842, 0
        %v3184 = vsel %vm1652, %v2843, 0
        %v3187 = vsel %vm1652, %v2844, 0
        %v3190 = vsel %vm1652, %v2845, 0
        %v3193 = vsel %vm1652, %v2846, 0
        %v3196 = vsel %vm1652, %v2847, 0
        %v3199 = vsel %vm1652, %v2848, 0
        %v3202 = vsel %vm1652, %v2849, 0
        %v3205 = vsel %vm1652, %v2850, 0
        %v3208 = vsel %vm1652, %v2851, 0
        %v3211 = vsel %vm1652, %v2852, 0
        %v3214 = vsel %vm1652, %v2853, 0
        %v3217 = vsel %vm1652, %v2854, 0
        %v3220 = vsel %vm1652, %v2855, 0
        %v3223 = vsel %vm1652, %v2856, 0
        %v3226 = vsel %vm1652, %v2857, 0
        %v3229 = vsel %vm1652, %v2858, 0
        %v3232 = vsel %vm1652, %v2859, 0
        %v3235 = vsel %vm1652, %v2860, 0
        %v3238 = vsel %vm1652, %v2861, 0
        %v3241 = vsel %vm1652, %v2862, 0
        %v3244 = vsel %vm1652, %v2863, 0
        %v3247 = vsel %vm1652, %v2864, 0
        %v3250 = vsel %vm1652, %v2865, 0
        %v3253 = vsel %vm1652, %v2866, 0
        %v3256 = vsel %vm1652, %v2867, 0
        %v3259 = vsel %vm1652, %v2868, 0
        %v3262 = vsel %vm1652, %v2869, 0
        %3264 = vmatprep.subr.mxu0 0.0
        %3265 = vmatpush1.xpose.msra.mxu0 %v2881
        %3266 = vmatprep.subr.mxu0 0.0
        %3267 = vmatpush1.xpose.msra.mxu0 %v2884
        %3268 = vmatprep.subr.mxu0 0.0
        %3269 = vmatpush1.xpose.msra.mxu0 %v2887
        %3270 = vmatprep.subr.mxu0 0.0
        %3271 = vmatpush1.xpose.msra.mxu0 %v2890
        %3272 = vmatprep.subr.mxu0 0.0
        %3273 = vmatpush1.xpose.msra.mxu0 %v2893
        %3274 = vmatprep.subr.mxu0 0.0
        %3275 = vmatpush1.xpose.msra.mxu0 %v2896
        %3276 = vmatprep.subr.mxu0 0.0
        %3277 = vmatpush1.xpose.msra.mxu0 %v2899
        %3278 = vmatprep.subr.mxu0 0.0
        %3279 = vmatpush1.xpose.msra.mxu0 %v2902
        %3280 = vmatprep.subr.mxu0 0.0
        %3281 = vmatpush1.xpose.msra.mxu0 %v2905
        %3282 = vmatprep.subr.mxu0 0.0
        %3283 = vmatpush1.xpose.msra.mxu0 %v2908
        %3284 = vmatprep.subr.mxu0 0.0
        %3285 = vmatpush1.xpose.msra.mxu0 %v2911
        %3286 = vmatprep.subr.mxu0 0.0
        %3287 = vmatpush1.xpose.msra.mxu0 %v2914
        %3288 = vmatprep.subr.mxu0 0.0
        %3289 = vmatpush1.xpose.msra.mxu0 %v2917
        %3290 = vmatprep.subr.mxu0 0.0
        %3291 = vmatpush1.xpose.msra.mxu0 %v2920
        %3292 = vmatprep.subr.mxu0 0.0
        %3293 = vmatpush1.xpose.msra.mxu0 %v2923
        %3294 = vmatprep.subr.mxu0 0.0
        %3295 = vmatpush1.xpose.msra.mxu0 %v2926
        %3296 = vmatprep.subr.mxu0 0.0
        %3297 = vmatpush1.xpose.msra.mxu0 %v2929
        %3298 = vmatprep.subr.mxu0 0.0
        %3299 = vmatpush1.xpose.msra.mxu0 %v2932
        %3300 = vmatprep.subr.mxu0 0.0
        %3301 = vmatpush1.xpose.msra.mxu0 %v2935
        %3302 = vmatprep.subr.mxu0 0.0
        %3303 = vmatpush1.xpose.msra.mxu0 %v2938
        %3304 = vmatprep.subr.mxu0 0.0
        %3305 = vmatpush1.xpose.msra.mxu0 %v2941
        %3306 = vmatprep.subr.mxu0 0.0
        %3307 = vmatpush1.xpose.msra.mxu0 %v2944
        %3308 = vmatprep.subr.mxu0 0.0
        %3309 = vmatpush1.xpose.msra.mxu0 %v2947
        %3310 = vmatprep.subr.mxu0 0.0
        %3311 = vmatpush1.xpose.msra.mxu0 %v2950
        %3312 = vmatprep.subr.mxu0 0.0
        %3313 = vmatpush1.xpose.msra.mxu0 %v2953
        %3314 = vmatprep.subr.mxu0 0.0
        %3315 = vmatpush1.xpose.msra.mxu0 %v2956
        %3316 = vmatprep.subr.mxu0 0.0
        %3317 = vmatpush1.xpose.msra.mxu0 %v2959
        %3318 = vmatprep.subr.mxu0 0.0
        %3319 = vmatpush1.xpose.msra.mxu0 %v2962
        %3320 = vmatprep.subr.mxu0 0.0
        %3321 = vmatpush1.xpose.msra.mxu0 %v2965
        %3322 = vmatprep.subr.mxu0 0.0
        %3323 = vmatpush1.xpose.msra.mxu0 %v2968
        %3324 = vmatprep.subr.mxu0 0.0
        %3325 = vmatpush1.xpose.msra.mxu0 %v2971
        %3326 = vmatprep.subr.mxu0 0.0
        %3327 = vmatpush1.xpose.msra.mxu0 %v2974
        %3328 = vmatprep.mubr.f32.mxu0 0.0
        %3329 = vmatmul.mubr.f32.gmra.mrb[0].mxu0 %v2878
        %v3330 = vpop.f32.mrb[0].mxu0
        %v3331 = vadd.f32 %v2875, %v3330
        %v3332 = vpop.f32.mrb[0].mxu0
        %v3333 = vadd.f32 %v2875, %v3332
        %3334 = vdwg.mxu0
        %3335 = vmatprep.subr.mxu0 0.0
        %3336 = vmatpush1.xpose.msra.mxu0 %v2977
        %3337 = vmatprep.subr.mxu0 0.0
        %3338 = vmatpush1.xpose.msra.mxu0 %v2980
        %3339 = vmatprep.subr.mxu0 0.0
        %3340 = vmatpush1.xpose.msra.mxu0 %v2983
        %3341 = vmatprep.subr.mxu0 0.0
        %3342 = vmatpush1.xpose.msra.mxu0 %v2986
        %3343 = vmatprep.subr.mxu0 0.0
        %3344 = vmatpush1.xpose.msra.mxu0 %v2989
        %3345 = vmatprep.subr.mxu0 0.0
        %3346 = vmatpush1.xpose.msra.mxu0 %v2992
        %3347 = vmatprep.subr.mxu0 0.0
        %3348 = vmatpush1.xpose.msra.mxu0 %v2995
        %3349 = vmatprep.subr.mxu0 0.0
        %3350 = vmatpush1.xpose.msra.mxu0 %v2998
        %3351 = vmatprep.subr.mxu0 0.0
        %3352 = vmatpush1.xpose.msra.mxu0 %v3001
        %3353 = vmatprep.subr.mxu0 0.0
        %3354 = vmatpush1.xpose.msra.mxu0 %v3004
        %3355 = vmatprep.subr.mxu0 0.0
        %3356 = vmatpush1.xpose.msra.mxu0 %v3007
        %3357 = vmatprep.subr.mxu0 0.0
        %3358 = vmatpush1.xpose.msra.mxu0 %v3010
        %3359 = vmatprep.subr.mxu0 0.0
        %3360 = vmatpush1.xpose.msra.mxu0 %v3013
        %3361 = vmatprep.subr.mxu0 0.0
        %3362 = vmatpush1.xpose.msra.mxu0 %v3016
        %3363 = vmatprep.subr.mxu0 0.0
        %3364 = vmatpush1.xpose.msra.mxu0 %v3019
        %3365 = vmatprep.subr.mxu0 0.0
        %3366 = vmatpush1.xpose.msra.mxu0 %v3022
        %3367 = vmatprep.subr.mxu0 0.0
        %3368 = vmatpush1.xpose.msra.mxu0 %v3025
        %3369 = vmatprep.subr.mxu0 0.0
        %3370 = vmatpush1.xpose.msra.mxu0 %v3028
        %3371 = vmatprep.subr.mxu0 0.0
        %3372 = vmatpush1.xpose.msra.mxu0 %v3031
        %3373 = vmatprep.subr.mxu0 0.0
        %3374 = vmatpush1.xpose.msra.mxu0 %v3034
        %3375 = vmatprep.subr.mxu0 0.0
        %3376 = vmatpush1.xpose.msra.mxu0 %v3037
        %3377 = vmatprep.subr.mxu0 0.0
        %3378 = vmatpush1.xpose.msra.mxu0 %v3040
        %3379 = vmatprep.subr.mxu0 0.0
        %3380 = vmatpush1.xpose.msra.mxu0 %v3043
        %3381 = vmatprep.subr.mxu0 0.0
        %3382 = vmatpush1.xpose.msra.mxu0 %v3046
        %3383 = vmatprep.subr.mxu0 0.0
        %3384 = vmatpush1.xpose.msra.mxu0 %v3049
        %3385 = vmatprep.subr.mxu0 0.0
        %3386 = vmatpush1.xpose.msra.mxu0 %v3052
        %3387 = vmatprep.subr.mxu0 0.0
        %3388 = vmatpush1.xpose.msra.mxu0 %v3055
        %3389 = vmatprep.subr.mxu0 0.0
        %3390 = vmatpush1.xpose.msra.mxu0 %v3058
        %3391 = vmatprep.subr.mxu0 0.0
        %3392 = vmatpush1.xpose.msra.mxu0 %v3061
        %3393 = vmatprep.subr.mxu0 0.0
        %3394 = vmatpush1.xpose.msra.mxu0 %v3064
        %3395 = vmatprep.subr.mxu0 0.0
        %3396 = vmatpush1.xpose.msra.mxu0 %v3067
        %3397 = vmatprep.subr.mxu0 0.0
        %3398 = vmatpush1.xpose.msra.mxu0 %v3070
        %3399 = vmatprep.mubr.f32.mxu0 0.0
        %3400 = vmatmul.mubr.f32.gmra.mrb[0].mxu0 %v2878
        %v3401 = vpop.f32.mrb[0].mxu0
        %v3402 = vadd.f32 %v2875, %v3401
        %v3403 = vpop.f32.mrb[0].mxu0
        %v3404 = vadd.f32 %v2875, %v3403
        %3405 = vdwg.mxu0
        %3406 = vmatprep.subr.mxu0 0.0
        %3407 = vmatpush1.xpose.msra.mxu0 %v3073
        %3408 = vmatprep.subr.mxu0 0.0
        %3409 = vmatpush1.xpose.msra.mxu0 %v3076
        %3410 = vmatprep.subr.mxu0 0.0
        %3411 = vmatpush1.xpose.msra.mxu0 %v3079
        %3412 = vmatprep.subr.mxu0 0.0
        %3413 = vmatpush1.xpose.msra.mxu0 %v3082
        %3414 = vmatprep.subr.mxu0 0.0
        %3415 = vmatpush1.xpose.msra.mxu0 %v3085
        %3416 = vmatprep.subr.mxu0 0.0
        %3417 = vmatpush1.xpose.msra.mxu0 %v3088
        %3418 = vmatprep.subr.mxu0 0.0
        %3419 = vmatpush1.xpose.msra.mxu0 %v3091
        %3420 = vmatprep.subr.mxu0 0.0
        %3421 = vmatpush1.xpose.msra.mxu0 %v3094
        %3422 = vmatprep.subr.mxu0 0.0
        %3423 = vmatpush1.xpose.msra.mxu0 %v3097
        %3424 = vmatprep.subr.mxu0 0.0
        %3425 = vmatpush1.xpose.msra.mxu0 %v3100
        %3426 = vmatprep.subr.mxu0 0.0
        %3427 = vmatpush1.xpose.msra.mxu0 %v3103
        %3428 = vmatprep.subr.mxu0 0.0
        %3429 = vmatpush1.xpose.msra.mxu0 %v3106
        %3430 = vmatprep.subr.mxu0 0.0
        %3431 = vmatpush1.xpose.msra.mxu0 %v3109
        %3432 = vmatprep.subr.mxu0 0.0
        %3433 = vmatpush1.xpose.msra.mxu0 %v3112
        %3434 = vmatprep.subr.mxu0 0.0
        %3435 = vmatpush1.xpose.msra.mxu0 %v3115
        %3436 = vmatprep.subr.mxu0 0.0
        %3437 = vmatpush1.xpose.msra.mxu0 %v3118
        %3438 = vmatprep.subr.mxu0 0.0
        %3439 = vmatpush1.xpose.msra.mxu0 %v3121
        %3440 = vmatprep.subr.mxu0 0.0
        %3441 = vmatpush1.xpose.msra.mxu0 %v3124
        %3442 = vmatprep.subr.mxu0 0.0
        %3443 = vmatpush1.xpose.msra.mxu0 %v3127
        %3444 = vmatprep.subr.mxu0 0.0
        %3445 = vmatpush1.xpose.msra.mxu0 %v3130
        %3446 = vmatprep.subr.mxu0 0.0
        %3447 = vmatpush1.xpose.msra.mxu0 %v3133
        %3448 = vmatprep.subr.mxu0 0.0
        %3449 = vmatpush1.xpose.msra.mxu0 %v3136
        %3450 = vmatprep.subr.mxu0 0.0
        %3451 = vmatpush1.xpose.msra.mxu0 %v3139
        %3452 = vmatprep.subr.mxu0 0.0
        %3453 = vmatpush1.xpose.msra.mxu0 %v3142
        %3454 = vmatprep.subr.mxu0 0.0
        %3455 = vmatpush1.xpose.msra.mxu0 %v3145
        %3456 = vmatprep.subr.mxu0 0.0
        %3457 = vmatpush1.xpose.msra.mxu0 %v3148
        %3458 = vmatprep.subr.mxu0 0.0
        %3459 = vmatpush1.xpose.msra.mxu0 %v3151
        %3460 = vmatprep.subr.mxu0 0.0
        %3461 = vmatpush1.xpose.msra.mxu0 %v3154
        %3462 = vmatprep.subr.mxu0 0.0
        %3463 = vmatpush1.xpose.msra.mxu0 %v3157
        %3464 = vmatprep.subr.mxu0 0.0
        %3465 = vmatpush1.xpose.msra.mxu0 %v3160
        %3466 = vmatprep.subr.mxu0 0.0
        %3467 = vmatpush1.xpose.msra.mxu0 %v3163
        %3468 = vmatprep.subr.mxu0 0.0
        %3469 = vmatpush1.xpose.msra.mxu0 %v3166
        %3470 = vmatprep.mubr.f32.mxu0 0.0
        %3471 = vmatmul.mubr.f32.gmra.mrb[0].mxu0 %v2878
        %v3472 = vpop.f32.mrb[0].mxu0
        %v3473 = vadd.f32 %v2875, %v3472
        %v3474 = vpop.f32.mrb[0].mxu0
        %v3475 = vadd.f32 %v2875, %v3474
        %3476 = vdwg.mxu0
        %3477 = vmatprep.subr.mxu0 0.0
        %3478 = vmatpush1.xpose.msra.mxu0 %v3169
        %3479 = vmatprep.subr.mxu0 0.0
        %3480 = vmatpush1.xpose.msra.mxu0 %v3172
        %3481 = vmatprep.subr.mxu0 0.0
        %3482 = vmatpush1.xpose.msra.mxu0 %v3175
        %3483 = vmatprep.subr.mxu0 0.0
        %3484 = vmatpush1.xpose.msra.mxu0 %v3178
        %3485 = vmatprep.subr.mxu0 0.0
        %3486 = vmatpush1.xpose.msra.mxu0 %v3181
        %3487 = vmatprep.subr.mxu0 0.0
        %3488 = vmatpush1.xpose.msra.mxu0 %v3184
        %3489 = vmatprep.subr.mxu0 0.0
        %3490 = vmatpush1.xpose.msra.mxu0 %v3187
        %3491 = vmatprep.subr.mxu0 0.0
        %3492 = vmatpush1.xpose.msra.mxu0 %v3190
        %3493 = vmatprep.subr.mxu0 0.0
        %3494 = vmatpush1.xpose.msra.mxu0 %v3193
        %3495 = vmatprep.subr.mxu0 0.0
        %3496 = vmatpush1.xpose.msra.mxu0 %v3196
        %3497 = vmatprep.subr.mxu0 0.0
        %3498 = vmatpush1.xpose.msra.mxu0 %v3199
        %3499 = vmatprep.subr.mxu0 0.0
        %3500 = vmatpush1.xpose.msra.mxu0 %v3202
        %3501 = vmatprep.subr.mxu0 0.0
        %3502 = vmatpush1.xpose.msra.mxu0 %v3205
        %3503 = vmatprep.subr.mxu0 0.0
        %3504 = vmatpush1.xpose.msra.mxu0 %v3208
        %3505 = vmatprep.subr.mxu0 0.0
        %3506 = vmatpush1.xpose.msra.mxu0 %v3211
        %3507 = vmatprep.subr.mxu0 0.0
        %3508 = vmatpush1.xpose.msra.mxu0 %v3214
        %3509 = vmatprep.subr.mxu0 0.0
        %3510 = vmatpush1.xpose.msra.mxu0 %v3217
        %3511 = vmatprep.subr.mxu0 0.0
        %3512 = vmatpush1.xpose.msra.mxu0 %v3220
        %3513 = vmatprep.subr.mxu0 0.0
        %3514 = vmatpush1.xpose.msra.mxu0 %v3223
        %3515 = vmatprep.subr.mxu0 0.0
        %3516 = vmatpush1.xpose.msra.mxu0 %v3226
        %3517 = vmatprep.subr.mxu0 0.0
        %3518 = vmatpush1.xpose.msra.mxu0 %v3229
        %3519 = vmatprep.subr.mxu0 0.0
        %3520 = vmatpush1.xpose.msra.mxu0 %v3232
        %3521 = vmatprep.subr.mxu0 0.0
        %3522 = vmatpush1.xpose.msra.mxu0 %v3235
        %3523 = vmatprep.subr.mxu0 0.0
        %3524 = vmatpush1.xpose.msra.mxu0 %v3238
        %3525 = vmatprep.subr.mxu0 0.0
        %3526 = vmatpush1.xpose.msra.mxu0 %v3241
        %3527 = vmatprep.subr.mxu0 0.0
        %3528 = vmatpush1.xpose.msra.mxu0 %v3244
        %3529 = vmatprep.subr.mxu0 0.0
        %3530 = vmatpush1.xpose.msra.mxu0 %v3247
        %3531 = vmatprep.subr.mxu0 0.0
        %3532 = vmatpush1.xpose.msra.mxu0 %v3250
        %3533 = vmatprep.subr.mxu0 0.0
        %3534 = vmatpush1.xpose.msra.mxu0 %v3253
        %3535 = vmatprep.subr.mxu0 0.0
        %3536 = vmatpush1.xpose.msra.mxu0 %v3256
        %3537 = vmatprep.subr.mxu0 0.0
        %3538 = vmatpush1.xpose.msra.mxu0 %v3259
        %3539 = vmatprep.subr.mxu0 0.0
        %3540 = vmatpush1.xpose.msra.mxu0 %v3262
        %3541 = vmatprep.mubr.f32.mxu0 0.0
        %3542 = vmatmul.mubr.f32.gmra.mrb[0].mxu0 %v2878
        %v3543 = vpop.f32.mrb[0].mxu0
        %v3544 = vadd.f32 %v2875, %v3543
        %v3545 = vpop.f32.mrb[0].mxu0
        %v3546 = vadd.f32 %v2875, %v3545
        %3547 = vdwg.mxu0
        %v3548 = vmax.f32 %v3331, 0.0
        %v3549 = vmax.f32 %v3333, 0.0
        %v3550 = vmax.f32 %v3402, 0.0
        %v3551 = vmax.f32 %v3404, 0.0
        %v3552 = vmax.f32 %v3473, 0.0
        %v3553 = vmax.f32 %v3475, 0.0
        %v3554 = vmax.f32 %v3544, 0.0
        %v3555 = vmax.f32 %v3546, 0.0
        %vm3556 = vcmp.ne.f32.partialorder %v3331, %v3331
        %vm3557 = vcmp.ne.f32.partialorder %v3333, %v3333
        %vm3558 = vcmp.ne.f32.partialorder %v3402, %v3402
        %vm3559 = vcmp.ne.f32.partialorder %v3404, %v3404
        %vm3560 = vcmp.ne.f32.partialorder %v3473, %v3473
        %vm3561 = vcmp.ne.f32.partialorder %v3475, %v3475
        %vm3562 = vcmp.ne.f32.partialorder %v3544, %v3544
        %vm3563 = vcmp.ne.f32.partialorder %v3546, %v3546
        %v3564 = vadd.f32 %v3331, 0.0
        %v3565 = vadd.f32 %v3333, 0.0
        %v3566 = vadd.f32 %v3402, 0.0
        %v3567 = vadd.f32 %v3404, 0.0
        %v3568 = vadd.f32 %v3473, 0.0
        %v3569 = vadd.f32 %v3475, 0.0
        %v3570 = vadd.f32 %v3544, 0.0
        %v3571 = vadd.f32 %v3546, 0.0
        %v3572 = vand.u32 2147483647, %v3331
        %v3573 = vand.u32 2147483647, %v3333
        %v3574 = vand.u32 2147483647, %v3402
        %v3575 = vand.u32 2147483647, %v3404
        %v3576 = vand.u32 2147483647, %v3473
        %v3577 = vand.u32 2147483647, %v3475
        %v3578 = vand.u32 2147483647, %v3544
        %v3579 = vand.u32 2147483647, %v3546
        %v3580 = vsub.f32 0.0, %v3572
        %v3581 = vsub.f32 0.0, %v3573
        %v3582 = vsub.f32 0.0, %v3574
        %v3583 = vsub.f32 0.0, %v3575
        %v3584 = vsub.f32 0.0, %v3576
        %v3585 = vsub.f32 0.0, %v3577
        %v3586 = vsub.f32 0.0, %v3578
        %v3587 = vsub.f32 0.0, %v3579
        %v3588 = vmul.f32 %v3580, 1.442695
        %v3589 = vpow.pop %v3588
        %v3590 = vmul.f32 %v3581, 1.442695
        %v3591 = vpow.pop %v3590
        %v3592 = vmul.f32 %v3582, 1.442695
        %v3593 = vpow.pop %v3592
        %v3594 = vmul.f32 %v3583, 1.442695
        %v3595 = vpow.pop %v3594
        %v3596 = vmul.f32 %v3584, 1.442695
        %v3597 = vpow.pop %v3596
        %v3598 = vmul.f32 %v3585, 1.442695
        %v3599 = vpow.pop %v3598
        %v3600 = vmul.f32 %v3586, 1.442695
        %v3601 = vpow.pop %v3600
        %v3602 = vmul.f32 %v3587, 1.442695
        %v3603 = vpow.pop %v3602
        %v3604 = vadd.f32 %v3589, 1.0
        %v3605 = vlog2.pop %v3604
        %v3606 = vmul.f32 %v3605, 0.6931472
        %v3607 = vmul.f32 -0.5, %v3589
        %v3608 = vadd.f32 %v3607, 1.0
        %v3609 = vmul.f32 %v3608, %v3589
        %v3610 = vand.u32 2147483647, %v3589
        %vm3611 = vcmp.lt.f32.partialorder %v3610, 0.0004427343
        %v3612 = vsel %vm3611, %v3609, %v3606
        %v3613 = vadd.f32 %v3591, 1.0
        %v3614 = vlog2.pop %v3613
        %v3615 = vmul.f32 %v3614, 0.6931472
        %v3616 = vmul.f32 -0.5, %v3591
        %v3617 = vadd.f32 %v3616, 1.0
        %v3618 = vmul.f32 %v3617, %v3591
        %v3619 = vand.u32 2147483647, %v3591
        %vm3620 = vcmp.lt.f32.partialorder %v3619, 0.0004427343
        %v3621 = vsel %vm3620, %v3618, %v3615
        %v3622 = vadd.f32 %v3593, 1.0
        %v3623 = vlog2.pop %v3622
        %v3624 = vmul.f32 %v3623, 0.6931472
        %v3625 = vmul.f32 -0.5, %v3593
        %v3626 = vadd.f32 %v3625, 1.0
        %v3627 = vmul.f32 %v3626, %v3593
        %v3628 = vand.u32 2147483647, %v3593
        %vm3629 = vcmp.lt.f32.partialorder %v3628, 0.0004427343
        %v3630 = vsel %vm3629, %v3627, %v3624
        %v3631 = vadd.f32 %v3595, 1.0
        %v3632 = vlog2.pop %v3631
        %v3633 = vmul.f32 %v3632, 0.6931472
        %v3634 = vmul.f32 -0.5, %v3595
        %v3635 = vadd.f32 %v3634, 1.0
        %v3636 = vmul.f32 %v3635, %v3595
        %v3637 = vand.u32 2147483647, %v3595
        %vm3638 = vcmp.lt.f32.partialorder %v3637, 0.0004427343
        %v3639 = vsel %vm3638, %v3636, %v3633
        %v3640 = vadd.f32 %v3597, 1.0
        %v3641 = vlog2.pop %v3640
        %v3642 = vmul.f32 %v3641, 0.6931472
        %v3643 = vmul.f32 -0.5, %v3597
        %v3644 = vadd.f32 %v3643, 1.0
        %v3645 = vmul.f32 %v3644, %v3597
        %v3646 = vand.u32 2147483647, %v3597
        %vm3647 = vcmp.lt.f32.partialorder %v3646, 0.0004427343
        %v3648 = vsel %vm3647, %v3645, %v3642
        %v3649 = vadd.f32 %v3599, 1.0
        %v3650 = vlog2.pop %v3649
        %v3651 = vmul.f32 %v3650, 0.6931472
        %v3652 = vmul.f32 -0.5, %v3599
        %v3653 = vadd.f32 %v3652, 1.0
        %v3654 = vmul.f32 %v3653, %v3599
        %v3655 = vand.u32 2147483647, %v3599
        %vm3656 = vcmp.lt.f32.partialorder %v3655, 0.0004427343
        %v3657 = vsel %vm3656, %v3654, %v3651
        %v3658 = vadd.f32 %v3601, 1.0
        %v3659 = vlog2.pop %v3658
        %v3660 = vmul.f32 %v3659, 0.6931472
        %v3661 = vmul.f32 -0.5, %v3601
        %v3662 = vadd.f32 %v3661, 1.0
        %v3663 = vmul.f32 %v3662, %v3601
        %v3664 = vand.u32 2147483647, %v3601
        %vm3665 = vcmp.lt.f32.partialorder %v3664, 0.0004427343
        %v3666 = vsel %vm3665, %v3663, %v3660
        %v3667 = vadd.f32 %v3603, 1.0
        %v3668 = vlog2.pop %v3667
        %v3669 = vmul.f32 %v3668, 0.6931472
        %v3670 = vmul.f32 -0.5, %v3603
        %v3671 = vadd.f32 %v3670, 1.0
        %v3672 = vmul.f32 %v3671, %v3603
        %v3673 = vand.u32 2147483647, %v3603
        %vm3674 = vcmp.lt.f32.partialorder %v3673, 0.0004427343
        %v3675 = vsel %vm3674, %v3672, %v3669
        %v3676 = vadd.f32 %v3548, %v3612
        %v3677 = vadd.f32 %v3549, %v3621
        %v3678 = vadd.f32 %v3550, %v3630
        %v3679 = vadd.f32 %v3551, %v3639
        %v3680 = vadd.f32 %v3552, %v3648
        %v3681 = vadd.f32 %v3553, %v3657
        %v3682 = vadd.f32 %v3554, %v3666
        %v3683 = vadd.f32 %v3555, %v3675
        %v3684 = vsel %vm3556, %v3564, %v3676
        %v3685 = vsel %vm3557, %v3565, %v3677
        %v3686 = vsel %vm3558, %v3566, %v3678
        %v3687 = vsel %vm3559, %v3567, %v3679
        %v3688 = vsel %vm3560, %v3568, %v3680
        %v3689 = vsel %vm3561, %v3569, %v3681
        %v3690 = vsel %vm3562, %v3570, %v3682
        %v3691 = vsel %vm3563, %v3571, %v3683
        %v3692 = vadd.f32 %v3684, 0.0
        %v3693 = vadd.f32 %v3685, 0.0
        %v3694 = vadd.f32 %v3686, 0.0
        %v3695 = vadd.f32 %v3687, 0.0
        %v3696 = vadd.f32 %v3688, 0.0
        %v3697 = vadd.f32 %v3689, 0.0
        %v3698 = vadd.f32 %v3690, 0.0
        %v3699 = vadd.f32 %v3691, 0.0
        %v3700 = vmul.f32 %v3331, 2.0
        %v3701 = vmul.f32 %v3333, 2.0
        %v3702 = vmul.f32 %v3402, 2.0
        %v3703 = vmul.f32 %v3404, 2.0
        %v3704 = vmul.f32 %v3473, 2.0
        %v3705 = vmul.f32 %v3475, 2.0
        %v3706 = vmul.f32 %v3544, 2.0
        %v3707 = vmul.f32 %v3546, 2.0
        %v3708 = vlaneseq
        %v3709 = vshrl.u32 %v3708, 7
        %vm3710 = vcmp.eq.s32.totalorder %v3709, 0
        %v3711 = vsel %vm3710, %v3700, %v3692
        %v3712 = vsel %vm3710, %v3701, %v3693
        %v3713 = vsel %vm3710, %v3702, %v3694
        %v3714 = vsel %vm3710, %v3703, %v3695
        %v3715 = vsel %vm3710, %v3704, %v3696
        %v3716 = vsel %vm3710, %v3705, %v3697
        %v3717 = vsel %vm3710, %v3706, %v3698
        %v3718 = vsel %vm3710, %v3707, %v3699
        %vm3719 = vcmp.eq.s32.totalorder %v3709, 2
        %v3720 = vadd.f32 %v3711, 1.0
        %v3721 = vadd.f32 %v3712, 1.0
        %v3722 = vadd.f32 %v3713, 1.0
        %v3723 = vadd.f32 %v3714, 1.0
        %v3724 = vadd.f32 %v3715, 1.0
        %v3725 = vadd.f32 %v3716, 1.0
        %v3726 = vadd.f32 %v3717, 1.0
        %v3727 = vadd.f32 %v3718, 1.0
        %v3728 = vmax.f32 %v3720, 1.0
        %v3729 = vmax.f32 %v3721, 1.0
        %v3730 = vmax.f32 %v3722, 1.0
        %v3731 = vmax.f32 %v3723, 1.0
        %v3732 = vmax.f32 %v3724, 1.0
        %v3733 = vmax.f32 %v3725, 1.0
        %v3734 = vmax.f32 %v3726, 1.0
        %v3735 = vmax.f32 %v3727, 1.0
        %v3736 = vsel %vm3719, %v3728, %v3711
        %v3737 = vsel %vm3719, %v3729, %v3712
        %v3738 = vsel %vm3719, %v3730, %v3713
        %v3739 = vsel %vm3719, %v3731, %v3714
        %v3740 = vsel %vm3719, %v3732, %v3715
        %v3741 = vsel %vm3719, %v3733, %v3716
        %v3742 = vsel %vm3719, %v3734, %v3717
        %v3743 = vsel %vm3719, %v3735, %v3718
        %v3744 = vmax.f32 %v3736, 0.0
        %v3745 = vmax.f32 %v3737, 0.0
        %v3746 = vmax.f32 %v3738, 0.0
        %v3747 = vmax.f32 %v3739, 0.0
        %v3748 = vmax.f32 %v3740, 0.0
        %v3749 = vmax.f32 %v3741, 0.0
        %v3750 = vmax.f32 %v3742, 0.0
        %v3751 = vmax.f32 %v3743, 0.0
        %v3760 = vcombine.low %v3744, %v3745
        %v3761 = vcombine.low %v3746, %v3747
        %v3762 = vcombine.low %v3748, %v3749
        %v3763 = vcombine.low %v3750, %v3751
        %3768 = vst [vmem:[%s272] sm:$0xff] %v3760
        %3769 = vst [vmem:[%s272 + $0x8] sm:$0xff] %v3761
        %3770 = vst [vmem:[%s272 + $0x10] sm:$0xff] %v3762
        %3771 = vst [vmem:[%s272 + $0x18] sm:$0xff] %v3763
        %s3772 = sand.u32 %s181, 1
        %s3773 = scalar_lea.sflag [#allocation3], %s3772
        %s3774 = sand.u32 %s181, 1
        %s3775 = smul.addr %s3774, 32
        %s3776 = scalar_lea.vmem [#allocation2], %s3775
        // Predicated region
        $region49: #{tpu_custom_call.1} parent=47 // pred_check
          %p3777 = pneg %p191
        $region50: #{tpu_custom_call.1} parent=47 // pred_check_branch
          %3779 = sbr.rel (%p3777) target = $region52
        $region51: #{tpu_custom_call.1} parent=47 // pred_region
          %s3780 = smul.u32 8, %s21
          %s3782 = ssub.s32 512, 512
          %3783 = vsyncadd %s3773, %s3782
          %s3784 = smul.addr %s3780, 64
          %s3785 = scalar_lea.hbm %s7, %s3784
          %s3787 = sshll.u32 %s3776, 4
          %s3788 = int_to_ptr.vmem [resolvable:$true] %s3787
          %3790 = dma.vmem_to_hbm [thread:$0]  %s3788, 512, %s3785, %s3773
        $region52: #{tpu_custom_call.1} parent=47 // pred_fallthru
          _
      $region48: #{tpu_custom_call.1} parent=5 // pred_fallthru
        _
      %p3791 = scmp.le.s32.totalorder 2, %s16
      // Predicated region
      $region53: #{tpu_custom_call.1} parent=5 // pred_check
        %p3792 = pneg %p3791
      $region54: #{tpu_custom_call.1} parent=5 // pred_check_branch
        %3794 = sbr.rel (%p3792) target = $region56
      $region55: #{tpu_custom_call.1} parent=5 // pred_region
        %s3795 = ssub.s32 %s16, 2
        // Predicated region
        $region57: #{tpu_custom_call.1} parent=55 // pred_check
          %p3796 = pneg %p197
        $region58: #{tpu_custom_call.1} parent=55 // pred_check_branch
          %3798 = sbr.rel (%p3796) target = $region60
        $region59: #{tpu_custom_call.1} parent=55 // pred_region
          %s3799 = sand.u32 %s182, 1
          %s3800 = scalar_lea.sflag [#allocation3], %s3799
          %s3801 = sand.u32 %s182, 1
          %s3802 = smul.addr %s3801, 32
          %s3803 = scalar_lea.vmem [#allocation2], %s3802
          %3804 = dma.done %s3800, 512
        $region60: #{tpu_custom_call.1} parent=55 // pred_fallthru
          _
      $region56: #{tpu_custom_call.1} parent=5 // pred_fallthru
        _
    $region6: #{tpu_custom_call.1} parent=1 // loop_footer
      %s20 = sadd.s32 1, %s16
    $region7: #{tpu_custom_call.1} parent=1 // loop_footer_branch
      %15 = sbr.rel target = $region3
    $region8: #{tpu_custom_call.1} parent=1 // loop_exit
      _
    %3805 = vsyncpa [#allocation3], 1
    %s3806 = scalar_lea.sflag [#allocation3], 1
    %3807 = vsyncpa %s3806, 1

</llo_original>
